<compile_context>
chip_gen: v7x
topology: tpu7x:2x2x1
jax: 0.10.0
libtpu: 0.0.40
codegen_flags: <defaults>
</compile_context>

<pallas_src>
import jax
import jax.numpy as jnp
from jax.experimental import pallas as pl
from jax.experimental.pallas import tpu as pltpu

_LANES = 128


def _round_up(a: int, m: int) -> int:
    return ((a + m - 1) // m) * m


def _mlp_kernel(x_ref, w1_ref, b1_ref, w2_ref, b2_ref, o_ref):
    # x_ref:  (TR, 128) lane-dense batch tile (VMEM)
    # w1_ref: (H,)  first-layer weights  (SMEM)
    # b1_ref: (H,)  first-layer bias     (SMEM)
    # w2_ref: (H,)  second-layer weights (SMEM)
    # b2_ref: (1,)  second-layer bias    (SMEM)
    # o_ref:  (TR, 128) output tile (VMEM)
    x = x_ref[...]
    hidden = w1_ref.shape[0]
    acc = jnp.zeros_like(x, dtype=jnp.float32)
    # Fully unrolled static loop over hidden units: all VPU work (mul/add/max)
    # fed by scalar SMEM reads; MXU is never touched (K=1 / N=1 matmuls would
    # run it at <1% utilization).
    for j in range(hidden):
        h = jnp.maximum(x * w1_ref[j] + b1_ref[j], 0.0)  # ReLU(w1*x + b1)
        acc = acc + h * w2_ref[j]
    o_ref[...] = (acc + b2_ref[0]).astype(o_ref.dtype)


def math_regressor_forward(x, w1, b1, w2, b2, *, block_rows=64):
    """Forward pass of MathRegressor.

    x:  (N, 1) float32
    w1: (H, 1)  -- PyTorch Linear(1, H).weight
    b1: (H,)    -- PyTorch Linear(1, H).bias
    w2: (1, H)  -- PyTorch Linear(H, 1).weight
    b2: (1,)    -- PyTorch Linear(H, 1).bias
    Returns (N, 1) float32.
    """
    n = x.shape[0]
    hdim = b1.shape[0]

    # Parameters as flat scalar vectors (destined for SMEM).
    w1f = w1.reshape(hdim).astype(jnp.float32)
    b1f = b1.reshape(hdim).astype(jnp.float32)
    w2f = w2.reshape(hdim).astype(jnp.float32)
    b2f = b2.reshape(1).astype(jnp.float32)

    # Lane-dense layout: pad the batch and reshape to (rows, 128).
    rows = _round_up(n, _LANES) // _LANES
    tr = _round_up(min(block_rows, max(rows, 8)), 8)  # sublane-aligned tile
    rows_padded = _round_up(rows, tr)
    n_padded = rows_padded * _LANES

    x_flat = x.reshape(-1).astype(jnp.float32)
    x_pad = jnp.pad(x_flat, (0, n_padded - n))
    x2d = x_pad.reshape(rows_padded, _LANES)

    smem_spec = pl.BlockSpec(memory_space=pltpu.MemorySpace.SMEM)

    out2d = pl.pallas_call(
        _mlp_kernel,
        out_shape=jax.ShapeDtypeStruct((rows_padded, _LANES), jnp.float32),
        grid_spec=pltpu.PrefetchScalarGridSpec(
            num_scalar_prefetch=0,
            grid=(rows_padded // tr,),
            in_specs=[
                pl.BlockSpec((tr, _LANES), lambda i: (i, 0)),  # x tile (VMEM)
                smem_spec,                                      # w1 (resident)
                smem_spec,                                      # b1
                smem_spec,                                      # w2
                smem_spec,                                      # b2
            ],
            out_specs=pl.BlockSpec((tr, _LANES), lambda i: (i, 0)),
        ),
        compiler_params=pltpu.CompilerParams(
            dimension_semantics=("parallel",)),
    )(x2d, w1f, b1f, w2f, b2f)

    return out2d.reshape(n_padded)[:n].reshape(n, 1)


def init_params(key, num_hidden=128):
    """Deterministic synthetic parameters with PyTorch Linear shapes."""
    k1, k2, k3, k4 = jax.random.split(key, 4)
    bound1 = 1.0  # fan_in = 1
    w1 = jax.random.uniform(k1, (num_hidden, 1), jnp.float32, -bound1, bound1)
    b1 = jax.random.uniform(k2, (num_hidden,), jnp.float32, -bound1, bound1)
    bound2 = 1.0 / float(jnp.sqrt(num_hidden))
    w2 = jax.random.uniform(k3, (1, num_hidden), jnp.float32, -bound2, bound2)
    b2 = jax.random.uniform(k4, (1,), jnp.float32, -bound2, bound2)
    return w1, b1, w2, b2


def reference_forward(x, w1, b1, w2, b2):
    h = jnp.maximum(x @ w1.T + b1[None, :], 0.0)
    return h @ w2.T + b2[None, :]


if __name__ == "__main__":
    num_hidden = 128
    batch = 256

    key = jax.random.PRNGKey(0)
    kx, kp = jax.random.split(key)
    x = jax.random.uniform(kx, (batch, 1), jnp.float32, -jnp.pi, jnp.pi)
    w1, b1, w2, b2 = init_params(kp, num_hidden)

    y = math_regressor_forward(x, w1, b1, w2, b2)
    y = jax.block_until_ready(y)

    y_ref = reference_forward(x, w1, b1, w2, b2)
    assert y.shape == (batch, 1)
    assert jnp.allclose(y, y_ref, atol=1e-4, rtol=1e-4), "mismatch vs reference"

    print("KERNEL_OK")
</pallas_src>

<mosaic_0001>
module attributes {stable_mosaic.version = 11 : i64} {
  func.func @_mlp_kernel(%arg0: i32, %arg1: memref<8x128xf32, #tpu.memory_space<vmem>>, %arg2: memref<128xf32, #tpu.memory_space<smem>>, %arg3: memref<128xf32, #tpu.memory_space<smem>>, %arg4: memref<128xf32, #tpu.memory_space<smem>>, %arg5: memref<1xf32, #tpu.memory_space<smem>>, %arg6: memref<8x128xf32, #tpu.memory_space<vmem>>) attributes {dimension_semantics = [#tpu.dimension_semantics<parallel>], iteration_bounds = array<i64: 1>, scalar_prefetch = 0 : i64, scratch_operands = 0 : i64, tpu.core_type = #tpu.core_type<tc>, window_params = [{transform_indices = @transform_0, window_bounds = array<i64: 8, 128>}, {transform_indices = @transform_1, window_bounds = array<i64: 128>}, {transform_indices = @transform_2, window_bounds = array<i64: 128>}, {transform_indices = @transform_3, window_bounds = array<i64: 128>}, {transform_indices = @transform_4, window_bounds = array<i64: 1>}, {transform_indices = @transform_5, window_bounds = array<i64: 8, 128>}]} {
    %c0 = arith.constant 0 : index
    %c0_0 = arith.constant 0 : index
    %0 = vector.load %arg1[%c0, %c0_0] : memref<8x128xf32, #tpu.memory_space<vmem>>, vector<8x128xf32>
    %cst = arith.constant 0.000000e+00 : f32
    %1 = vector.broadcast %cst : f32 to vector<8x128xf32>
    %c0_1 = arith.constant 0 : index
    %2 = memref.load %arg2[%c0_1] : memref<128xf32, #tpu.memory_space<smem>>
    %3 = vector.broadcast %2 : f32 to vector<8x128xf32>
    %4 = arith.mulf %0, %3 : vector<8x128xf32>
    %c0_2 = arith.constant 0 : index
    %5 = memref.load %arg3[%c0_2] : memref<128xf32, #tpu.memory_space<smem>>
    %6 = vector.broadcast %5 : f32 to vector<8x128xf32>
    %7 = arith.addf %4, %6 : vector<8x128xf32>
    %cst_3 = arith.constant 0.000000e+00 : f32
    %8 = vector.broadcast %cst_3 : f32 to vector<8x128xf32>
    %9 = arith.maximumf %7, %8 : vector<8x128xf32>
    %c0_4 = arith.constant 0 : index
    %10 = memref.load %arg4[%c0_4] : memref<128xf32, #tpu.memory_space<smem>>
    %11 = vector.broadcast %10 : f32 to vector<8x128xf32>
    %12 = arith.mulf %9, %11 : vector<8x128xf32>
    %13 = arith.addf %1, %12 : vector<8x128xf32>
    %c1 = arith.constant 1 : index
    %14 = memref.load %arg2[%c1] : memref<128xf32, #tpu.memory_space<smem>>
    %15 = vector.broadcast %14 : f32 to vector<8x128xf32>
    %16 = arith.mulf %0, %15 : vector<8x128xf32>
    %c1_5 = arith.constant 1 : index
    %17 = memref.load %arg3[%c1_5] : memref<128xf32, #tpu.memory_space<smem>>
    %18 = vector.broadcast %17 : f32 to vector<8x128xf32>
    %19 = arith.addf %16, %18 : vector<8x128xf32>
    %cst_6 = arith.constant 0.000000e+00 : f32
    %20 = vector.broadcast %cst_6 : f32 to vector<8x128xf32>
    %21 = arith.maximumf %19, %20 : vector<8x128xf32>
    %c1_7 = arith.constant 1 : index
    %22 = memref.load %arg4[%c1_7] : memref<128xf32, #tpu.memory_space<smem>>
    %23 = vector.broadcast %22 : f32 to vector<8x128xf32>
    %24 = arith.mulf %21, %23 : vector<8x128xf32>
    %25 = arith.addf %13, %24 : vector<8x128xf32>
    %c2 = arith.constant 2 : index
    %26 = memref.load %arg2[%c2] : memref<128xf32, #tpu.memory_space<smem>>
    %27 = vector.broadcast %26 : f32 to vector<8x128xf32>
    %28 = arith.mulf %0, %27 : vector<8x128xf32>
    %c2_8 = arith.constant 2 : index
    %29 = memref.load %arg3[%c2_8] : memref<128xf32, #tpu.memory_space<smem>>
    %30 = vector.broadcast %29 : f32 to vector<8x128xf32>
    %31 = arith.addf %28, %30 : vector<8x128xf32>
    %cst_9 = arith.constant 0.000000e+00 : f32
    %32 = vector.broadcast %cst_9 : f32 to vector<8x128xf32>
    %33 = arith.maximumf %31, %32 : vector<8x128xf32>
    %c2_10 = arith.constant 2 : index
    %34 = memref.load %arg4[%c2_10] : memref<128xf32, #tpu.memory_space<smem>>
    %35 = vector.broadcast %34 : f32 to vector<8x128xf32>
    %36 = arith.mulf %33, %35 : vector<8x128xf32>
    %37 = arith.addf %25, %36 : vector<8x128xf32>
    %c3 = arith.constant 3 : index
    %38 = memref.load %arg2[%c3] : memref<128xf32, #tpu.memory_space<smem>>
    %39 = vector.broadcast %38 : f32 to vector<8x128xf32>
    %40 = arith.mulf %0, %39 : vector<8x128xf32>
    %c3_11 = arith.constant 3 : index
    %41 = memref.load %arg3[%c3_11] : memref<128xf32, #tpu.memory_space<smem>>
    %42 = vector.broadcast %41 : f32 to vector<8x128xf32>
    %43 = arith.addf %40, %42 : vector<8x128xf32>
    %cst_12 = arith.constant 0.000000e+00 : f32
    %44 = vector.broadcast %cst_12 : f32 to vector<8x128xf32>
    %45 = arith.maximumf %43, %44 : vector<8x128xf32>
    %c3_13 = arith.constant 3 : index
    %46 = memref.load %arg4[%c3_13] : memref<128xf32, #tpu.memory_space<smem>>
    %47 = vector.broadcast %46 : f32 to vector<8x128xf32>
    %48 = arith.mulf %45, %47 : vector<8x128xf32>
    %49 = arith.addf %37, %48 : vector<8x128xf32>
    %c4 = arith.constant 4 : index
    %50 = memref.load %arg2[%c4] : memref<128xf32, #tpu.memory_space<smem>>
    %51 = vector.broadcast %50 : f32 to vector<8x128xf32>
    %52 = arith.mulf %0, %51 : vector<8x128xf32>
    %c4_14 = arith.constant 4 : index
    %53 = memref.load %arg3[%c4_14] : memref<128xf32, #tpu.memory_space<smem>>
    %54 = vector.broadcast %53 : f32 to vector<8x128xf32>
    %55 = arith.addf %52, %54 : vector<8x128xf32>
    %cst_15 = arith.constant 0.000000e+00 : f32
    %56 = vector.broadcast %cst_15 : f32 to vector<8x128xf32>
    %57 = arith.maximumf %55, %56 : vector<8x128xf32>
    %c4_16 = arith.constant 4 : index
    %58 = memref.load %arg4[%c4_16] : memref<128xf32, #tpu.memory_space<smem>>
    %59 = vector.broadcast %58 : f32 to vector<8x128xf32>
    %60 = arith.mulf %57, %59 : vector<8x128xf32>
    %61 = arith.addf %49, %60 : vector<8x128xf32>
    %c5 = arith.constant 5 : index
    %62 = memref.load %arg2[%c5] : memref<128xf32, #tpu.memory_space<smem>>
    %63 = vector.broadcast %62 : f32 to vector<8x128xf32>
    %64 = arith.mulf %0, %63 : vector<8x128xf32>
    %c5_17 = arith.constant 5 : index
    %65 = memref.load %arg3[%c5_17] : memref<128xf32, #tpu.memory_space<smem>>
    %66 = vector.broadcast %65 : f32 to vector<8x128xf32>
    %67 = arith.addf %64, %66 : vector<8x128xf32>
    %cst_18 = arith.constant 0.000000e+00 : f32
    %68 = vector.broadcast %cst_18 : f32 to vector<8x128xf32>
    %69 = arith.maximumf %67, %68 : vector<8x128xf32>
    %c5_19 = arith.constant 5 : index
    %70 = memref.load %arg4[%c5_19] : memref<128xf32, #tpu.memory_space<smem>>
    %71 = vector.broadcast %70 : f32 to vector<8x128xf32>
    %72 = arith.mulf %69, %71 : vector<8x128xf32>
    %73 = arith.addf %61, %72 : vector<8x128xf32>
    %c6 = arith.constant 6 : index
    %74 = memref.load %arg2[%c6] : memref<128xf32, #tpu.memory_space<smem>>
    %75 = vector.broadcast %74 : f32 to vector<8x128xf32>
    %76 = arith.mulf %0, %75 : vector<8x128xf32>
    %c6_20 = arith.constant 6 : index
    %77 = memref.load %arg3[%c6_20] : memref<128xf32, #tpu.memory_space<smem>>
    %78 = vector.broadcast %77 : f32 to vector<8x128xf32>
    %79 = arith.addf %76, %78 : vector<8x128xf32>
    %cst_21 = arith.constant 0.000000e+00 : f32
    %80 = vector.broadcast %cst_21 : f32 to vector<8x128xf32>
    %81 = arith.maximumf %79, %80 : vector<8x128xf32>
    %c6_22 = arith.constant 6 : index
    %82 = memref.load %arg4[%c6_22] : memref<128xf32, #tpu.memory_space<smem>>
    %83 = vector.broadcast %82 : f32 to vector<8x128xf32>
    %84 = arith.mulf %81, %83 : vector<8x128xf32>
    %85 = arith.addf %73, %84 : vector<8x128xf32>
    %c7 = arith.constant 7 : index
    %86 = memref.load %arg2[%c7] : memref<128xf32, #tpu.memory_space<smem>>
    %87 = vector.broadcast %86 : f32 to vector<8x128xf32>
    %88 = arith.mulf %0, %87 : vector<8x128xf32>
    %c7_23 = arith.constant 7 : index
    %89 = memref.load %arg3[%c7_23] : memref<128xf32, #tpu.memory_space<smem>>
    %90 = vector.broadcast %89 : f32 to vector<8x128xf32>
    %91 = arith.addf %88, %90 : vector<8x128xf32>
    %cst_24 = arith.constant 0.000000e+00 : f32
    %92 = vector.broadcast %cst_24 : f32 to vector<8x128xf32>
    %93 = arith.maximumf %91, %92 : vector<8x128xf32>
    %c7_25 = arith.constant 7 : index
    %94 = memref.load %arg4[%c7_25] : memref<128xf32, #tpu.memory_space<smem>>
    %95 = vector.broadcast %94 : f32 to vector<8x128xf32>
    %96 = arith.mulf %93, %95 : vector<8x128xf32>
    %97 = arith.addf %85, %96 : vector<8x128xf32>
    %c8 = arith.constant 8 : index
    %98 = memref.load %arg2[%c8] : memref<128xf32, #tpu.memory_space<smem>>
    %99 = vector.broadcast %98 : f32 to vector<8x128xf32>
    %100 = arith.mulf %0, %99 : vector<8x128xf32>
    %c8_26 = arith.constant 8 : index
    %101 = memref.load %arg3[%c8_26] : memref<128xf32, #tpu.memory_space<smem>>
    %102 = vector.broadcast %101 : f32 to vector<8x128xf32>
    %103 = arith.addf %100, %102 : vector<8x128xf32>
    %cst_27 = arith.constant 0.000000e+00 : f32
    %104 = vector.broadcast %cst_27 : f32 to vector<8x128xf32>
    %105 = arith.maximumf %103, %104 : vector<8x128xf32>
    %c8_28 = arith.constant 8 : index
    %106 = memref.load %arg4[%c8_28] : memref<128xf32, #tpu.memory_space<smem>>
    %107 = vector.broadcast %106 : f32 to vector<8x128xf32>
    %108 = arith.mulf %105, %107 : vector<8x128xf32>
    %109 = arith.addf %97, %108 : vector<8x128xf32>
    %c9 = arith.constant 9 : index
    %110 = memref.load %arg2[%c9] : memref<128xf32, #tpu.memory_space<smem>>
    %111 = vector.broadcast %110 : f32 to vector<8x128xf32>
    %112 = arith.mulf %0, %111 : vector<8x128xf32>
    %c9_29 = arith.constant 9 : index
    %113 = memref.load %arg3[%c9_29] : memref<128xf32, #tpu.memory_space<smem>>
    %114 = vector.broadcast %113 : f32 to vector<8x128xf32>
    %115 = arith.addf %112, %114 : vector<8x128xf32>
    %cst_30 = arith.constant 0.000000e+00 : f32
    %116 = vector.broadcast %cst_30 : f32 to vector<8x128xf32>
    %117 = arith.maximumf %115, %116 : vector<8x128xf32>
    %c9_31 = arith.constant 9 : index
    %118 = memref.load %arg4[%c9_31] : memref<128xf32, #tpu.memory_space<smem>>
    %119 = vector.broadcast %118 : f32 to vector<8x128xf32>
    %120 = arith.mulf %117, %119 : vector<8x128xf32>
    %121 = arith.addf %109, %120 : vector<8x128xf32>
    %c10 = arith.constant 10 : index
    %122 = memref.load %arg2[%c10] : memref<128xf32, #tpu.memory_space<smem>>
    %123 = vector.broadcast %122 : f32 to vector<8x128xf32>
    %124 = arith.mulf %0, %123 : vector<8x128xf32>
    %c10_32 = arith.constant 10 : index
    %125 = memref.load %arg3[%c10_32] : memref<128xf32, #tpu.memory_space<smem>>
    %126 = vector.broadcast %125 : f32 to vector<8x128xf32>
    %127 = arith.addf %124, %126 : vector<8x128xf32>
    %cst_33 = arith.constant 0.000000e+00 : f32
    %128 = vector.broadcast %cst_33 : f32 to vector<8x128xf32>
    %129 = arith.maximumf %127, %128 : vector<8x128xf32>
    %c10_34 = arith.constant 10 : index
    %130 = memref.load %arg4[%c10_34] : memref<128xf32, #tpu.memory_space<smem>>
    %131 = vector.broadcast %130 : f32 to vector<8x128xf32>
    %132 = arith.mulf %129, %131 : vector<8x128xf32>
    %133 = arith.addf %121, %132 : vector<8x128xf32>
    %c11 = arith.constant 11 : index
    %134 = memref.load %arg2[%c11] : memref<128xf32, #tpu.memory_space<smem>>
    %135 = vector.broadcast %134 : f32 to vector<8x128xf32>
    %136 = arith.mulf %0, %135 : vector<8x128xf32>
    %c11_35 = arith.constant 11 : index
    %137 = memref.load %arg3[%c11_35] : memref<128xf32, #tpu.memory_space<smem>>
    %138 = vector.broadcast %137 : f32 to vector<8x128xf32>
    %139 = arith.addf %136, %138 : vector<8x128xf32>
    %cst_36 = arith.constant 0.000000e+00 : f32
    %140 = vector.broadcast %cst_36 : f32 to vector<8x128xf32>
    %141 = arith.maximumf %139, %140 : vector<8x128xf32>
    %c11_37 = arith.constant 11 : index
    %142 = memref.load %arg4[%c11_37] : memref<128xf32, #tpu.memory_space<smem>>
    %143 = vector.broadcast %142 : f32 to vector<8x128xf32>
    %144 = arith.mulf %141, %143 : vector<8x128xf32>
    %145 = arith.addf %133, %144 : vector<8x128xf32>
    %c12 = arith.constant 12 : index
    %146 = memref.load %arg2[%c12] : memref<128xf32, #tpu.memory_space<smem>>
    %147 = vector.broadcast %146 : f32 to vector<8x128xf32>
    %148 = arith.mulf %0, %147 : vector<8x128xf32>
    %c12_38 = arith.constant 12 : index
    %149 = memref.load %arg3[%c12_38] : memref<128xf32, #tpu.memory_space<smem>>
    %150 = vector.broadcast %149 : f32 to vector<8x128xf32>
    %151 = arith.addf %148, %150 : vector<8x128xf32>
    %cst_39 = arith.constant 0.000000e+00 : f32
    %152 = vector.broadcast %cst_39 : f32 to vector<8x128xf32>
    %153 = arith.maximumf %151, %152 : vector<8x128xf32>
    %c12_40 = arith.constant 12 : index
    %154 = memref.load %arg4[%c12_40] : memref<128xf32, #tpu.memory_space<smem>>
    %155 = vector.broadcast %154 : f32 to vector<8x128xf32>
    %156 = arith.mulf %153, %155 : vector<8x128xf32>
    %157 = arith.addf %145, %156 : vector<8x128xf32>
    %c13 = arith.constant 13 : index
    %158 = memref.load %arg2[%c13] : memref<128xf32, #tpu.memory_space<smem>>
    %159 = vector.broadcast %158 : f32 to vector<8x128xf32>
    %160 = arith.mulf %0, %159 : vector<8x128xf32>
    %c13_41 = arith.constant 13 : index
    %161 = memref.load %arg3[%c13_41] : memref<128xf32, #tpu.memory_space<smem>>
    %162 = vector.broadcast %161 : f32 to vector<8x128xf32>
    %163 = arith.addf %160, %162 : vector<8x128xf32>
    %cst_42 = arith.constant 0.000000e+00 : f32
    %164 = vector.broadcast %cst_42 : f32 to vector<8x128xf32>
    %165 = arith.maximumf %163, %164 : vector<8x128xf32>
    %c13_43 = arith.constant 13 : index
    %166 = memref.load %arg4[%c13_43] : memref<128xf32, #tpu.memory_space<smem>>
    %167 = vector.broadcast %166 : f32 to vector<8x128xf32>
    %168 = arith.mulf %165, %167 : vector<8x128xf32>
    %169 = arith.addf %157, %168 : vector<8x128xf32>
    %c14 = arith.constant 14 : index
    %170 = memref.load %arg2[%c14] : memref<128xf32, #tpu.memory_space<smem>>
    %171 = vector.broadcast %170 : f32 to vector<8x128xf32>
    %172 = arith.mulf %0, %171 : vector<8x128xf32>
    %c14_44 = arith.constant 14 : index
    %173 = memref.load %arg3[%c14_44] : memref<128xf32, #tpu.memory_space<smem>>
    %174 = vector.broadcast %173 : f32 to vector<8x128xf32>
    %175 = arith.addf %172, %174 : vector<8x128xf32>
    %cst_45 = arith.constant 0.000000e+00 : f32
    %176 = vector.broadcast %cst_45 : f32 to vector<8x128xf32>
    %177 = arith.maximumf %175, %176 : vector<8x128xf32>
    %c14_46 = arith.constant 14 : index
    %178 = memref.load %arg4[%c14_46] : memref<128xf32, #tpu.memory_space<smem>>
    %179 = vector.broadcast %178 : f32 to vector<8x128xf32>
    %180 = arith.mulf %177, %179 : vector<8x128xf32>
    %181 = arith.addf %169, %180 : vector<8x128xf32>
    %c15 = arith.constant 15 : index
    %182 = memref.load %arg2[%c15] : memref<128xf32, #tpu.memory_space<smem>>
    %183 = vector.broadcast %182 : f32 to vector<8x128xf32>
    %184 = arith.mulf %0, %183 : vector<8x128xf32>
    %c15_47 = arith.constant 15 : index
    %185 = memref.load %arg3[%c15_47] : memref<128xf32, #tpu.memory_space<smem>>
    %186 = vector.broadcast %185 : f32 to vector<8x128xf32>
    %187 = arith.addf %184, %186 : vector<8x128xf32>
    %cst_48 = arith.constant 0.000000e+00 : f32
    %188 = vector.broadcast %cst_48 : f32 to vector<8x128xf32>
    %189 = arith.maximumf %187, %188 : vector<8x128xf32>
    %c15_49 = arith.constant 15 : index
    %190 = memref.load %arg4[%c15_49] : memref<128xf32, #tpu.memory_space<smem>>
    %191 = vector.broadcast %190 : f32 to vector<8x128xf32>
    %192 = arith.mulf %189, %191 : vector<8x128xf32>
    %193 = arith.addf %181, %192 : vector<8x128xf32>
    %c16 = arith.constant 16 : index
    %194 = memref.load %arg2[%c16] : memref<128xf32, #tpu.memory_space<smem>>
    %195 = vector.broadcast %194 : f32 to vector<8x128xf32>
    %196 = arith.mulf %0, %195 : vector<8x128xf32>
    %c16_50 = arith.constant 16 : index
    %197 = memref.load %arg3[%c16_50] : memref<128xf32, #tpu.memory_space<smem>>
    %198 = vector.broadcast %197 : f32 to vector<8x128xf32>
    %199 = arith.addf %196, %198 : vector<8x128xf32>
    %cst_51 = arith.constant 0.000000e+00 : f32
    %200 = vector.broadcast %cst_51 : f32 to vector<8x128xf32>
    %201 = arith.maximumf %199, %200 : vector<8x128xf32>
    %c16_52 = arith.constant 16 : index
    %202 = memref.load %arg4[%c16_52] : memref<128xf32, #tpu.memory_space<smem>>
    %203 = vector.broadcast %202 : f32 to vector<8x128xf32>
    %204 = arith.mulf %201, %203 : vector<8x128xf32>
    %205 = arith.addf %193, %204 : vector<8x128xf32>
    %c17 = arith.constant 17 : index
    %206 = memref.load %arg2[%c17] : memref<128xf32, #tpu.memory_space<smem>>
    %207 = vector.broadcast %206 : f32 to vector<8x128xf32>
    %208 = arith.mulf %0, %207 : vector<8x128xf32>
    %c17_53 = arith.constant 17 : index
    %209 = memref.load %arg3[%c17_53] : memref<128xf32, #tpu.memory_space<smem>>
    %210 = vector.broadcast %209 : f32 to vector<8x128xf32>
    %211 = arith.addf %208, %210 : vector<8x128xf32>
    %cst_54 = arith.constant 0.000000e+00 : f32
    %212 = vector.broadcast %cst_54 : f32 to vector<8x128xf32>
    %213 = arith.maximumf %211, %212 : vector<8x128xf32>
    %c17_55 = arith.constant 17 : index
    %214 = memref.load %arg4[%c17_55] : memref<128xf32, #tpu.memory_space<smem>>
    %215 = vector.broadcast %214 : f32 to vector<8x128xf32>
    %216 = arith.mulf %213, %215 : vector<8x128xf32>
    %217 = arith.addf %205, %216 : vector<8x128xf32>
    %c18 = arith.constant 18 : index
    %218 = memref.load %arg2[%c18] : memref<128xf32, #tpu.memory_space<smem>>
    %219 = vector.broadcast %218 : f32 to vector<8x128xf32>
    %220 = arith.mulf %0, %219 : vector<8x128xf32>
    %c18_56 = arith.constant 18 : index
    %221 = memref.load %arg3[%c18_56] : memref<128xf32, #tpu.memory_space<smem>>
    %222 = vector.broadcast %221 : f32 to vector<8x128xf32>
    %223 = arith.addf %220, %222 : vector<8x128xf32>
    %cst_57 = arith.constant 0.000000e+00 : f32
    %224 = vector.broadcast %cst_57 : f32 to vector<8x128xf32>
    %225 = arith.maximumf %223, %224 : vector<8x128xf32>
    %c18_58 = arith.constant 18 : index
    %226 = memref.load %arg4[%c18_58] : memref<128xf32, #tpu.memory_space<smem>>
    %227 = vector.broadcast %226 : f32 to vector<8x128xf32>
    %228 = arith.mulf %225, %227 : vector<8x128xf32>
    %229 = arith.addf %217, %228 : vector<8x128xf32>
    %c19 = arith.constant 19 : index
    %230 = memref.load %arg2[%c19] : memref<128xf32, #tpu.memory_space<smem>>
    %231 = vector.broadcast %230 : f32 to vector<8x128xf32>
    %232 = arith.mulf %0, %231 : vector<8x128xf32>
    %c19_59 = arith.constant 19 : index
    %233 = memref.load %arg3[%c19_59] : memref<128xf32, #tpu.memory_space<smem>>
    %234 = vector.broadcast %233 : f32 to vector<8x128xf32>
    %235 = arith.addf %232, %234 : vector<8x128xf32>
    %cst_60 = arith.constant 0.000000e+00 : f32
    %236 = vector.broadcast %cst_60 : f32 to vector<8x128xf32>
    %237 = arith.maximumf %235, %236 : vector<8x128xf32>
    %c19_61 = arith.constant 19 : index
    %238 = memref.load %arg4[%c19_61] : memref<128xf32, #tpu.memory_space<smem>>
    %239 = vector.broadcast %238 : f32 to vector<8x128xf32>
    %240 = arith.mulf %237, %239 : vector<8x128xf32>
    %241 = arith.addf %229, %240 : vector<8x128xf32>
    %c20 = arith.constant 20 : index
    %242 = memref.load %arg2[%c20] : memref<128xf32, #tpu.memory_space<smem>>
    %243 = vector.broadcast %242 : f32 to vector<8x128xf32>
    %244 = arith.mulf %0, %243 : vector<8x128xf32>
    %c20_62 = arith.constant 20 : index
    %245 = memref.load %arg3[%c20_62] : memref<128xf32, #tpu.memory_space<smem>>
    %246 = vector.broadcast %245 : f32 to vector<8x128xf32>
    %247 = arith.addf %244, %246 : vector<8x128xf32>
    %cst_63 = arith.constant 0.000000e+00 : f32
    %248 = vector.broadcast %cst_63 : f32 to vector<8x128xf32>
    %249 = arith.maximumf %247, %248 : vector<8x128xf32>
    %c20_64 = arith.constant 20 : index
    %250 = memref.load %arg4[%c20_64] : memref<128xf32, #tpu.memory_space<smem>>
    %251 = vector.broadcast %250 : f32 to vector<8x128xf32>
    %252 = arith.mulf %249, %251 : vector<8x128xf32>
    %253 = arith.addf %241, %252 : vector<8x128xf32>
    %c21 = arith.constant 21 : index
    %254 = memref.load %arg2[%c21] : memref<128xf32, #tpu.memory_space<smem>>
    %255 = vector.broadcast %254 : f32 to vector<8x128xf32>
    %256 = arith.mulf %0, %255 : vector<8x128xf32>
    %c21_65 = arith.constant 21 : index
    %257 = memref.load %arg3[%c21_65] : memref<128xf32, #tpu.memory_space<smem>>
    %258 = vector.broadcast %257 : f32 to vector<8x128xf32>
    %259 = arith.addf %256, %258 : vector<8x128xf32>
    %cst_66 = arith.constant 0.000000e+00 : f32
    %260 = vector.broadcast %cst_66 : f32 to vector<8x128xf32>
    %261 = arith.maximumf %259, %260 : vector<8x128xf32>
    %c21_67 = arith.constant 21 : index
    %262 = memref.load %arg4[%c21_67] : memref<128xf32, #tpu.memory_space<smem>>
    %263 = vector.broadcast %262 : f32 to vector<8x128xf32>
    %264 = arith.mulf %261, %263 : vector<8x128xf32>
    %265 = arith.addf %253, %264 : vector<8x128xf32>
    %c22 = arith.constant 22 : index
    %266 = memref.load %arg2[%c22] : memref<128xf32, #tpu.memory_space<smem>>
    %267 = vector.broadcast %266 : f32 to vector<8x128xf32>
    %268 = arith.mulf %0, %267 : vector<8x128xf32>
    %c22_68 = arith.constant 22 : index
    %269 = memref.load %arg3[%c22_68] : memref<128xf32, #tpu.memory_space<smem>>
    %270 = vector.broadcast %269 : f32 to vector<8x128xf32>
    %271 = arith.addf %268, %270 : vector<8x128xf32>
    %cst_69 = arith.constant 0.000000e+00 : f32
    %272 = vector.broadcast %cst_69 : f32 to vector<8x128xf32>
    %273 = arith.maximumf %271, %272 : vector<8x128xf32>
    %c22_70 = arith.constant 22 : index
    %274 = memref.load %arg4[%c22_70] : memref<128xf32, #tpu.memory_space<smem>>
    %275 = vector.broadcast %274 : f32 to vector<8x128xf32>
    %276 = arith.mulf %273, %275 : vector<8x128xf32>
    %277 = arith.addf %265, %276 : vector<8x128xf32>
    %c23 = arith.constant 23 : index
    %278 = memref.load %arg2[%c23] : memref<128xf32, #tpu.memory_space<smem>>
    %279 = vector.broadcast %278 : f32 to vector<8x128xf32>
    %280 = arith.mulf %0, %279 : vector<8x128xf32>
    %c23_71 = arith.constant 23 : index
    %281 = memref.load %arg3[%c23_71] : memref<128xf32, #tpu.memory_space<smem>>
    %282 = vector.broadcast %281 : f32 to vector<8x128xf32>
    %283 = arith.addf %280, %282 : vector<8x128xf32>
    %cst_72 = arith.constant 0.000000e+00 : f32
    %284 = vector.broadcast %cst_72 : f32 to vector<8x128xf32>
    %285 = arith.maximumf %283, %284 : vector<8x128xf32>
    %c23_73 = arith.constant 23 : index
    %286 = memref.load %arg4[%c23_73] : memref<128xf32, #tpu.memory_space<smem>>
    %287 = vector.broadcast %286 : f32 to vector<8x128xf32>
    %288 = arith.mulf %285, %287 : vector<8x128xf32>
    %289 = arith.addf %277, %288 : vector<8x128xf32>
    %c24 = arith.constant 24 : index
    %290 = memref.load %arg2[%c24] : memref<128xf32, #tpu.memory_space<smem>>
    %291 = vector.broadcast %290 : f32 to vector<8x128xf32>
    %292 = arith.mulf %0, %291 : vector<8x128xf32>
    %c24_74 = arith.constant 24 : index
    %293 = memref.load %arg3[%c24_74] : memref<128xf32, #tpu.memory_space<smem>>
    %294 = vector.broadcast %293 : f32 to vector<8x128xf32>
    %295 = arith.addf %292, %294 : vector<8x128xf32>
    %cst_75 = arith.constant 0.000000e+00 : f32
    %296 = vector.broadcast %cst_75 : f32 to vector<8x128xf32>
    %297 = arith.maximumf %295, %296 : vector<8x128xf32>
    %c24_76 = arith.constant 24 : index
    %298 = memref.load %arg4[%c24_76] : memref<128xf32, #tpu.memory_space<smem>>
    %299 = vector.broadcast %298 : f32 to vector<8x128xf32>
    %300 = arith.mulf %297, %299 : vector<8x128xf32>
    %301 = arith.addf %289, %300 : vector<8x128xf32>
    %c25 = arith.constant 25 : index
    %302 = memref.load %arg2[%c25] : memref<128xf32, #tpu.memory_space<smem>>
    %303 = vector.broadcast %302 : f32 to vector<8x128xf32>
    %304 = arith.mulf %0, %303 : vector<8x128xf32>
    %c25_77 = arith.constant 25 : index
    %305 = memref.load %arg3[%c25_77] : memref<128xf32, #tpu.memory_space<smem>>
    %306 = vector.broadcast %305 : f32 to vector<8x128xf32>
    %307 = arith.addf %304, %306 : vector<8x128xf32>
    %cst_78 = arith.constant 0.000000e+00 : f32
    %308 = vector.broadcast %cst_78 : f32 to vector<8x128xf32>
    %309 = arith.maximumf %307, %308 : vector<8x128xf32>
    %c25_79 = arith.constant 25 : index
    %310 = memref.load %arg4[%c25_79] : memref<128xf32, #tpu.memory_space<smem>>
    %311 = vector.broadcast %310 : f32 to vector<8x128xf32>
    %312 = arith.mulf %309, %311 : vector<8x128xf32>
    %313 = arith.addf %301, %312 : vector<8x128xf32>
    %c26 = arith.constant 26 : index
    %314 = memref.load %arg2[%c26] : memref<128xf32, #tpu.memory_space<smem>>
    %315 = vector.broadcast %314 : f32 to vector<8x128xf32>
    %316 = arith.mulf %0, %315 : vector<8x128xf32>
    %c26_80 = arith.constant 26 : index
    %317 = memref.load %arg3[%c26_80] : memref<128xf32, #tpu.memory_space<smem>>
    %318 = vector.broadcast %317 : f32 to vector<8x128xf32>
    %319 = arith.addf %316, %318 : vector<8x128xf32>
    %cst_81 = arith.constant 0.000000e+00 : f32
    %320 = vector.broadcast %cst_81 : f32 to vector<8x128xf32>
    %321 = arith.maximumf %319, %320 : vector<8x128xf32>
    %c26_82 = arith.constant 26 : index
    %322 = memref.load %arg4[%c26_82] : memref<128xf32, #tpu.memory_space<smem>>
    %323 = vector.broadcast %322 : f32 to vector<8x128xf32>
    %324 = arith.mulf %321, %323 : vector<8x128xf32>
    %325 = arith.addf %313, %324 : vector<8x128xf32>
    %c27 = arith.constant 27 : index
    %326 = memref.load %arg2[%c27] : memref<128xf32, #tpu.memory_space<smem>>
    %327 = vector.broadcast %326 : f32 to vector<8x128xf32>
    %328 = arith.mulf %0, %327 : vector<8x128xf32>
    %c27_83 = arith.constant 27 : index
    %329 = memref.load %arg3[%c27_83] : memref<128xf32, #tpu.memory_space<smem>>
    %330 = vector.broadcast %329 : f32 to vector<8x128xf32>
    %331 = arith.addf %328, %330 : vector<8x128xf32>
    %cst_84 = arith.constant 0.000000e+00 : f32
    %332 = vector.broadcast %cst_84 : f32 to vector<8x128xf32>
    %333 = arith.maximumf %331, %332 : vector<8x128xf32>
    %c27_85 = arith.constant 27 : index
    %334 = memref.load %arg4[%c27_85] : memref<128xf32, #tpu.memory_space<smem>>
    %335 = vector.broadcast %334 : f32 to vector<8x128xf32>
    %336 = arith.mulf %333, %335 : vector<8x128xf32>
    %337 = arith.addf %325, %336 : vector<8x128xf32>
    %c28 = arith.constant 28 : index
    %338 = memref.load %arg2[%c28] : memref<128xf32, #tpu.memory_space<smem>>
    %339 = vector.broadcast %338 : f32 to vector<8x128xf32>
    %340 = arith.mulf %0, %339 : vector<8x128xf32>
    %c28_86 = arith.constant 28 : index
    %341 = memref.load %arg3[%c28_86] : memref<128xf32, #tpu.memory_space<smem>>
    %342 = vector.broadcast %341 : f32 to vector<8x128xf32>
    %343 = arith.addf %340, %342 : vector<8x128xf32>
    %cst_87 = arith.constant 0.000000e+00 : f32
    %344 = vector.broadcast %cst_87 : f32 to vector<8x128xf32>
    %345 = arith.maximumf %343, %344 : vector<8x128xf32>
    %c28_88 = arith.constant 28 : index
    %346 = memref.load %arg4[%c28_88] : memref<128xf32, #tpu.memory_space<smem>>
    %347 = vector.broadcast %346 : f32 to vector<8x128xf32>
    %348 = arith.mulf %345, %347 : vector<8x128xf32>
    %349 = arith.addf %337, %348 : vector<8x128xf32>
    %c29 = arith.constant 29 : index
    %350 = memref.load %arg2[%c29] : memref<128xf32, #tpu.memory_space<smem>>
    %351 = vector.broadcast %350 : f32 to vector<8x128xf32>
    %352 = arith.mulf %0, %351 : vector<8x128xf32>
    %c29_89 = arith.constant 29 : index
    %353 = memref.load %arg3[%c29_89] : memref<128xf32, #tpu.memory_space<smem>>
    %354 = vector.broadcast %353 : f32 to vector<8x128xf32>
    %355 = arith.addf %352, %354 : vector<8x128xf32>
    %cst_90 = arith.constant 0.000000e+00 : f32
    %356 = vector.broadcast %cst_90 : f32 to vector<8x128xf32>
    %357 = arith.maximumf %355, %356 : vector<8x128xf32>
    %c29_91 = arith.constant 29 : index
    %358 = memref.load %arg4[%c29_91] : memref<128xf32, #tpu.memory_space<smem>>
    %359 = vector.broadcast %358 : f32 to vector<8x128xf32>
    %360 = arith.mulf %357, %359 : vector<8x128xf32>
    %361 = arith.addf %349, %360 : vector<8x128xf32>
    %c30 = arith.constant 30 : index
    %362 = memref.load %arg2[%c30] : memref<128xf32, #tpu.memory_space<smem>>
    %363 = vector.broadcast %362 : f32 to vector<8x128xf32>
    %364 = arith.mulf %0, %363 : vector<8x128xf32>
    %c30_92 = arith.constant 30 : index
    %365 = memref.load %arg3[%c30_92] : memref<128xf32, #tpu.memory_space<smem>>
    %366 = vector.broadcast %365 : f32 to vector<8x128xf32>
    %367 = arith.addf %364, %366 : vector<8x128xf32>
    %cst_93 = arith.constant 0.000000e+00 : f32
    %368 = vector.broadcast %cst_93 : f32 to vector<8x128xf32>
    %369 = arith.maximumf %367, %368 : vector<8x128xf32>
    %c30_94 = arith.constant 30 : index
    %370 = memref.load %arg4[%c30_94] : memref<128xf32, #tpu.memory_space<smem>>
    %371 = vector.broadcast %370 : f32 to vector<8x128xf32>
    %372 = arith.mulf %369, %371 : vector<8x128xf32>
    %373 = arith.addf %361, %372 : vector<8x128xf32>
    %c31 = arith.constant 31 : index
    %374 = memref.load %arg2[%c31] : memref<128xf32, #tpu.memory_space<smem>>
    %375 = vector.broadcast %374 : f32 to vector<8x128xf32>
    %376 = arith.mulf %0, %375 : vector<8x128xf32>
    %c31_95 = arith.constant 31 : index
    %377 = memref.load %arg3[%c31_95] : memref<128xf32, #tpu.memory_space<smem>>
    %378 = vector.broadcast %377 : f32 to vector<8x128xf32>
    %379 = arith.addf %376, %378 : vector<8x128xf32>
    %cst_96 = arith.constant 0.000000e+00 : f32
    %380 = vector.broadcast %cst_96 : f32 to vector<8x128xf32>
    %381 = arith.maximumf %379, %380 : vector<8x128xf32>
    %c31_97 = arith.constant 31 : index
    %382 = memref.load %arg4[%c31_97] : memref<128xf32, #tpu.memory_space<smem>>
    %383 = vector.broadcast %382 : f32 to vector<8x128xf32>
    %384 = arith.mulf %381, %383 : vector<8x128xf32>
    %385 = arith.addf %373, %384 : vector<8x128xf32>
    %c32 = arith.constant 32 : index
    %386 = memref.load %arg2[%c32] : memref<128xf32, #tpu.memory_space<smem>>
    %387 = vector.broadcast %386 : f32 to vector<8x128xf32>
    %388 = arith.mulf %0, %387 : vector<8x128xf32>
    %c32_98 = arith.constant 32 : index
    %389 = memref.load %arg3[%c32_98] : memref<128xf32, #tpu.memory_space<smem>>
    %390 = vector.broadcast %389 : f32 to vector<8x128xf32>
    %391 = arith.addf %388, %390 : vector<8x128xf32>
    %cst_99 = arith.constant 0.000000e+00 : f32
    %392 = vector.broadcast %cst_99 : f32 to vector<8x128xf32>
    %393 = arith.maximumf %391, %392 : vector<8x128xf32>
    %c32_100 = arith.constant 32 : index
    %394 = memref.load %arg4[%c32_100] : memref<128xf32, #tpu.memory_space<smem>>
    %395 = vector.broadcast %394 : f32 to vector<8x128xf32>
    %396 = arith.mulf %393, %395 : vector<8x128xf32>
    %397 = arith.addf %385, %396 : vector<8x128xf32>
    %c33 = arith.constant 33 : index
    %398 = memref.load %arg2[%c33] : memref<128xf32, #tpu.memory_space<smem>>
    %399 = vector.broadcast %398 : f32 to vector<8x128xf32>
    %400 = arith.mulf %0, %399 : vector<8x128xf32>
    %c33_101 = arith.constant 33 : index
    %401 = memref.load %arg3[%c33_101] : memref<128xf32, #tpu.memory_space<smem>>
    %402 = vector.broadcast %401 : f32 to vector<8x128xf32>
    %403 = arith.addf %400, %402 : vector<8x128xf32>
    %cst_102 = arith.constant 0.000000e+00 : f32
    %404 = vector.broadcast %cst_102 : f32 to vector<8x128xf32>
    %405 = arith.maximumf %403, %404 : vector<8x128xf32>
    %c33_103 = arith.constant 33 : index
    %406 = memref.load %arg4[%c33_103] : memref<128xf32, #tpu.memory_space<smem>>
    %407 = vector.broadcast %406 : f32 to vector<8x128xf32>
    %408 = arith.mulf %405, %407 : vector<8x128xf32>
    %409 = arith.addf %397, %408 : vector<8x128xf32>
    %c34 = arith.constant 34 : index
    %410 = memref.load %arg2[%c34] : memref<128xf32, #tpu.memory_space<smem>>
    %411 = vector.broadcast %410 : f32 to vector<8x128xf32>
    %412 = arith.mulf %0, %411 : vector<8x128xf32>
    %c34_104 = arith.constant 34 : index
    %413 = memref.load %arg3[%c34_104] : memref<128xf32, #tpu.memory_space<smem>>
    %414 = vector.broadcast %413 : f32 to vector<8x128xf32>
    %415 = arith.addf %412, %414 : vector<8x128xf32>
    %cst_105 = arith.constant 0.000000e+00 : f32
    %416 = vector.broadcast %cst_105 : f32 to vector<8x128xf32>
    %417 = arith.maximumf %415, %416 : vector<8x128xf32>
    %c34_106 = arith.constant 34 : index
    %418 = memref.load %arg4[%c34_106] : memref<128xf32, #tpu.memory_space<smem>>
    %419 = vector.broadcast %418 : f32 to vector<8x128xf32>
    %420 = arith.mulf %417, %419 : vector<8x128xf32>
    %421 = arith.addf %409, %420 : vector<8x128xf32>
    %c35 = arith.constant 35 : index
    %422 = memref.load %arg2[%c35] : memref<128xf32, #tpu.memory_space<smem>>
    %423 = vector.broadcast %422 : f32 to vector<8x128xf32>
    %424 = arith.mulf %0, %423 : vector<8x128xf32>
    %c35_107 = arith.constant 35 : index
    %425 = memref.load %arg3[%c35_107] : memref<128xf32, #tpu.memory_space<smem>>
    %426 = vector.broadcast %425 : f32 to vector<8x128xf32>
    %427 = arith.addf %424, %426 : vector<8x128xf32>
    %cst_108 = arith.constant 0.000000e+00 : f32
    %428 = vector.broadcast %cst_108 : f32 to vector<8x128xf32>
    %429 = arith.maximumf %427, %428 : vector<8x128xf32>
    %c35_109 = arith.constant 35 : index
    %430 = memref.load %arg4[%c35_109] : memref<128xf32, #tpu.memory_space<smem>>
    %431 = vector.broadcast %430 : f32 to vector<8x128xf32>
    %432 = arith.mulf %429, %431 : vector<8x128xf32>
    %433 = arith.addf %421, %432 : vector<8x128xf32>
    %c36 = arith.constant 36 : index
    %434 = memref.load %arg2[%c36] : memref<128xf32, #tpu.memory_space<smem>>
    %435 = vector.broadcast %434 : f32 to vector<8x128xf32>
    %436 = arith.mulf %0, %435 : vector<8x128xf32>
    %c36_110 = arith.constant 36 : index
    %437 = memref.load %arg3[%c36_110] : memref<128xf32, #tpu.memory_space<smem>>
    %438 = vector.broadcast %437 : f32 to vector<8x128xf32>
    %439 = arith.addf %436, %438 : vector<8x128xf32>
    %cst_111 = arith.constant 0.000000e+00 : f32
    %440 = vector.broadcast %cst_111 : f32 to vector<8x128xf32>
    %441 = arith.maximumf %439, %440 : vector<8x128xf32>
    %c36_112 = arith.constant 36 : index
    %442 = memref.load %arg4[%c36_112] : memref<128xf32, #tpu.memory_space<smem>>
    %443 = vector.broadcast %442 : f32 to vector<8x128xf32>
    %444 = arith.mulf %441, %443 : vector<8x128xf32>
    %445 = arith.addf %433, %444 : vector<8x128xf32>
    %c37 = arith.constant 37 : index
    %446 = memref.load %arg2[%c37] : memref<128xf32, #tpu.memory_space<smem>>
    %447 = vector.broadcast %446 : f32 to vector<8x128xf32>
    %448 = arith.mulf %0, %447 : vector<8x128xf32>
    %c37_113 = arith.constant 37 : index
    %449 = memref.load %arg3[%c37_113] : memref<128xf32, #tpu.memory_space<smem>>
    %450 = vector.broadcast %449 : f32 to vector<8x128xf32>
    %451 = arith.addf %448, %450 : vector<8x128xf32>
    %cst_114 = arith.constant 0.000000e+00 : f32
    %452 = vector.broadcast %cst_114 : f32 to vector<8x128xf32>
    %453 = arith.maximumf %451, %452 : vector<8x128xf32>
    %c37_115 = arith.constant 37 : index
    %454 = memref.load %arg4[%c37_115] : memref<128xf32, #tpu.memory_space<smem>>
    %455 = vector.broadcast %454 : f32 to vector<8x128xf32>
    %456 = arith.mulf %453, %455 : vector<8x128xf32>
    %457 = arith.addf %445, %456 : vector<8x128xf32>
    %c38 = arith.constant 38 : index
    %458 = memref.load %arg2[%c38] : memref<128xf32, #tpu.memory_space<smem>>
    %459 = vector.broadcast %458 : f32 to vector<8x128xf32>
    %460 = arith.mulf %0, %459 : vector<8x128xf32>
    %c38_116 = arith.constant 38 : index
    %461 = memref.load %arg3[%c38_116] : memref<128xf32, #tpu.memory_space<smem>>
    %462 = vector.broadcast %461 : f32 to vector<8x128xf32>
    %463 = arith.addf %460, %462 : vector<8x128xf32>
    %cst_117 = arith.constant 0.000000e+00 : f32
    %464 = vector.broadcast %cst_117 : f32 to vector<8x128xf32>
    %465 = arith.maximumf %463, %464 : vector<8x128xf32>
    %c38_118 = arith.constant 38 : index
    %466 = memref.load %arg4[%c38_118] : memref<128xf32, #tpu.memory_space<smem>>
    %467 = vector.broadcast %466 : f32 to vector<8x128xf32>
    %468 = arith.mulf %465, %467 : vector<8x128xf32>
    %469 = arith.addf %457, %468 : vector<8x128xf32>
    %c39 = arith.constant 39 : index
    %470 = memref.load %arg2[%c39] : memref<128xf32, #tpu.memory_space<smem>>
    %471 = vector.broadcast %470 : f32 to vector<8x128xf32>
    %472 = arith.mulf %0, %471 : vector<8x128xf32>
    %c39_119 = arith.constant 39 : index
    %473 = memref.load %arg3[%c39_119] : memref<128xf32, #tpu.memory_space<smem>>
    %474 = vector.broadcast %473 : f32 to vector<8x128xf32>
    %475 = arith.addf %472, %474 : vector<8x128xf32>
    %cst_120 = arith.constant 0.000000e+00 : f32
    %476 = vector.broadcast %cst_120 : f32 to vector<8x128xf32>
    %477 = arith.maximumf %475, %476 : vector<8x128xf32>
    %c39_121 = arith.constant 39 : index
    %478 = memref.load %arg4[%c39_121] : memref<128xf32, #tpu.memory_space<smem>>
    %479 = vector.broadcast %478 : f32 to vector<8x128xf32>
    %480 = arith.mulf %477, %479 : vector<8x128xf32>
    %481 = arith.addf %469, %480 : vector<8x128xf32>
    %c40 = arith.constant 40 : index
    %482 = memref.load %arg2[%c40] : memref<128xf32, #tpu.memory_space<smem>>
    %483 = vector.broadcast %482 : f32 to vector<8x128xf32>
    %484 = arith.mulf %0, %483 : vector<8x128xf32>
    %c40_122 = arith.constant 40 : index
    %485 = memref.load %arg3[%c40_122] : memref<128xf32, #tpu.memory_space<smem>>
    %486 = vector.broadcast %485 : f32 to vector<8x128xf32>
    %487 = arith.addf %484, %486 : vector<8x128xf32>
    %cst_123 = arith.constant 0.000000e+00 : f32
    %488 = vector.broadcast %cst_123 : f32 to vector<8x128xf32>
    %489 = arith.maximumf %487, %488 : vector<8x128xf32>
    %c40_124 = arith.constant 40 : index
    %490 = memref.load %arg4[%c40_124] : memref<128xf32, #tpu.memory_space<smem>>
    %491 = vector.broadcast %490 : f32 to vector<8x128xf32>
    %492 = arith.mulf %489, %491 : vector<8x128xf32>
    %493 = arith.addf %481, %492 : vector<8x128xf32>
    %c41 = arith.constant 41 : index
    %494 = memref.load %arg2[%c41] : memref<128xf32, #tpu.memory_space<smem>>
    %495 = vector.broadcast %494 : f32 to vector<8x128xf32>
    %496 = arith.mulf %0, %495 : vector<8x128xf32>
    %c41_125 = arith.constant 41 : index
    %497 = memref.load %arg3[%c41_125] : memref<128xf32, #tpu.memory_space<smem>>
    %498 = vector.broadcast %497 : f32 to vector<8x128xf32>
    %499 = arith.addf %496, %498 : vector<8x128xf32>
    %cst_126 = arith.constant 0.000000e+00 : f32
    %500 = vector.broadcast %cst_126 : f32 to vector<8x128xf32>
    %501 = arith.maximumf %499, %500 : vector<8x128xf32>
    %c41_127 = arith.constant 41 : index
    %502 = memref.load %arg4[%c41_127] : memref<128xf32, #tpu.memory_space<smem>>
    %503 = vector.broadcast %502 : f32 to vector<8x128xf32>
    %504 = arith.mulf %501, %503 : vector<8x128xf32>
    %505 = arith.addf %493, %504 : vector<8x128xf32>
    %c42 = arith.constant 42 : index
    %506 = memref.load %arg2[%c42] : memref<128xf32, #tpu.memory_space<smem>>
    %507 = vector.broadcast %506 : f32 to vector<8x128xf32>
    %508 = arith.mulf %0, %507 : vector<8x128xf32>
    %c42_128 = arith.constant 42 : index
    %509 = memref.load %arg3[%c42_128] : memref<128xf32, #tpu.memory_space<smem>>
    %510 = vector.broadcast %509 : f32 to vector<8x128xf32>
    %511 = arith.addf %508, %510 : vector<8x128xf32>
    %cst_129 = arith.constant 0.000000e+00 : f32
    %512 = vector.broadcast %cst_129 : f32 to vector<8x128xf32>
    %513 = arith.maximumf %511, %512 : vector<8x128xf32>
    %c42_130 = arith.constant 42 : index
    %514 = memref.load %arg4[%c42_130] : memref<128xf32, #tpu.memory_space<smem>>
    %515 = vector.broadcast %514 : f32 to vector<8x128xf32>
    %516 = arith.mulf %513, %515 : vector<8x128xf32>
    %517 = arith.addf %505, %516 : vector<8x128xf32>
    %c43 = arith.constant 43 : index
    %518 = memref.load %arg2[%c43] : memref<128xf32, #tpu.memory_space<smem>>
    %519 = vector.broadcast %518 : f32 to vector<8x128xf32>
    %520 = arith.mulf %0, %519 : vector<8x128xf32>
    %c43_131 = arith.constant 43 : index
    %521 = memref.load %arg3[%c43_131] : memref<128xf32, #tpu.memory_space<smem>>
    %522 = vector.broadcast %521 : f32 to vector<8x128xf32>
    %523 = arith.addf %520, %522 : vector<8x128xf32>
    %cst_132 = arith.constant 0.000000e+00 : f32
    %524 = vector.broadcast %cst_132 : f32 to vector<8x128xf32>
    %525 = arith.maximumf %523, %524 : vector<8x128xf32>
    %c43_133 = arith.constant 43 : index
    %526 = memref.load %arg4[%c43_133] : memref<128xf32, #tpu.memory_space<smem>>
    %527 = vector.broadcast %526 : f32 to vector<8x128xf32>
    %528 = arith.mulf %525, %527 : vector<8x128xf32>
    %529 = arith.addf %517, %528 : vector<8x128xf32>
    %c44 = arith.constant 44 : index
    %530 = memref.load %arg2[%c44] : memref<128xf32, #tpu.memory_space<smem>>
    %531 = vector.broadcast %530 : f32 to vector<8x128xf32>
    %532 = arith.mulf %0, %531 : vector<8x128xf32>
    %c44_134 = arith.constant 44 : index
    %533 = memref.load %arg3[%c44_134] : memref<128xf32, #tpu.memory_space<smem>>
    %534 = vector.broadcast %533 : f32 to vector<8x128xf32>
    %535 = arith.addf %532, %534 : vector<8x128xf32>
    %cst_135 = arith.constant 0.000000e+00 : f32
    %536 = vector.broadcast %cst_135 : f32 to vector<8x128xf32>
    %537 = arith.maximumf %535, %536 : vector<8x128xf32>
    %c44_136 = arith.constant 44 : index
    %538 = memref.load %arg4[%c44_136] : memref<128xf32, #tpu.memory_space<smem>>
    %539 = vector.broadcast %538 : f32 to vector<8x128xf32>
    %540 = arith.mulf %537, %539 : vector<8x128xf32>
    %541 = arith.addf %529, %540 : vector<8x128xf32>
    %c45 = arith.constant 45 : index
    %542 = memref.load %arg2[%c45] : memref<128xf32, #tpu.memory_space<smem>>
    %543 = vector.broadcast %542 : f32 to vector<8x128xf32>
    %544 = arith.mulf %0, %543 : vector<8x128xf32>
    %c45_137 = arith.constant 45 : index
    %545 = memref.load %arg3[%c45_137] : memref<128xf32, #tpu.memory_space<smem>>
    %546 = vector.broadcast %545 : f32 to vector<8x128xf32>
    %547 = arith.addf %544, %546 : vector<8x128xf32>
    %cst_138 = arith.constant 0.000000e+00 : f32
    %548 = vector.broadcast %cst_138 : f32 to vector<8x128xf32>
    %549 = arith.maximumf %547, %548 : vector<8x128xf32>
    %c45_139 = arith.constant 45 : index
    %550 = memref.load %arg4[%c45_139] : memref<128xf32, #tpu.memory_space<smem>>
    %551 = vector.broadcast %550 : f32 to vector<8x128xf32>
    %552 = arith.mulf %549, %551 : vector<8x128xf32>
    %553 = arith.addf %541, %552 : vector<8x128xf32>
    %c46 = arith.constant 46 : index
    %554 = memref.load %arg2[%c46] : memref<128xf32, #tpu.memory_space<smem>>
    %555 = vector.broadcast %554 : f32 to vector<8x128xf32>
    %556 = arith.mulf %0, %555 : vector<8x128xf32>
    %c46_140 = arith.constant 46 : index
    %557 = memref.load %arg3[%c46_140] : memref<128xf32, #tpu.memory_space<smem>>
    %558 = vector.broadcast %557 : f32 to vector<8x128xf32>
    %559 = arith.addf %556, %558 : vector<8x128xf32>
    %cst_141 = arith.constant 0.000000e+00 : f32
    %560 = vector.broadcast %cst_141 : f32 to vector<8x128xf32>
    %561 = arith.maximumf %559, %560 : vector<8x128xf32>
    %c46_142 = arith.constant 46 : index
    %562 = memref.load %arg4[%c46_142] : memref<128xf32, #tpu.memory_space<smem>>
    %563 = vector.broadcast %562 : f32 to vector<8x128xf32>
    %564 = arith.mulf %561, %563 : vector<8x128xf32>
    %565 = arith.addf %553, %564 : vector<8x128xf32>
    %c47 = arith.constant 47 : index
    %566 = memref.load %arg2[%c47] : memref<128xf32, #tpu.memory_space<smem>>
    %567 = vector.broadcast %566 : f32 to vector<8x128xf32>
    %568 = arith.mulf %0, %567 : vector<8x128xf32>
    %c47_143 = arith.constant 47 : index
    %569 = memref.load %arg3[%c47_143] : memref<128xf32, #tpu.memory_space<smem>>
    %570 = vector.broadcast %569 : f32 to vector<8x128xf32>
    %571 = arith.addf %568, %570 : vector<8x128xf32>
    %cst_144 = arith.constant 0.000000e+00 : f32
    %572 = vector.broadcast %cst_144 : f32 to vector<8x128xf32>
    %573 = arith.maximumf %571, %572 : vector<8x128xf32>
    %c47_145 = arith.constant 47 : index
    %574 = memref.load %arg4[%c47_145] : memref<128xf32, #tpu.memory_space<smem>>
    %575 = vector.broadcast %574 : f32 to vector<8x128xf32>
    %576 = arith.mulf %573, %575 : vector<8x128xf32>
    %577 = arith.addf %565, %576 : vector<8x128xf32>
    %c48 = arith.constant 48 : index
    %578 = memref.load %arg2[%c48] : memref<128xf32, #tpu.memory_space<smem>>
    %579 = vector.broadcast %578 : f32 to vector<8x128xf32>
    %580 = arith.mulf %0, %579 : vector<8x128xf32>
    %c48_146 = arith.constant 48 : index
    %581 = memref.load %arg3[%c48_146] : memref<128xf32, #tpu.memory_space<smem>>
    %582 = vector.broadcast %581 : f32 to vector<8x128xf32>
    %583 = arith.addf %580, %582 : vector<8x128xf32>
    %cst_147 = arith.constant 0.000000e+00 : f32
    %584 = vector.broadcast %cst_147 : f32 to vector<8x128xf32>
    %585 = arith.maximumf %583, %584 : vector<8x128xf32>
    %c48_148 = arith.constant 48 : index
    %586 = memref.load %arg4[%c48_148] : memref<128xf32, #tpu.memory_space<smem>>
    %587 = vector.broadcast %586 : f32 to vector<8x128xf32>
    %588 = arith.mulf %585, %587 : vector<8x128xf32>
    %589 = arith.addf %577, %588 : vector<8x128xf32>
    %c49 = arith.constant 49 : index
    %590 = memref.load %arg2[%c49] : memref<128xf32, #tpu.memory_space<smem>>
    %591 = vector.broadcast %590 : f32 to vector<8x128xf32>
    %592 = arith.mulf %0, %591 : vector<8x128xf32>
    %c49_149 = arith.constant 49 : index
    %593 = memref.load %arg3[%c49_149] : memref<128xf32, #tpu.memory_space<smem>>
    %594 = vector.broadcast %593 : f32 to vector<8x128xf32>
    %595 = arith.addf %592, %594 : vector<8x128xf32>
    %cst_150 = arith.constant 0.000000e+00 : f32
    %596 = vector.broadcast %cst_150 : f32 to vector<8x128xf32>
    %597 = arith.maximumf %595, %596 : vector<8x128xf32>
    %c49_151 = arith.constant 49 : index
    %598 = memref.load %arg4[%c49_151] : memref<128xf32, #tpu.memory_space<smem>>
    %599 = vector.broadcast %598 : f32 to vector<8x128xf32>
    %600 = arith.mulf %597, %599 : vector<8x128xf32>
    %601 = arith.addf %589, %600 : vector<8x128xf32>
    %c50 = arith.constant 50 : index
    %602 = memref.load %arg2[%c50] : memref<128xf32, #tpu.memory_space<smem>>
    %603 = vector.broadcast %602 : f32 to vector<8x128xf32>
    %604 = arith.mulf %0, %603 : vector<8x128xf32>
    %c50_152 = arith.constant 50 : index
    %605 = memref.load %arg3[%c50_152] : memref<128xf32, #tpu.memory_space<smem>>
    %606 = vector.broadcast %605 : f32 to vector<8x128xf32>
    %607 = arith.addf %604, %606 : vector<8x128xf32>
    %cst_153 = arith.constant 0.000000e+00 : f32
    %608 = vector.broadcast %cst_153 : f32 to vector<8x128xf32>
    %609 = arith.maximumf %607, %608 : vector<8x128xf32>
    %c50_154 = arith.constant 50 : index
    %610 = memref.load %arg4[%c50_154] : memref<128xf32, #tpu.memory_space<smem>>
    %611 = vector.broadcast %610 : f32 to vector<8x128xf32>
    %612 = arith.mulf %609, %611 : vector<8x128xf32>
    %613 = arith.addf %601, %612 : vector<8x128xf32>
    %c51 = arith.constant 51 : index
    %614 = memref.load %arg2[%c51] : memref<128xf32, #tpu.memory_space<smem>>
    %615 = vector.broadcast %614 : f32 to vector<8x128xf32>
    %616 = arith.mulf %0, %615 : vector<8x128xf32>
    %c51_155 = arith.constant 51 : index
    %617 = memref.load %arg3[%c51_155] : memref<128xf32, #tpu.memory_space<smem>>
    %618 = vector.broadcast %617 : f32 to vector<8x128xf32>
    %619 = arith.addf %616, %618 : vector<8x128xf32>
    %cst_156 = arith.constant 0.000000e+00 : f32
    %620 = vector.broadcast %cst_156 : f32 to vector<8x128xf32>
    %621 = arith.maximumf %619, %620 : vector<8x128xf32>
    %c51_157 = arith.constant 51 : index
    %622 = memref.load %arg4[%c51_157] : memref<128xf32, #tpu.memory_space<smem>>
    %623 = vector.broadcast %622 : f32 to vector<8x128xf32>
    %624 = arith.mulf %621, %623 : vector<8x128xf32>
    %625 = arith.addf %613, %624 : vector<8x128xf32>
    %c52 = arith.constant 52 : index
    %626 = memref.load %arg2[%c52] : memref<128xf32, #tpu.memory_space<smem>>
    %627 = vector.broadcast %626 : f32 to vector<8x128xf32>
    %628 = arith.mulf %0, %627 : vector<8x128xf32>
    %c52_158 = arith.constant 52 : index
    %629 = memref.load %arg3[%c52_158] : memref<128xf32, #tpu.memory_space<smem>>
    %630 = vector.broadcast %629 : f32 to vector<8x128xf32>
    %631 = arith.addf %628, %630 : vector<8x128xf32>
    %cst_159 = arith.constant 0.000000e+00 : f32
    %632 = vector.broadcast %cst_159 : f32 to vector<8x128xf32>
    %633 = arith.maximumf %631, %632 : vector<8x128xf32>
    %c52_160 = arith.constant 52 : index
    %634 = memref.load %arg4[%c52_160] : memref<128xf32, #tpu.memory_space<smem>>
    %635 = vector.broadcast %634 : f32 to vector<8x128xf32>
    %636 = arith.mulf %633, %635 : vector<8x128xf32>
    %637 = arith.addf %625, %636 : vector<8x128xf32>
    %c53 = arith.constant 53 : index
    %638 = memref.load %arg2[%c53] : memref<128xf32, #tpu.memory_space<smem>>
    %639 = vector.broadcast %638 : f32 to vector<8x128xf32>
    %640 = arith.mulf %0, %639 : vector<8x128xf32>
    %c53_161 = arith.constant 53 : index
    %641 = memref.load %arg3[%c53_161] : memref<128xf32, #tpu.memory_space<smem>>
    %642 = vector.broadcast %641 : f32 to vector<8x128xf32>
    %643 = arith.addf %640, %642 : vector<8x128xf32>
    %cst_162 = arith.constant 0.000000e+00 : f32
    %644 = vector.broadcast %cst_162 : f32 to vector<8x128xf32>
    %645 = arith.maximumf %643, %644 : vector<8x128xf32>
    %c53_163 = arith.constant 53 : index
    %646 = memref.load %arg4[%c53_163] : memref<128xf32, #tpu.memory_space<smem>>
    %647 = vector.broadcast %646 : f32 to vector<8x128xf32>
    %648 = arith.mulf %645, %647 : vector<8x128xf32>
    %649 = arith.addf %637, %648 : vector<8x128xf32>
    %c54 = arith.constant 54 : index
    %650 = memref.load %arg2[%c54] : memref<128xf32, #tpu.memory_space<smem>>
    %651 = vector.broadcast %650 : f32 to vector<8x128xf32>
    %652 = arith.mulf %0, %651 : vector<8x128xf32>
    %c54_164 = arith.constant 54 : index
    %653 = memref.load %arg3[%c54_164] : memref<128xf32, #tpu.memory_space<smem>>
    %654 = vector.broadcast %653 : f32 to vector<8x128xf32>
    %655 = arith.addf %652, %654 : vector<8x128xf32>
    %cst_165 = arith.constant 0.000000e+00 : f32
    %656 = vector.broadcast %cst_165 : f32 to vector<8x128xf32>
    %657 = arith.maximumf %655, %656 : vector<8x128xf32>
    %c54_166 = arith.constant 54 : index
    %658 = memref.load %arg4[%c54_166] : memref<128xf32, #tpu.memory_space<smem>>
    %659 = vector.broadcast %658 : f32 to vector<8x128xf32>
    %660 = arith.mulf %657, %659 : vector<8x128xf32>
    %661 = arith.addf %649, %660 : vector<8x128xf32>
    %c55 = arith.constant 55 : index
    %662 = memref.load %arg2[%c55] : memref<128xf32, #tpu.memory_space<smem>>
    %663 = vector.broadcast %662 : f32 to vector<8x128xf32>
    %664 = arith.mulf %0, %663 : vector<8x128xf32>
    %c55_167 = arith.constant 55 : index
    %665 = memref.load %arg3[%c55_167] : memref<128xf32, #tpu.memory_space<smem>>
    %666 = vector.broadcast %665 : f32 to vector<8x128xf32>
    %667 = arith.addf %664, %666 : vector<8x128xf32>
    %cst_168 = arith.constant 0.000000e+00 : f32
    %668 = vector.broadcast %cst_168 : f32 to vector<8x128xf32>
    %669 = arith.maximumf %667, %668 : vector<8x128xf32>
    %c55_169 = arith.constant 55 : index
    %670 = memref.load %arg4[%c55_169] : memref<128xf32, #tpu.memory_space<smem>>
    %671 = vector.broadcast %670 : f32 to vector<8x128xf32>
    %672 = arith.mulf %669, %671 : vector<8x128xf32>
    %673 = arith.addf %661, %672 : vector<8x128xf32>
    %c56 = arith.constant 56 : index
    %674 = memref.load %arg2[%c56] : memref<128xf32, #tpu.memory_space<smem>>
    %675 = vector.broadcast %674 : f32 to vector<8x128xf32>
    %676 = arith.mulf %0, %675 : vector<8x128xf32>
    %c56_170 = arith.constant 56 : index
    %677 = memref.load %arg3[%c56_170] : memref<128xf32, #tpu.memory_space<smem>>
    %678 = vector.broadcast %677 : f32 to vector<8x128xf32>
    %679 = arith.addf %676, %678 : vector<8x128xf32>
    %cst_171 = arith.constant 0.000000e+00 : f32
    %680 = vector.broadcast %cst_171 : f32 to vector<8x128xf32>
    %681 = arith.maximumf %679, %680 : vector<8x128xf32>
    %c56_172 = arith.constant 56 : index
    %682 = memref.load %arg4[%c56_172] : memref<128xf32, #tpu.memory_space<smem>>
    %683 = vector.broadcast %682 : f32 to vector<8x128xf32>
    %684 = arith.mulf %681, %683 : vector<8x128xf32>
    %685 = arith.addf %673, %684 : vector<8x128xf32>
    %c57 = arith.constant 57 : index
    %686 = memref.load %arg2[%c57] : memref<128xf32, #tpu.memory_space<smem>>
    %687 = vector.broadcast %686 : f32 to vector<8x128xf32>
    %688 = arith.mulf %0, %687 : vector<8x128xf32>
    %c57_173 = arith.constant 57 : index
    %689 = memref.load %arg3[%c57_173] : memref<128xf32, #tpu.memory_space<smem>>
    %690 = vector.broadcast %689 : f32 to vector<8x128xf32>
    %691 = arith.addf %688, %690 : vector<8x128xf32>
    %cst_174 = arith.constant 0.000000e+00 : f32
    %692 = vector.broadcast %cst_174 : f32 to vector<8x128xf32>
    %693 = arith.maximumf %691, %692 : vector<8x128xf32>
    %c57_175 = arith.constant 57 : index
    %694 = memref.load %arg4[%c57_175] : memref<128xf32, #tpu.memory_space<smem>>
    %695 = vector.broadcast %694 : f32 to vector<8x128xf32>
    %696 = arith.mulf %693, %695 : vector<8x128xf32>
    %697 = arith.addf %685, %696 : vector<8x128xf32>
    %c58 = arith.constant 58 : index
    %698 = memref.load %arg2[%c58] : memref<128xf32, #tpu.memory_space<smem>>
    %699 = vector.broadcast %698 : f32 to vector<8x128xf32>
    %700 = arith.mulf %0, %699 : vector<8x128xf32>
    %c58_176 = arith.constant 58 : index
    %701 = memref.load %arg3[%c58_176] : memref<128xf32, #tpu.memory_space<smem>>
    %702 = vector.broadcast %701 : f32 to vector<8x128xf32>
    %703 = arith.addf %700, %702 : vector<8x128xf32>
    %cst_177 = arith.constant 0.000000e+00 : f32
    %704 = vector.broadcast %cst_177 : f32 to vector<8x128xf32>
    %705 = arith.maximumf %703, %704 : vector<8x128xf32>
    %c58_178 = arith.constant 58 : index
    %706 = memref.load %arg4[%c58_178] : memref<128xf32, #tpu.memory_space<smem>>
    %707 = vector.broadcast %706 : f32 to vector<8x128xf32>
    %708 = arith.mulf %705, %707 : vector<8x128xf32>
    %709 = arith.addf %697, %708 : vector<8x128xf32>
    %c59 = arith.constant 59 : index
    %710 = memref.load %arg2[%c59] : memref<128xf32, #tpu.memory_space<smem>>
    %711 = vector.broadcast %710 : f32 to vector<8x128xf32>
    %712 = arith.mulf %0, %711 : vector<8x128xf32>
    %c59_179 = arith.constant 59 : index
    %713 = memref.load %arg3[%c59_179] : memref<128xf32, #tpu.memory_space<smem>>
    %714 = vector.broadcast %713 : f32 to vector<8x128xf32>
    %715 = arith.addf %712, %714 : vector<8x128xf32>
    %cst_180 = arith.constant 0.000000e+00 : f32
    %716 = vector.broadcast %cst_180 : f32 to vector<8x128xf32>
    %717 = arith.maximumf %715, %716 : vector<8x128xf32>
    %c59_181 = arith.constant 59 : index
    %718 = memref.load %arg4[%c59_181] : memref<128xf32, #tpu.memory_space<smem>>
    %719 = vector.broadcast %718 : f32 to vector<8x128xf32>
    %720 = arith.mulf %717, %719 : vector<8x128xf32>
    %721 = arith.addf %709, %720 : vector<8x128xf32>
    %c60 = arith.constant 60 : index
    %722 = memref.load %arg2[%c60] : memref<128xf32, #tpu.memory_space<smem>>
    %723 = vector.broadcast %722 : f32 to vector<8x128xf32>
    %724 = arith.mulf %0, %723 : vector<8x128xf32>
    %c60_182 = arith.constant 60 : index
    %725 = memref.load %arg3[%c60_182] : memref<128xf32, #tpu.memory_space<smem>>
    %726 = vector.broadcast %725 : f32 to vector<8x128xf32>
    %727 = arith.addf %724, %726 : vector<8x128xf32>
    %cst_183 = arith.constant 0.000000e+00 : f32
    %728 = vector.broadcast %cst_183 : f32 to vector<8x128xf32>
    %729 = arith.maximumf %727, %728 : vector<8x128xf32>
    %c60_184 = arith.constant 60 : index
    %730 = memref.load %arg4[%c60_184] : memref<128xf32, #tpu.memory_space<smem>>
    %731 = vector.broadcast %730 : f32 to vector<8x128xf32>
    %732 = arith.mulf %729, %731 : vector<8x128xf32>
    %733 = arith.addf %721, %732 : vector<8x128xf32>
    %c61 = arith.constant 61 : index
    %734 = memref.load %arg2[%c61] : memref<128xf32, #tpu.memory_space<smem>>
    %735 = vector.broadcast %734 : f32 to vector<8x128xf32>
    %736 = arith.mulf %0, %735 : vector<8x128xf32>
    %c61_185 = arith.constant 61 : index
    %737 = memref.load %arg3[%c61_185] : memref<128xf32, #tpu.memory_space<smem>>
    %738 = vector.broadcast %737 : f32 to vector<8x128xf32>
    %739 = arith.addf %736, %738 : vector<8x128xf32>
    %cst_186 = arith.constant 0.000000e+00 : f32
    %740 = vector.broadcast %cst_186 : f32 to vector<8x128xf32>
    %741 = arith.maximumf %739, %740 : vector<8x128xf32>
    %c61_187 = arith.constant 61 : index
    %742 = memref.load %arg4[%c61_187] : memref<128xf32, #tpu.memory_space<smem>>
    %743 = vector.broadcast %742 : f32 to vector<8x128xf32>
    %744 = arith.mulf %741, %743 : vector<8x128xf32>
    %745 = arith.addf %733, %744 : vector<8x128xf32>
    %c62 = arith.constant 62 : index
    %746 = memref.load %arg2[%c62] : memref<128xf32, #tpu.memory_space<smem>>
    %747 = vector.broadcast %746 : f32 to vector<8x128xf32>
    %748 = arith.mulf %0, %747 : vector<8x128xf32>
    %c62_188 = arith.constant 62 : index
    %749 = memref.load %arg3[%c62_188] : memref<128xf32, #tpu.memory_space<smem>>
    %750 = vector.broadcast %749 : f32 to vector<8x128xf32>
    %751 = arith.addf %748, %750 : vector<8x128xf32>
    %cst_189 = arith.constant 0.000000e+00 : f32
    %752 = vector.broadcast %cst_189 : f32 to vector<8x128xf32>
    %753 = arith.maximumf %751, %752 : vector<8x128xf32>
    %c62_190 = arith.constant 62 : index
    %754 = memref.load %arg4[%c62_190] : memref<128xf32, #tpu.memory_space<smem>>
    %755 = vector.broadcast %754 : f32 to vector<8x128xf32>
    %756 = arith.mulf %753, %755 : vector<8x128xf32>
    %757 = arith.addf %745, %756 : vector<8x128xf32>
    %c63 = arith.constant 63 : index
    %758 = memref.load %arg2[%c63] : memref<128xf32, #tpu.memory_space<smem>>
    %759 = vector.broadcast %758 : f32 to vector<8x128xf32>
    %760 = arith.mulf %0, %759 : vector<8x128xf32>
    %c63_191 = arith.constant 63 : index
    %761 = memref.load %arg3[%c63_191] : memref<128xf32, #tpu.memory_space<smem>>
    %762 = vector.broadcast %761 : f32 to vector<8x128xf32>
    %763 = arith.addf %760, %762 : vector<8x128xf32>
    %cst_192 = arith.constant 0.000000e+00 : f32
    %764 = vector.broadcast %cst_192 : f32 to vector<8x128xf32>
    %765 = arith.maximumf %763, %764 : vector<8x128xf32>
    %c63_193 = arith.constant 63 : index
    %766 = memref.load %arg4[%c63_193] : memref<128xf32, #tpu.memory_space<smem>>
    %767 = vector.broadcast %766 : f32 to vector<8x128xf32>
    %768 = arith.mulf %765, %767 : vector<8x128xf32>
    %769 = arith.addf %757, %768 : vector<8x128xf32>
    %c64 = arith.constant 64 : index
    %770 = memref.load %arg2[%c64] : memref<128xf32, #tpu.memory_space<smem>>
    %771 = vector.broadcast %770 : f32 to vector<8x128xf32>
    %772 = arith.mulf %0, %771 : vector<8x128xf32>
    %c64_194 = arith.constant 64 : index
    %773 = memref.load %arg3[%c64_194] : memref<128xf32, #tpu.memory_space<smem>>
    %774 = vector.broadcast %773 : f32 to vector<8x128xf32>
    %775 = arith.addf %772, %774 : vector<8x128xf32>
    %cst_195 = arith.constant 0.000000e+00 : f32
    %776 = vector.broadcast %cst_195 : f32 to vector<8x128xf32>
    %777 = arith.maximumf %775, %776 : vector<8x128xf32>
    %c64_196 = arith.constant 64 : index
    %778 = memref.load %arg4[%c64_196] : memref<128xf32, #tpu.memory_space<smem>>
    %779 = vector.broadcast %778 : f32 to vector<8x128xf32>
    %780 = arith.mulf %777, %779 : vector<8x128xf32>
    %781 = arith.addf %769, %780 : vector<8x128xf32>
    %c65 = arith.constant 65 : index
    %782 = memref.load %arg2[%c65] : memref<128xf32, #tpu.memory_space<smem>>
    %783 = vector.broadcast %782 : f32 to vector<8x128xf32>
    %784 = arith.mulf %0, %783 : vector<8x128xf32>
    %c65_197 = arith.constant 65 : index
    %785 = memref.load %arg3[%c65_197] : memref<128xf32, #tpu.memory_space<smem>>
    %786 = vector.broadcast %785 : f32 to vector<8x128xf32>
    %787 = arith.addf %784, %786 : vector<8x128xf32>
    %cst_198 = arith.constant 0.000000e+00 : f32
    %788 = vector.broadcast %cst_198 : f32 to vector<8x128xf32>
    %789 = arith.maximumf %787, %788 : vector<8x128xf32>
    %c65_199 = arith.constant 65 : index
    %790 = memref.load %arg4[%c65_199] : memref<128xf32, #tpu.memory_space<smem>>
    %791 = vector.broadcast %790 : f32 to vector<8x128xf32>
    %792 = arith.mulf %789, %791 : vector<8x128xf32>
    %793 = arith.addf %781, %792 : vector<8x128xf32>
    %c66 = arith.constant 66 : index
    %794 = memref.load %arg2[%c66] : memref<128xf32, #tpu.memory_space<smem>>
    %795 = vector.broadcast %794 : f32 to vector<8x128xf32>
    %796 = arith.mulf %0, %795 : vector<8x128xf32>
    %c66_200 = arith.constant 66 : index
    %797 = memref.load %arg3[%c66_200] : memref<128xf32, #tpu.memory_space<smem>>
    %798 = vector.broadcast %797 : f32 to vector<8x128xf32>
    %799 = arith.addf %796, %798 : vector<8x128xf32>
    %cst_201 = arith.constant 0.000000e+00 : f32
    %800 = vector.broadcast %cst_201 : f32 to vector<8x128xf32>
    %801 = arith.maximumf %799, %800 : vector<8x128xf32>
    %c66_202 = arith.constant 66 : index
    %802 = memref.load %arg4[%c66_202] : memref<128xf32, #tpu.memory_space<smem>>
    %803 = vector.broadcast %802 : f32 to vector<8x128xf32>
    %804 = arith.mulf %801, %803 : vector<8x128xf32>
    %805 = arith.addf %793, %804 : vector<8x128xf32>
    %c67 = arith.constant 67 : index
    %806 = memref.load %arg2[%c67] : memref<128xf32, #tpu.memory_space<smem>>
    %807 = vector.broadcast %806 : f32 to vector<8x128xf32>
    %808 = arith.mulf %0, %807 : vector<8x128xf32>
    %c67_203 = arith.constant 67 : index
    %809 = memref.load %arg3[%c67_203] : memref<128xf32, #tpu.memory_space<smem>>
    %810 = vector.broadcast %809 : f32 to vector<8x128xf32>
    %811 = arith.addf %808, %810 : vector<8x128xf32>
    %cst_204 = arith.constant 0.000000e+00 : f32
    %812 = vector.broadcast %cst_204 : f32 to vector<8x128xf32>
    %813 = arith.maximumf %811, %812 : vector<8x128xf32>
    %c67_205 = arith.constant 67 : index
    %814 = memref.load %arg4[%c67_205] : memref<128xf32, #tpu.memory_space<smem>>
    %815 = vector.broadcast %814 : f32 to vector<8x128xf32>
    %816 = arith.mulf %813, %815 : vector<8x128xf32>
    %817 = arith.addf %805, %816 : vector<8x128xf32>
    %c68 = arith.constant 68 : index
    %818 = memref.load %arg2[%c68] : memref<128xf32, #tpu.memory_space<smem>>
    %819 = vector.broadcast %818 : f32 to vector<8x128xf32>
    %820 = arith.mulf %0, %819 : vector<8x128xf32>
    %c68_206 = arith.constant 68 : index
    %821 = memref.load %arg3[%c68_206] : memref<128xf32, #tpu.memory_space<smem>>
    %822 = vector.broadcast %821 : f32 to vector<8x128xf32>
    %823 = arith.addf %820, %822 : vector<8x128xf32>
    %cst_207 = arith.constant 0.000000e+00 : f32
    %824 = vector.broadcast %cst_207 : f32 to vector<8x128xf32>
    %825 = arith.maximumf %823, %824 : vector<8x128xf32>
    %c68_208 = arith.constant 68 : index
    %826 = memref.load %arg4[%c68_208] : memref<128xf32, #tpu.memory_space<smem>>
    %827 = vector.broadcast %826 : f32 to vector<8x128xf32>
    %828 = arith.mulf %825, %827 : vector<8x128xf32>
    %829 = arith.addf %817, %828 : vector<8x128xf32>
    %c69 = arith.constant 69 : index
    %830 = memref.load %arg2[%c69] : memref<128xf32, #tpu.memory_space<smem>>
    %831 = vector.broadcast %830 : f32 to vector<8x128xf32>
    %832 = arith.mulf %0, %831 : vector<8x128xf32>
    %c69_209 = arith.constant 69 : index
    %833 = memref.load %arg3[%c69_209] : memref<128xf32, #tpu.memory_space<smem>>
    %834 = vector.broadcast %833 : f32 to vector<8x128xf32>
    %835 = arith.addf %832, %834 : vector<8x128xf32>
    %cst_210 = arith.constant 0.000000e+00 : f32
    %836 = vector.broadcast %cst_210 : f32 to vector<8x128xf32>
    %837 = arith.maximumf %835, %836 : vector<8x128xf32>
    %c69_211 = arith.constant 69 : index
    %838 = memref.load %arg4[%c69_211] : memref<128xf32, #tpu.memory_space<smem>>
    %839 = vector.broadcast %838 : f32 to vector<8x128xf32>
    %840 = arith.mulf %837, %839 : vector<8x128xf32>
    %841 = arith.addf %829, %840 : vector<8x128xf32>
    %c70 = arith.constant 70 : index
    %842 = memref.load %arg2[%c70] : memref<128xf32, #tpu.memory_space<smem>>
    %843 = vector.broadcast %842 : f32 to vector<8x128xf32>
    %844 = arith.mulf %0, %843 : vector<8x128xf32>
    %c70_212 = arith.constant 70 : index
    %845 = memref.load %arg3[%c70_212] : memref<128xf32, #tpu.memory_space<smem>>
    %846 = vector.broadcast %845 : f32 to vector<8x128xf32>
    %847 = arith.addf %844, %846 : vector<8x128xf32>
    %cst_213 = arith.constant 0.000000e+00 : f32
    %848 = vector.broadcast %cst_213 : f32 to vector<8x128xf32>
    %849 = arith.maximumf %847, %848 : vector<8x128xf32>
    %c70_214 = arith.constant 70 : index
    %850 = memref.load %arg4[%c70_214] : memref<128xf32, #tpu.memory_space<smem>>
    %851 = vector.broadcast %850 : f32 to vector<8x128xf32>
    %852 = arith.mulf %849, %851 : vector<8x128xf32>
    %853 = arith.addf %841, %852 : vector<8x128xf32>
    %c71 = arith.constant 71 : index
    %854 = memref.load %arg2[%c71] : memref<128xf32, #tpu.memory_space<smem>>
    %855 = vector.broadcast %854 : f32 to vector<8x128xf32>
    %856 = arith.mulf %0, %855 : vector<8x128xf32>
    %c71_215 = arith.constant 71 : index
    %857 = memref.load %arg3[%c71_215] : memref<128xf32, #tpu.memory_space<smem>>
    %858 = vector.broadcast %857 : f32 to vector<8x128xf32>
    %859 = arith.addf %856, %858 : vector<8x128xf32>
    %cst_216 = arith.constant 0.000000e+00 : f32
    %860 = vector.broadcast %cst_216 : f32 to vector<8x128xf32>
    %861 = arith.maximumf %859, %860 : vector<8x128xf32>
    %c71_217 = arith.constant 71 : index
    %862 = memref.load %arg4[%c71_217] : memref<128xf32, #tpu.memory_space<smem>>
    %863 = vector.broadcast %862 : f32 to vector<8x128xf32>
    %864 = arith.mulf %861, %863 : vector<8x128xf32>
    %865 = arith.addf %853, %864 : vector<8x128xf32>
    %c72 = arith.constant 72 : index
    %866 = memref.load %arg2[%c72] : memref<128xf32, #tpu.memory_space<smem>>
    %867 = vector.broadcast %866 : f32 to vector<8x128xf32>
    %868 = arith.mulf %0, %867 : vector<8x128xf32>
    %c72_218 = arith.constant 72 : index
    %869 = memref.load %arg3[%c72_218] : memref<128xf32, #tpu.memory_space<smem>>
    %870 = vector.broadcast %869 : f32 to vector<8x128xf32>
    %871 = arith.addf %868, %870 : vector<8x128xf32>
    %cst_219 = arith.constant 0.000000e+00 : f32
    %872 = vector.broadcast %cst_219 : f32 to vector<8x128xf32>
    %873 = arith.maximumf %871, %872 : vector<8x128xf32>
    %c72_220 = arith.constant 72 : index
    %874 = memref.load %arg4[%c72_220] : memref<128xf32, #tpu.memory_space<smem>>
    %875 = vector.broadcast %874 : f32 to vector<8x128xf32>
    %876 = arith.mulf %873, %875 : vector<8x128xf32>
    %877 = arith.addf %865, %876 : vector<8x128xf32>
    %c73 = arith.constant 73 : index
    %878 = memref.load %arg2[%c73] : memref<128xf32, #tpu.memory_space<smem>>
    %879 = vector.broadcast %878 : f32 to vector<8x128xf32>
    %880 = arith.mulf %0, %879 : vector<8x128xf32>
    %c73_221 = arith.constant 73 : index
    %881 = memref.load %arg3[%c73_221] : memref<128xf32, #tpu.memory_space<smem>>
    %882 = vector.broadcast %881 : f32 to vector<8x128xf32>
    %883 = arith.addf %880, %882 : vector<8x128xf32>
    %cst_222 = arith.constant 0.000000e+00 : f32
    %884 = vector.broadcast %cst_222 : f32 to vector<8x128xf32>
    %885 = arith.maximumf %883, %884 : vector<8x128xf32>
    %c73_223 = arith.constant 73 : index
    %886 = memref.load %arg4[%c73_223] : memref<128xf32, #tpu.memory_space<smem>>
    %887 = vector.broadcast %886 : f32 to vector<8x128xf32>
    %888 = arith.mulf %885, %887 : vector<8x128xf32>
    %889 = arith.addf %877, %888 : vector<8x128xf32>
    %c74 = arith.constant 74 : index
    %890 = memref.load %arg2[%c74] : memref<128xf32, #tpu.memory_space<smem>>
    %891 = vector.broadcast %890 : f32 to vector<8x128xf32>
    %892 = arith.mulf %0, %891 : vector<8x128xf32>
    %c74_224 = arith.constant 74 : index
    %893 = memref.load %arg3[%c74_224] : memref<128xf32, #tpu.memory_space<smem>>
    %894 = vector.broadcast %893 : f32 to vector<8x128xf32>
    %895 = arith.addf %892, %894 : vector<8x128xf32>
    %cst_225 = arith.constant 0.000000e+00 : f32
    %896 = vector.broadcast %cst_225 : f32 to vector<8x128xf32>
    %897 = arith.maximumf %895, %896 : vector<8x128xf32>
    %c74_226 = arith.constant 74 : index
    %898 = memref.load %arg4[%c74_226] : memref<128xf32, #tpu.memory_space<smem>>
    %899 = vector.broadcast %898 : f32 to vector<8x128xf32>
    %900 = arith.mulf %897, %899 : vector<8x128xf32>
    %901 = arith.addf %889, %900 : vector<8x128xf32>
    %c75 = arith.constant 75 : index
    %902 = memref.load %arg2[%c75] : memref<128xf32, #tpu.memory_space<smem>>
    %903 = vector.broadcast %902 : f32 to vector<8x128xf32>
    %904 = arith.mulf %0, %903 : vector<8x128xf32>
    %c75_227 = arith.constant 75 : index
    %905 = memref.load %arg3[%c75_227] : memref<128xf32, #tpu.memory_space<smem>>
    %906 = vector.broadcast %905 : f32 to vector<8x128xf32>
    %907 = arith.addf %904, %906 : vector<8x128xf32>
    %cst_228 = arith.constant 0.000000e+00 : f32
    %908 = vector.broadcast %cst_228 : f32 to vector<8x128xf32>
    %909 = arith.maximumf %907, %908 : vector<8x128xf32>
    %c75_229 = arith.constant 75 : index
    %910 = memref.load %arg4[%c75_229] : memref<128xf32, #tpu.memory_space<smem>>
    %911 = vector.broadcast %910 : f32 to vector<8x128xf32>
    %912 = arith.mulf %909, %911 : vector<8x128xf32>
    %913 = arith.addf %901, %912 : vector<8x128xf32>
    %c76 = arith.constant 76 : index
    %914 = memref.load %arg2[%c76] : memref<128xf32, #tpu.memory_space<smem>>
    %915 = vector.broadcast %914 : f32 to vector<8x128xf32>
    %916 = arith.mulf %0, %915 : vector<8x128xf32>
    %c76_230 = arith.constant 76 : index
    %917 = memref.load %arg3[%c76_230] : memref<128xf32, #tpu.memory_space<smem>>
    %918 = vector.broadcast %917 : f32 to vector<8x128xf32>
    %919 = arith.addf %916, %918 : vector<8x128xf32>
    %cst_231 = arith.constant 0.000000e+00 : f32
    %920 = vector.broadcast %cst_231 : f32 to vector<8x128xf32>
    %921 = arith.maximumf %919, %920 : vector<8x128xf32>
    %c76_232 = arith.constant 76 : index
    %922 = memref.load %arg4[%c76_232] : memref<128xf32, #tpu.memory_space<smem>>
    %923 = vector.broadcast %922 : f32 to vector<8x128xf32>
    %924 = arith.mulf %921, %923 : vector<8x128xf32>
    %925 = arith.addf %913, %924 : vector<8x128xf32>
    %c77 = arith.constant 77 : index
    %926 = memref.load %arg2[%c77] : memref<128xf32, #tpu.memory_space<smem>>
    %927 = vector.broadcast %926 : f32 to vector<8x128xf32>
    %928 = arith.mulf %0, %927 : vector<8x128xf32>
    %c77_233 = arith.constant 77 : index
    %929 = memref.load %arg3[%c77_233] : memref<128xf32, #tpu.memory_space<smem>>
    %930 = vector.broadcast %929 : f32 to vector<8x128xf32>
    %931 = arith.addf %928, %930 : vector<8x128xf32>
    %cst_234 = arith.constant 0.000000e+00 : f32
    %932 = vector.broadcast %cst_234 : f32 to vector<8x128xf32>
    %933 = arith.maximumf %931, %932 : vector<8x128xf32>
    %c77_235 = arith.constant 77 : index
    %934 = memref.load %arg4[%c77_235] : memref<128xf32, #tpu.memory_space<smem>>
    %935 = vector.broadcast %934 : f32 to vector<8x128xf32>
    %936 = arith.mulf %933, %935 : vector<8x128xf32>
    %937 = arith.addf %925, %936 : vector<8x128xf32>
    %c78 = arith.constant 78 : index
    %938 = memref.load %arg2[%c78] : memref<128xf32, #tpu.memory_space<smem>>
    %939 = vector.broadcast %938 : f32 to vector<8x128xf32>
    %940 = arith.mulf %0, %939 : vector<8x128xf32>
    %c78_236 = arith.constant 78 : index
    %941 = memref.load %arg3[%c78_236] : memref<128xf32, #tpu.memory_space<smem>>
    %942 = vector.broadcast %941 : f32 to vector<8x128xf32>
    %943 = arith.addf %940, %942 : vector<8x128xf32>
    %cst_237 = arith.constant 0.000000e+00 : f32
    %944 = vector.broadcast %cst_237 : f32 to vector<8x128xf32>
    %945 = arith.maximumf %943, %944 : vector<8x128xf32>
    %c78_238 = arith.constant 78 : index
    %946 = memref.load %arg4[%c78_238] : memref<128xf32, #tpu.memory_space<smem>>
    %947 = vector.broadcast %946 : f32 to vector<8x128xf32>
    %948 = arith.mulf %945, %947 : vector<8x128xf32>
    %949 = arith.addf %937, %948 : vector<8x128xf32>
    %c79 = arith.constant 79 : index
    %950 = memref.load %arg2[%c79] : memref<128xf32, #tpu.memory_space<smem>>
    %951 = vector.broadcast %950 : f32 to vector<8x128xf32>
    %952 = arith.mulf %0, %951 : vector<8x128xf32>
    %c79_239 = arith.constant 79 : index
    %953 = memref.load %arg3[%c79_239] : memref<128xf32, #tpu.memory_space<smem>>
    %954 = vector.broadcast %953 : f32 to vector<8x128xf32>
    %955 = arith.addf %952, %954 : vector<8x128xf32>
    %cst_240 = arith.constant 0.000000e+00 : f32
    %956 = vector.broadcast %cst_240 : f32 to vector<8x128xf32>
    %957 = arith.maximumf %955, %956 : vector<8x128xf32>
    %c79_241 = arith.constant 79 : index
    %958 = memref.load %arg4[%c79_241] : memref<128xf32, #tpu.memory_space<smem>>
    %959 = vector.broadcast %958 : f32 to vector<8x128xf32>
    %960 = arith.mulf %957, %959 : vector<8x128xf32>
    %961 = arith.addf %949, %960 : vector<8x128xf32>
    %c80 = arith.constant 80 : index
    %962 = memref.load %arg2[%c80] : memref<128xf32, #tpu.memory_space<smem>>
    %963 = vector.broadcast %962 : f32 to vector<8x128xf32>
    %964 = arith.mulf %0, %963 : vector<8x128xf32>
    %c80_242 = arith.constant 80 : index
    %965 = memref.load %arg3[%c80_242] : memref<128xf32, #tpu.memory_space<smem>>
    %966 = vector.broadcast %965 : f32 to vector<8x128xf32>
    %967 = arith.addf %964, %966 : vector<8x128xf32>
    %cst_243 = arith.constant 0.000000e+00 : f32
    %968 = vector.broadcast %cst_243 : f32 to vector<8x128xf32>
    %969 = arith.maximumf %967, %968 : vector<8x128xf32>
    %c80_244 = arith.constant 80 : index
    %970 = memref.load %arg4[%c80_244] : memref<128xf32, #tpu.memory_space<smem>>
    %971 = vector.broadcast %970 : f32 to vector<8x128xf32>
    %972 = arith.mulf %969, %971 : vector<8x128xf32>
    %973 = arith.addf %961, %972 : vector<8x128xf32>
    %c81 = arith.constant 81 : index
    %974 = memref.load %arg2[%c81] : memref<128xf32, #tpu.memory_space<smem>>
    %975 = vector.broadcast %974 : f32 to vector<8x128xf32>
    %976 = arith.mulf %0, %975 : vector<8x128xf32>
    %c81_245 = arith.constant 81 : index
    %977 = memref.load %arg3[%c81_245] : memref<128xf32, #tpu.memory_space<smem>>
    %978 = vector.broadcast %977 : f32 to vector<8x128xf32>
    %979 = arith.addf %976, %978 : vector<8x128xf32>
    %cst_246 = arith.constant 0.000000e+00 : f32
    %980 = vector.broadcast %cst_246 : f32 to vector<8x128xf32>
    %981 = arith.maximumf %979, %980 : vector<8x128xf32>
    %c81_247 = arith.constant 81 : index
    %982 = memref.load %arg4[%c81_247] : memref<128xf32, #tpu.memory_space<smem>>
    %983 = vector.broadcast %982 : f32 to vector<8x128xf32>
    %984 = arith.mulf %981, %983 : vector<8x128xf32>
    %985 = arith.addf %973, %984 : vector<8x128xf32>
    %c82 = arith.constant 82 : index
    %986 = memref.load %arg2[%c82] : memref<128xf32, #tpu.memory_space<smem>>
    %987 = vector.broadcast %986 : f32 to vector<8x128xf32>
    %988 = arith.mulf %0, %987 : vector<8x128xf32>
    %c82_248 = arith.constant 82 : index
    %989 = memref.load %arg3[%c82_248] : memref<128xf32, #tpu.memory_space<smem>>
    %990 = vector.broadcast %989 : f32 to vector<8x128xf32>
    %991 = arith.addf %988, %990 : vector<8x128xf32>
    %cst_249 = arith.constant 0.000000e+00 : f32
    %992 = vector.broadcast %cst_249 : f32 to vector<8x128xf32>
    %993 = arith.maximumf %991, %992 : vector<8x128xf32>
    %c82_250 = arith.constant 82 : index
    %994 = memref.load %arg4[%c82_250] : memref<128xf32, #tpu.memory_space<smem>>
    %995 = vector.broadcast %994 : f32 to vector<8x128xf32>
    %996 = arith.mulf %993, %995 : vector<8x128xf32>
    %997 = arith.addf %985, %996 : vector<8x128xf32>
    %c83 = arith.constant 83 : index
    %998 = memref.load %arg2[%c83] : memref<128xf32, #tpu.memory_space<smem>>
    %999 = vector.broadcast %998 : f32 to vector<8x128xf32>
    %1000 = arith.mulf %0, %999 : vector<8x128xf32>
    %c83_251 = arith.constant 83 : index
    %1001 = memref.load %arg3[%c83_251] : memref<128xf32, #tpu.memory_space<smem>>
    %1002 = vector.broadcast %1001 : f32 to vector<8x128xf32>
    %1003 = arith.addf %1000, %1002 : vector<8x128xf32>
    %cst_252 = arith.constant 0.000000e+00 : f32
    %1004 = vector.broadcast %cst_252 : f32 to vector<8x128xf32>
    %1005 = arith.maximumf %1003, %1004 : vector<8x128xf32>
    %c83_253 = arith.constant 83 : index
    %1006 = memref.load %arg4[%c83_253] : memref<128xf32, #tpu.memory_space<smem>>
    %1007 = vector.broadcast %1006 : f32 to vector<8x128xf32>
    %1008 = arith.mulf %1005, %1007 : vector<8x128xf32>
    %1009 = arith.addf %997, %1008 : vector<8x128xf32>
    %c84 = arith.constant 84 : index
    %1010 = memref.load %arg2[%c84] : memref<128xf32, #tpu.memory_space<smem>>
    %1011 = vector.broadcast %1010 : f32 to vector<8x128xf32>
    %1012 = arith.mulf %0, %1011 : vector<8x128xf32>
    %c84_254 = arith.constant 84 : index
    %1013 = memref.load %arg3[%c84_254] : memref<128xf32, #tpu.memory_space<smem>>
    %1014 = vector.broadcast %1013 : f32 to vector<8x128xf32>
    %1015 = arith.addf %1012, %1014 : vector<8x128xf32>
    %cst_255 = arith.constant 0.000000e+00 : f32
    %1016 = vector.broadcast %cst_255 : f32 to vector<8x128xf32>
    %1017 = arith.maximumf %1015, %1016 : vector<8x128xf32>
    %c84_256 = arith.constant 84 : index
    %1018 = memref.load %arg4[%c84_256] : memref<128xf32, #tpu.memory_space<smem>>
    %1019 = vector.broadcast %1018 : f32 to vector<8x128xf32>
    %1020 = arith.mulf %1017, %1019 : vector<8x128xf32>
    %1021 = arith.addf %1009, %1020 : vector<8x128xf32>
    %c85 = arith.constant 85 : index
    %1022 = memref.load %arg2[%c85] : memref<128xf32, #tpu.memory_space<smem>>
    %1023 = vector.broadcast %1022 : f32 to vector<8x128xf32>
    %1024 = arith.mulf %0, %1023 : vector<8x128xf32>
    %c85_257 = arith.constant 85 : index
    %1025 = memref.load %arg3[%c85_257] : memref<128xf32, #tpu.memory_space<smem>>
    %1026 = vector.broadcast %1025 : f32 to vector<8x128xf32>
    %1027 = arith.addf %1024, %1026 : vector<8x128xf32>
    %cst_258 = arith.constant 0.000000e+00 : f32
    %1028 = vector.broadcast %cst_258 : f32 to vector<8x128xf32>
    %1029 = arith.maximumf %1027, %1028 : vector<8x128xf32>
    %c85_259 = arith.constant 85 : index
    %1030 = memref.load %arg4[%c85_259] : memref<128xf32, #tpu.memory_space<smem>>
    %1031 = vector.broadcast %1030 : f32 to vector<8x128xf32>
    %1032 = arith.mulf %1029, %1031 : vector<8x128xf32>
    %1033 = arith.addf %1021, %1032 : vector<8x128xf32>
    %c86 = arith.constant 86 : index
    %1034 = memref.load %arg2[%c86] : memref<128xf32, #tpu.memory_space<smem>>
    %1035 = vector.broadcast %1034 : f32 to vector<8x128xf32>
    %1036 = arith.mulf %0, %1035 : vector<8x128xf32>
    %c86_260 = arith.constant 86 : index
    %1037 = memref.load %arg3[%c86_260] : memref<128xf32, #tpu.memory_space<smem>>
    %1038 = vector.broadcast %1037 : f32 to vector<8x128xf32>
    %1039 = arith.addf %1036, %1038 : vector<8x128xf32>
    %cst_261 = arith.constant 0.000000e+00 : f32
    %1040 = vector.broadcast %cst_261 : f32 to vector<8x128xf32>
    %1041 = arith.maximumf %1039, %1040 : vector<8x128xf32>
    %c86_262 = arith.constant 86 : index
    %1042 = memref.load %arg4[%c86_262] : memref<128xf32, #tpu.memory_space<smem>>
    %1043 = vector.broadcast %1042 : f32 to vector<8x128xf32>
    %1044 = arith.mulf %1041, %1043 : vector<8x128xf32>
    %1045 = arith.addf %1033, %1044 : vector<8x128xf32>
    %c87 = arith.constant 87 : index
    %1046 = memref.load %arg2[%c87] : memref<128xf32, #tpu.memory_space<smem>>
    %1047 = vector.broadcast %1046 : f32 to vector<8x128xf32>
    %1048 = arith.mulf %0, %1047 : vector<8x128xf32>
    %c87_263 = arith.constant 87 : index
    %1049 = memref.load %arg3[%c87_263] : memref<128xf32, #tpu.memory_space<smem>>
    %1050 = vector.broadcast %1049 : f32 to vector<8x128xf32>
    %1051 = arith.addf %1048, %1050 : vector<8x128xf32>
    %cst_264 = arith.constant 0.000000e+00 : f32
    %1052 = vector.broadcast %cst_264 : f32 to vector<8x128xf32>
    %1053 = arith.maximumf %1051, %1052 : vector<8x128xf32>
    %c87_265 = arith.constant 87 : index
    %1054 = memref.load %arg4[%c87_265] : memref<128xf32, #tpu.memory_space<smem>>
    %1055 = vector.broadcast %1054 : f32 to vector<8x128xf32>
    %1056 = arith.mulf %1053, %1055 : vector<8x128xf32>
    %1057 = arith.addf %1045, %1056 : vector<8x128xf32>
    %c88 = arith.constant 88 : index
    %1058 = memref.load %arg2[%c88] : memref<128xf32, #tpu.memory_space<smem>>
    %1059 = vector.broadcast %1058 : f32 to vector<8x128xf32>
    %1060 = arith.mulf %0, %1059 : vector<8x128xf32>
    %c88_266 = arith.constant 88 : index
    %1061 = memref.load %arg3[%c88_266] : memref<128xf32, #tpu.memory_space<smem>>
    %1062 = vector.broadcast %1061 : f32 to vector<8x128xf32>
    %1063 = arith.addf %1060, %1062 : vector<8x128xf32>
    %cst_267 = arith.constant 0.000000e+00 : f32
    %1064 = vector.broadcast %cst_267 : f32 to vector<8x128xf32>
    %1065 = arith.maximumf %1063, %1064 : vector<8x128xf32>
    %c88_268 = arith.constant 88 : index
    %1066 = memref.load %arg4[%c88_268] : memref<128xf32, #tpu.memory_space<smem>>
    %1067 = vector.broadcast %1066 : f32 to vector<8x128xf32>
    %1068 = arith.mulf %1065, %1067 : vector<8x128xf32>
    %1069 = arith.addf %1057, %1068 : vector<8x128xf32>
    %c89 = arith.constant 89 : index
    %1070 = memref.load %arg2[%c89] : memref<128xf32, #tpu.memory_space<smem>>
    %1071 = vector.broadcast %1070 : f32 to vector<8x128xf32>
    %1072 = arith.mulf %0, %1071 : vector<8x128xf32>
    %c89_269 = arith.constant 89 : index
    %1073 = memref.load %arg3[%c89_269] : memref<128xf32, #tpu.memory_space<smem>>
    %1074 = vector.broadcast %1073 : f32 to vector<8x128xf32>
    %1075 = arith.addf %1072, %1074 : vector<8x128xf32>
    %cst_270 = arith.constant 0.000000e+00 : f32
    %1076 = vector.broadcast %cst_270 : f32 to vector<8x128xf32>
    %1077 = arith.maximumf %1075, %1076 : vector<8x128xf32>
    %c89_271 = arith.constant 89 : index
    %1078 = memref.load %arg4[%c89_271] : memref<128xf32, #tpu.memory_space<smem>>
    %1079 = vector.broadcast %1078 : f32 to vector<8x128xf32>
    %1080 = arith.mulf %1077, %1079 : vector<8x128xf32>
    %1081 = arith.addf %1069, %1080 : vector<8x128xf32>
    %c90 = arith.constant 90 : index
    %1082 = memref.load %arg2[%c90] : memref<128xf32, #tpu.memory_space<smem>>
    %1083 = vector.broadcast %1082 : f32 to vector<8x128xf32>
    %1084 = arith.mulf %0, %1083 : vector<8x128xf32>
    %c90_272 = arith.constant 90 : index
    %1085 = memref.load %arg3[%c90_272] : memref<128xf32, #tpu.memory_space<smem>>
    %1086 = vector.broadcast %1085 : f32 to vector<8x128xf32>
    %1087 = arith.addf %1084, %1086 : vector<8x128xf32>
    %cst_273 = arith.constant 0.000000e+00 : f32
    %1088 = vector.broadcast %cst_273 : f32 to vector<8x128xf32>
    %1089 = arith.maximumf %1087, %1088 : vector<8x128xf32>
    %c90_274 = arith.constant 90 : index
    %1090 = memref.load %arg4[%c90_274] : memref<128xf32, #tpu.memory_space<smem>>
    %1091 = vector.broadcast %1090 : f32 to vector<8x128xf32>
    %1092 = arith.mulf %1089, %1091 : vector<8x128xf32>
    %1093 = arith.addf %1081, %1092 : vector<8x128xf32>
    %c91 = arith.constant 91 : index
    %1094 = memref.load %arg2[%c91] : memref<128xf32, #tpu.memory_space<smem>>
    %1095 = vector.broadcast %1094 : f32 to vector<8x128xf32>
    %1096 = arith.mulf %0, %1095 : vector<8x128xf32>
    %c91_275 = arith.constant 91 : index
    %1097 = memref.load %arg3[%c91_275] : memref<128xf32, #tpu.memory_space<smem>>
    %1098 = vector.broadcast %1097 : f32 to vector<8x128xf32>
    %1099 = arith.addf %1096, %1098 : vector<8x128xf32>
    %cst_276 = arith.constant 0.000000e+00 : f32
    %1100 = vector.broadcast %cst_276 : f32 to vector<8x128xf32>
    %1101 = arith.maximumf %1099, %1100 : vector<8x128xf32>
    %c91_277 = arith.constant 91 : index
    %1102 = memref.load %arg4[%c91_277] : memref<128xf32, #tpu.memory_space<smem>>
    %1103 = vector.broadcast %1102 : f32 to vector<8x128xf32>
    %1104 = arith.mulf %1101, %1103 : vector<8x128xf32>
    %1105 = arith.addf %1093, %1104 : vector<8x128xf32>
    %c92 = arith.constant 92 : index
    %1106 = memref.load %arg2[%c92] : memref<128xf32, #tpu.memory_space<smem>>
    %1107 = vector.broadcast %1106 : f32 to vector<8x128xf32>
    %1108 = arith.mulf %0, %1107 : vector<8x128xf32>
    %c92_278 = arith.constant 92 : index
    %1109 = memref.load %arg3[%c92_278] : memref<128xf32, #tpu.memory_space<smem>>
    %1110 = vector.broadcast %1109 : f32 to vector<8x128xf32>
    %1111 = arith.addf %1108, %1110 : vector<8x128xf32>
    %cst_279 = arith.constant 0.000000e+00 : f32
    %1112 = vector.broadcast %cst_279 : f32 to vector<8x128xf32>
    %1113 = arith.maximumf %1111, %1112 : vector<8x128xf32>
    %c92_280 = arith.constant 92 : index
    %1114 = memref.load %arg4[%c92_280] : memref<128xf32, #tpu.memory_space<smem>>
    %1115 = vector.broadcast %1114 : f32 to vector<8x128xf32>
    %1116 = arith.mulf %1113, %1115 : vector<8x128xf32>
    %1117 = arith.addf %1105, %1116 : vector<8x128xf32>
    %c93 = arith.constant 93 : index
    %1118 = memref.load %arg2[%c93] : memref<128xf32, #tpu.memory_space<smem>>
    %1119 = vector.broadcast %1118 : f32 to vector<8x128xf32>
    %1120 = arith.mulf %0, %1119 : vector<8x128xf32>
    %c93_281 = arith.constant 93 : index
    %1121 = memref.load %arg3[%c93_281] : memref<128xf32, #tpu.memory_space<smem>>
    %1122 = vector.broadcast %1121 : f32 to vector<8x128xf32>
    %1123 = arith.addf %1120, %1122 : vector<8x128xf32>
    %cst_282 = arith.constant 0.000000e+00 : f32
    %1124 = vector.broadcast %cst_282 : f32 to vector<8x128xf32>
    %1125 = arith.maximumf %1123, %1124 : vector<8x128xf32>
    %c93_283 = arith.constant 93 : index
    %1126 = memref.load %arg4[%c93_283] : memref<128xf32, #tpu.memory_space<smem>>
    %1127 = vector.broadcast %1126 : f32 to vector<8x128xf32>
    %1128 = arith.mulf %1125, %1127 : vector<8x128xf32>
    %1129 = arith.addf %1117, %1128 : vector<8x128xf32>
    %c94 = arith.constant 94 : index
    %1130 = memref.load %arg2[%c94] : memref<128xf32, #tpu.memory_space<smem>>
    %1131 = vector.broadcast %1130 : f32 to vector<8x128xf32>
    %1132 = arith.mulf %0, %1131 : vector<8x128xf32>
    %c94_284 = arith.constant 94 : index
    %1133 = memref.load %arg3[%c94_284] : memref<128xf32, #tpu.memory_space<smem>>
    %1134 = vector.broadcast %1133 : f32 to vector<8x128xf32>
    %1135 = arith.addf %1132, %1134 : vector<8x128xf32>
    %cst_285 = arith.constant 0.000000e+00 : f32
    %1136 = vector.broadcast %cst_285 : f32 to vector<8x128xf32>
    %1137 = arith.maximumf %1135, %1136 : vector<8x128xf32>
    %c94_286 = arith.constant 94 : index
    %1138 = memref.load %arg4[%c94_286] : memref<128xf32, #tpu.memory_space<smem>>
    %1139 = vector.broadcast %1138 : f32 to vector<8x128xf32>
    %1140 = arith.mulf %1137, %1139 : vector<8x128xf32>
    %1141 = arith.addf %1129, %1140 : vector<8x128xf32>
    %c95 = arith.constant 95 : index
    %1142 = memref.load %arg2[%c95] : memref<128xf32, #tpu.memory_space<smem>>
    %1143 = vector.broadcast %1142 : f32 to vector<8x128xf32>
    %1144 = arith.mulf %0, %1143 : vector<8x128xf32>
    %c95_287 = arith.constant 95 : index
    %1145 = memref.load %arg3[%c95_287] : memref<128xf32, #tpu.memory_space<smem>>
    %1146 = vector.broadcast %1145 : f32 to vector<8x128xf32>
    %1147 = arith.addf %1144, %1146 : vector<8x128xf32>
    %cst_288 = arith.constant 0.000000e+00 : f32
    %1148 = vector.broadcast %cst_288 : f32 to vector<8x128xf32>
    %1149 = arith.maximumf %1147, %1148 : vector<8x128xf32>
    %c95_289 = arith.constant 95 : index
    %1150 = memref.load %arg4[%c95_289] : memref<128xf32, #tpu.memory_space<smem>>
    %1151 = vector.broadcast %1150 : f32 to vector<8x128xf32>
    %1152 = arith.mulf %1149, %1151 : vector<8x128xf32>
    %1153 = arith.addf %1141, %1152 : vector<8x128xf32>
    %c96 = arith.constant 96 : index
    %1154 = memref.load %arg2[%c96] : memref<128xf32, #tpu.memory_space<smem>>
    %1155 = vector.broadcast %1154 : f32 to vector<8x128xf32>
    %1156 = arith.mulf %0, %1155 : vector<8x128xf32>
    %c96_290 = arith.constant 96 : index
    %1157 = memref.load %arg3[%c96_290] : memref<128xf32, #tpu.memory_space<smem>>
    %1158 = vector.broadcast %1157 : f32 to vector<8x128xf32>
    %1159 = arith.addf %1156, %1158 : vector<8x128xf32>
    %cst_291 = arith.constant 0.000000e+00 : f32
    %1160 = vector.broadcast %cst_291 : f32 to vector<8x128xf32>
    %1161 = arith.maximumf %1159, %1160 : vector<8x128xf32>
    %c96_292 = arith.constant 96 : index
    %1162 = memref.load %arg4[%c96_292] : memref<128xf32, #tpu.memory_space<smem>>
    %1163 = vector.broadcast %1162 : f32 to vector<8x128xf32>
    %1164 = arith.mulf %1161, %1163 : vector<8x128xf32>
    %1165 = arith.addf %1153, %1164 : vector<8x128xf32>
    %c97 = arith.constant 97 : index
    %1166 = memref.load %arg2[%c97] : memref<128xf32, #tpu.memory_space<smem>>
    %1167 = vector.broadcast %1166 : f32 to vector<8x128xf32>
    %1168 = arith.mulf %0, %1167 : vector<8x128xf32>
    %c97_293 = arith.constant 97 : index
    %1169 = memref.load %arg3[%c97_293] : memref<128xf32, #tpu.memory_space<smem>>
    %1170 = vector.broadcast %1169 : f32 to vector<8x128xf32>
    %1171 = arith.addf %1168, %1170 : vector<8x128xf32>
    %cst_294 = arith.constant 0.000000e+00 : f32
    %1172 = vector.broadcast %cst_294 : f32 to vector<8x128xf32>
    %1173 = arith.maximumf %1171, %1172 : vector<8x128xf32>
    %c97_295 = arith.constant 97 : index
    %1174 = memref.load %arg4[%c97_295] : memref<128xf32, #tpu.memory_space<smem>>
    %1175 = vector.broadcast %1174 : f32 to vector<8x128xf32>
    %1176 = arith.mulf %1173, %1175 : vector<8x128xf32>
    %1177 = arith.addf %1165, %1176 : vector<8x128xf32>
    %c98 = arith.constant 98 : index
    %1178 = memref.load %arg2[%c98] : memref<128xf32, #tpu.memory_space<smem>>
    %1179 = vector.broadcast %1178 : f32 to vector<8x128xf32>
    %1180 = arith.mulf %0, %1179 : vector<8x128xf32>
    %c98_296 = arith.constant 98 : index
    %1181 = memref.load %arg3[%c98_296] : memref<128xf32, #tpu.memory_space<smem>>
    %1182 = vector.broadcast %1181 : f32 to vector<8x128xf32>
    %1183 = arith.addf %1180, %1182 : vector<8x128xf32>
    %cst_297 = arith.constant 0.000000e+00 : f32
    %1184 = vector.broadcast %cst_297 : f32 to vector<8x128xf32>
    %1185 = arith.maximumf %1183, %1184 : vector<8x128xf32>
    %c98_298 = arith.constant 98 : index
    %1186 = memref.load %arg4[%c98_298] : memref<128xf32, #tpu.memory_space<smem>>
    %1187 = vector.broadcast %1186 : f32 to vector<8x128xf32>
    %1188 = arith.mulf %1185, %1187 : vector<8x128xf32>
    %1189 = arith.addf %1177, %1188 : vector<8x128xf32>
    %c99 = arith.constant 99 : index
    %1190 = memref.load %arg2[%c99] : memref<128xf32, #tpu.memory_space<smem>>
    %1191 = vector.broadcast %1190 : f32 to vector<8x128xf32>
    %1192 = arith.mulf %0, %1191 : vector<8x128xf32>
    %c99_299 = arith.constant 99 : index
    %1193 = memref.load %arg3[%c99_299] : memref<128xf32, #tpu.memory_space<smem>>
    %1194 = vector.broadcast %1193 : f32 to vector<8x128xf32>
    %1195 = arith.addf %1192, %1194 : vector<8x128xf32>
    %cst_300 = arith.constant 0.000000e+00 : f32
    %1196 = vector.broadcast %cst_300 : f32 to vector<8x128xf32>
    %1197 = arith.maximumf %1195, %1196 : vector<8x128xf32>
    %c99_301 = arith.constant 99 : index
    %1198 = memref.load %arg4[%c99_301] : memref<128xf32, #tpu.memory_space<smem>>
    %1199 = vector.broadcast %1198 : f32 to vector<8x128xf32>
    %1200 = arith.mulf %1197, %1199 : vector<8x128xf32>
    %1201 = arith.addf %1189, %1200 : vector<8x128xf32>
    %c100 = arith.constant 100 : index
    %1202 = memref.load %arg2[%c100] : memref<128xf32, #tpu.memory_space<smem>>
    %1203 = vector.broadcast %1202 : f32 to vector<8x128xf32>
    %1204 = arith.mulf %0, %1203 : vector<8x128xf32>
    %c100_302 = arith.constant 100 : index
    %1205 = memref.load %arg3[%c100_302] : memref<128xf32, #tpu.memory_space<smem>>
    %1206 = vector.broadcast %1205 : f32 to vector<8x128xf32>
    %1207 = arith.addf %1204, %1206 : vector<8x128xf32>
    %cst_303 = arith.constant 0.000000e+00 : f32
    %1208 = vector.broadcast %cst_303 : f32 to vector<8x128xf32>
    %1209 = arith.maximumf %1207, %1208 : vector<8x128xf32>
    %c100_304 = arith.constant 100 : index
    %1210 = memref.load %arg4[%c100_304] : memref<128xf32, #tpu.memory_space<smem>>
    %1211 = vector.broadcast %1210 : f32 to vector<8x128xf32>
    %1212 = arith.mulf %1209, %1211 : vector<8x128xf32>
    %1213 = arith.addf %1201, %1212 : vector<8x128xf32>
    %c101 = arith.constant 101 : index
    %1214 = memref.load %arg2[%c101] : memref<128xf32, #tpu.memory_space<smem>>
    %1215 = vector.broadcast %1214 : f32 to vector<8x128xf32>
    %1216 = arith.mulf %0, %1215 : vector<8x128xf32>
    %c101_305 = arith.constant 101 : index
    %1217 = memref.load %arg3[%c101_305] : memref<128xf32, #tpu.memory_space<smem>>
    %1218 = vector.broadcast %1217 : f32 to vector<8x128xf32>
    %1219 = arith.addf %1216, %1218 : vector<8x128xf32>
    %cst_306 = arith.constant 0.000000e+00 : f32
    %1220 = vector.broadcast %cst_306 : f32 to vector<8x128xf32>
    %1221 = arith.maximumf %1219, %1220 : vector<8x128xf32>
    %c101_307 = arith.constant 101 : index
    %1222 = memref.load %arg4[%c101_307] : memref<128xf32, #tpu.memory_space<smem>>
    %1223 = vector.broadcast %1222 : f32 to vector<8x128xf32>
    %1224 = arith.mulf %1221, %1223 : vector<8x128xf32>
    %1225 = arith.addf %1213, %1224 : vector<8x128xf32>
    %c102 = arith.constant 102 : index
    %1226 = memref.load %arg2[%c102] : memref<128xf32, #tpu.memory_space<smem>>
    %1227 = vector.broadcast %1226 : f32 to vector<8x128xf32>
    %1228 = arith.mulf %0, %1227 : vector<8x128xf32>
    %c102_308 = arith.constant 102 : index
    %1229 = memref.load %arg3[%c102_308] : memref<128xf32, #tpu.memory_space<smem>>
    %1230 = vector.broadcast %1229 : f32 to vector<8x128xf32>
    %1231 = arith.addf %1228, %1230 : vector<8x128xf32>
    %cst_309 = arith.constant 0.000000e+00 : f32
    %1232 = vector.broadcast %cst_309 : f32 to vector<8x128xf32>
    %1233 = arith.maximumf %1231, %1232 : vector<8x128xf32>
    %c102_310 = arith.constant 102 : index
    %1234 = memref.load %arg4[%c102_310] : memref<128xf32, #tpu.memory_space<smem>>
    %1235 = vector.broadcast %1234 : f32 to vector<8x128xf32>
    %1236 = arith.mulf %1233, %1235 : vector<8x128xf32>
    %1237 = arith.addf %1225, %1236 : vector<8x128xf32>
    %c103 = arith.constant 103 : index
    %1238 = memref.load %arg2[%c103] : memref<128xf32, #tpu.memory_space<smem>>
    %1239 = vector.broadcast %1238 : f32 to vector<8x128xf32>
    %1240 = arith.mulf %0, %1239 : vector<8x128xf32>
    %c103_311 = arith.constant 103 : index
    %1241 = memref.load %arg3[%c103_311] : memref<128xf32, #tpu.memory_space<smem>>
    %1242 = vector.broadcast %1241 : f32 to vector<8x128xf32>
    %1243 = arith.addf %1240, %1242 : vector<8x128xf32>
    %cst_312 = arith.constant 0.000000e+00 : f32
    %1244 = vector.broadcast %cst_312 : f32 to vector<8x128xf32>
    %1245 = arith.maximumf %1243, %1244 : vector<8x128xf32>
    %c103_313 = arith.constant 103 : index
    %1246 = memref.load %arg4[%c103_313] : memref<128xf32, #tpu.memory_space<smem>>
    %1247 = vector.broadcast %1246 : f32 to vector<8x128xf32>
    %1248 = arith.mulf %1245, %1247 : vector<8x128xf32>
    %1249 = arith.addf %1237, %1248 : vector<8x128xf32>
    %c104 = arith.constant 104 : index
    %1250 = memref.load %arg2[%c104] : memref<128xf32, #tpu.memory_space<smem>>
    %1251 = vector.broadcast %1250 : f32 to vector<8x128xf32>
    %1252 = arith.mulf %0, %1251 : vector<8x128xf32>
    %c104_314 = arith.constant 104 : index
    %1253 = memref.load %arg3[%c104_314] : memref<128xf32, #tpu.memory_space<smem>>
    %1254 = vector.broadcast %1253 : f32 to vector<8x128xf32>
    %1255 = arith.addf %1252, %1254 : vector<8x128xf32>
    %cst_315 = arith.constant 0.000000e+00 : f32
    %1256 = vector.broadcast %cst_315 : f32 to vector<8x128xf32>
    %1257 = arith.maximumf %1255, %1256 : vector<8x128xf32>
    %c104_316 = arith.constant 104 : index
    %1258 = memref.load %arg4[%c104_316] : memref<128xf32, #tpu.memory_space<smem>>
    %1259 = vector.broadcast %1258 : f32 to vector<8x128xf32>
    %1260 = arith.mulf %1257, %1259 : vector<8x128xf32>
    %1261 = arith.addf %1249, %1260 : vector<8x128xf32>
    %c105 = arith.constant 105 : index
    %1262 = memref.load %arg2[%c105] : memref<128xf32, #tpu.memory_space<smem>>
    %1263 = vector.broadcast %1262 : f32 to vector<8x128xf32>
    %1264 = arith.mulf %0, %1263 : vector<8x128xf32>
    %c105_317 = arith.constant 105 : index
    %1265 = memref.load %arg3[%c105_317] : memref<128xf32, #tpu.memory_space<smem>>
    %1266 = vector.broadcast %1265 : f32 to vector<8x128xf32>
    %1267 = arith.addf %1264, %1266 : vector<8x128xf32>
    %cst_318 = arith.constant 0.000000e+00 : f32
    %1268 = vector.broadcast %cst_318 : f32 to vector<8x128xf32>
    %1269 = arith.maximumf %1267, %1268 : vector<8x128xf32>
    %c105_319 = arith.constant 105 : index
    %1270 = memref.load %arg4[%c105_319] : memref<128xf32, #tpu.memory_space<smem>>
    %1271 = vector.broadcast %1270 : f32 to vector<8x128xf32>
    %1272 = arith.mulf %1269, %1271 : vector<8x128xf32>
    %1273 = arith.addf %1261, %1272 : vector<8x128xf32>
    %c106 = arith.constant 106 : index
    %1274 = memref.load %arg2[%c106] : memref<128xf32, #tpu.memory_space<smem>>
    %1275 = vector.broadcast %1274 : f32 to vector<8x128xf32>
    %1276 = arith.mulf %0, %1275 : vector<8x128xf32>
    %c106_320 = arith.constant 106 : index
    %1277 = memref.load %arg3[%c106_320] : memref<128xf32, #tpu.memory_space<smem>>
    %1278 = vector.broadcast %1277 : f32 to vector<8x128xf32>
    %1279 = arith.addf %1276, %1278 : vector<8x128xf32>
    %cst_321 = arith.constant 0.000000e+00 : f32
    %1280 = vector.broadcast %cst_321 : f32 to vector<8x128xf32>
    %1281 = arith.maximumf %1279, %1280 : vector<8x128xf32>
    %c106_322 = arith.constant 106 : index
    %1282 = memref.load %arg4[%c106_322] : memref<128xf32, #tpu.memory_space<smem>>
    %1283 = vector.broadcast %1282 : f32 to vector<8x128xf32>
    %1284 = arith.mulf %1281, %1283 : vector<8x128xf32>
    %1285 = arith.addf %1273, %1284 : vector<8x128xf32>
    %c107 = arith.constant 107 : index
    %1286 = memref.load %arg2[%c107] : memref<128xf32, #tpu.memory_space<smem>>
    %1287 = vector.broadcast %1286 : f32 to vector<8x128xf32>
    %1288 = arith.mulf %0, %1287 : vector<8x128xf32>
    %c107_323 = arith.constant 107 : index
    %1289 = memref.load %arg3[%c107_323] : memref<128xf32, #tpu.memory_space<smem>>
    %1290 = vector.broadcast %1289 : f32 to vector<8x128xf32>
    %1291 = arith.addf %1288, %1290 : vector<8x128xf32>
    %cst_324 = arith.constant 0.000000e+00 : f32
    %1292 = vector.broadcast %cst_324 : f32 to vector<8x128xf32>
    %1293 = arith.maximumf %1291, %1292 : vector<8x128xf32>
    %c107_325 = arith.constant 107 : index
    %1294 = memref.load %arg4[%c107_325] : memref<128xf32, #tpu.memory_space<smem>>
    %1295 = vector.broadcast %1294 : f32 to vector<8x128xf32>
    %1296 = arith.mulf %1293, %1295 : vector<8x128xf32>
    %1297 = arith.addf %1285, %1296 : vector<8x128xf32>
    %c108 = arith.constant 108 : index
    %1298 = memref.load %arg2[%c108] : memref<128xf32, #tpu.memory_space<smem>>
    %1299 = vector.broadcast %1298 : f32 to vector<8x128xf32>
    %1300 = arith.mulf %0, %1299 : vector<8x128xf32>
    %c108_326 = arith.constant 108 : index
    %1301 = memref.load %arg3[%c108_326] : memref<128xf32, #tpu.memory_space<smem>>
    %1302 = vector.broadcast %1301 : f32 to vector<8x128xf32>
    %1303 = arith.addf %1300, %1302 : vector<8x128xf32>
    %cst_327 = arith.constant 0.000000e+00 : f32
    %1304 = vector.broadcast %cst_327 : f32 to vector<8x128xf32>
    %1305 = arith.maximumf %1303, %1304 : vector<8x128xf32>
    %c108_328 = arith.constant 108 : index
    %1306 = memref.load %arg4[%c108_328] : memref<128xf32, #tpu.memory_space<smem>>
    %1307 = vector.broadcast %1306 : f32 to vector<8x128xf32>
    %1308 = arith.mulf %1305, %1307 : vector<8x128xf32>
    %1309 = arith.addf %1297, %1308 : vector<8x128xf32>
    %c109 = arith.constant 109 : index
    %1310 = memref.load %arg2[%c109] : memref<128xf32, #tpu.memory_space<smem>>
    %1311 = vector.broadcast %1310 : f32 to vector<8x128xf32>
    %1312 = arith.mulf %0, %1311 : vector<8x128xf32>
    %c109_329 = arith.constant 109 : index
    %1313 = memref.load %arg3[%c109_329] : memref<128xf32, #tpu.memory_space<smem>>
    %1314 = vector.broadcast %1313 : f32 to vector<8x128xf32>
    %1315 = arith.addf %1312, %1314 : vector<8x128xf32>
    %cst_330 = arith.constant 0.000000e+00 : f32
    %1316 = vector.broadcast %cst_330 : f32 to vector<8x128xf32>
    %1317 = arith.maximumf %1315, %1316 : vector<8x128xf32>
    %c109_331 = arith.constant 109 : index
    %1318 = memref.load %arg4[%c109_331] : memref<128xf32, #tpu.memory_space<smem>>
    %1319 = vector.broadcast %1318 : f32 to vector<8x128xf32>
    %1320 = arith.mulf %1317, %1319 : vector<8x128xf32>
    %1321 = arith.addf %1309, %1320 : vector<8x128xf32>
    %c110 = arith.constant 110 : index
    %1322 = memref.load %arg2[%c110] : memref<128xf32, #tpu.memory_space<smem>>
    %1323 = vector.broadcast %1322 : f32 to vector<8x128xf32>
    %1324 = arith.mulf %0, %1323 : vector<8x128xf32>
    %c110_332 = arith.constant 110 : index
    %1325 = memref.load %arg3[%c110_332] : memref<128xf32, #tpu.memory_space<smem>>
    %1326 = vector.broadcast %1325 : f32 to vector<8x128xf32>
    %1327 = arith.addf %1324, %1326 : vector<8x128xf32>
    %cst_333 = arith.constant 0.000000e+00 : f32
    %1328 = vector.broadcast %cst_333 : f32 to vector<8x128xf32>
    %1329 = arith.maximumf %1327, %1328 : vector<8x128xf32>
    %c110_334 = arith.constant 110 : index
    %1330 = memref.load %arg4[%c110_334] : memref<128xf32, #tpu.memory_space<smem>>
    %1331 = vector.broadcast %1330 : f32 to vector<8x128xf32>
    %1332 = arith.mulf %1329, %1331 : vector<8x128xf32>
    %1333 = arith.addf %1321, %1332 : vector<8x128xf32>
    %c111 = arith.constant 111 : index
    %1334 = memref.load %arg2[%c111] : memref<128xf32, #tpu.memory_space<smem>>
    %1335 = vector.broadcast %1334 : f32 to vector<8x128xf32>
    %1336 = arith.mulf %0, %1335 : vector<8x128xf32>
    %c111_335 = arith.constant 111 : index
    %1337 = memref.load %arg3[%c111_335] : memref<128xf32, #tpu.memory_space<smem>>
    %1338 = vector.broadcast %1337 : f32 to vector<8x128xf32>
    %1339 = arith.addf %1336, %1338 : vector<8x128xf32>
    %cst_336 = arith.constant 0.000000e+00 : f32
    %1340 = vector.broadcast %cst_336 : f32 to vector<8x128xf32>
    %1341 = arith.maximumf %1339, %1340 : vector<8x128xf32>
    %c111_337 = arith.constant 111 : index
    %1342 = memref.load %arg4[%c111_337] : memref<128xf32, #tpu.memory_space<smem>>
    %1343 = vector.broadcast %1342 : f32 to vector<8x128xf32>
    %1344 = arith.mulf %1341, %1343 : vector<8x128xf32>
    %1345 = arith.addf %1333, %1344 : vector<8x128xf32>
    %c112 = arith.constant 112 : index
    %1346 = memref.load %arg2[%c112] : memref<128xf32, #tpu.memory_space<smem>>
    %1347 = vector.broadcast %1346 : f32 to vector<8x128xf32>
    %1348 = arith.mulf %0, %1347 : vector<8x128xf32>
    %c112_338 = arith.constant 112 : index
    %1349 = memref.load %arg3[%c112_338] : memref<128xf32, #tpu.memory_space<smem>>
    %1350 = vector.broadcast %1349 : f32 to vector<8x128xf32>
    %1351 = arith.addf %1348, %1350 : vector<8x128xf32>
    %cst_339 = arith.constant 0.000000e+00 : f32
    %1352 = vector.broadcast %cst_339 : f32 to vector<8x128xf32>
    %1353 = arith.maximumf %1351, %1352 : vector<8x128xf32>
    %c112_340 = arith.constant 112 : index
    %1354 = memref.load %arg4[%c112_340] : memref<128xf32, #tpu.memory_space<smem>>
    %1355 = vector.broadcast %1354 : f32 to vector<8x128xf32>
    %1356 = arith.mulf %1353, %1355 : vector<8x128xf32>
    %1357 = arith.addf %1345, %1356 : vector<8x128xf32>
    %c113 = arith.constant 113 : index
    %1358 = memref.load %arg2[%c113] : memref<128xf32, #tpu.memory_space<smem>>
    %1359 = vector.broadcast %1358 : f32 to vector<8x128xf32>
    %1360 = arith.mulf %0, %1359 : vector<8x128xf32>
    %c113_341 = arith.constant 113 : index
    %1361 = memref.load %arg3[%c113_341] : memref<128xf32, #tpu.memory_space<smem>>
    %1362 = vector.broadcast %1361 : f32 to vector<8x128xf32>
    %1363 = arith.addf %1360, %1362 : vector<8x128xf32>
    %cst_342 = arith.constant 0.000000e+00 : f32
    %1364 = vector.broadcast %cst_342 : f32 to vector<8x128xf32>
    %1365 = arith.maximumf %1363, %1364 : vector<8x128xf32>
    %c113_343 = arith.constant 113 : index
    %1366 = memref.load %arg4[%c113_343] : memref<128xf32, #tpu.memory_space<smem>>
    %1367 = vector.broadcast %1366 : f32 to vector<8x128xf32>
    %1368 = arith.mulf %1365, %1367 : vector<8x128xf32>
    %1369 = arith.addf %1357, %1368 : vector<8x128xf32>
    %c114 = arith.constant 114 : index
    %1370 = memref.load %arg2[%c114] : memref<128xf32, #tpu.memory_space<smem>>
    %1371 = vector.broadcast %1370 : f32 to vector<8x128xf32>
    %1372 = arith.mulf %0, %1371 : vector<8x128xf32>
    %c114_344 = arith.constant 114 : index
    %1373 = memref.load %arg3[%c114_344] : memref<128xf32, #tpu.memory_space<smem>>
    %1374 = vector.broadcast %1373 : f32 to vector<8x128xf32>
    %1375 = arith.addf %1372, %1374 : vector<8x128xf32>
    %cst_345 = arith.constant 0.000000e+00 : f32
    %1376 = vector.broadcast %cst_345 : f32 to vector<8x128xf32>
    %1377 = arith.maximumf %1375, %1376 : vector<8x128xf32>
    %c114_346 = arith.constant 114 : index
    %1378 = memref.load %arg4[%c114_346] : memref<128xf32, #tpu.memory_space<smem>>
    %1379 = vector.broadcast %1378 : f32 to vector<8x128xf32>
    %1380 = arith.mulf %1377, %1379 : vector<8x128xf32>
    %1381 = arith.addf %1369, %1380 : vector<8x128xf32>
    %c115 = arith.constant 115 : index
    %1382 = memref.load %arg2[%c115] : memref<128xf32, #tpu.memory_space<smem>>
    %1383 = vector.broadcast %1382 : f32 to vector<8x128xf32>
    %1384 = arith.mulf %0, %1383 : vector<8x128xf32>
    %c115_347 = arith.constant 115 : index
    %1385 = memref.load %arg3[%c115_347] : memref<128xf32, #tpu.memory_space<smem>>
    %1386 = vector.broadcast %1385 : f32 to vector<8x128xf32>
    %1387 = arith.addf %1384, %1386 : vector<8x128xf32>
    %cst_348 = arith.constant 0.000000e+00 : f32
    %1388 = vector.broadcast %cst_348 : f32 to vector<8x128xf32>
    %1389 = arith.maximumf %1387, %1388 : vector<8x128xf32>
    %c115_349 = arith.constant 115 : index
    %1390 = memref.load %arg4[%c115_349] : memref<128xf32, #tpu.memory_space<smem>>
    %1391 = vector.broadcast %1390 : f32 to vector<8x128xf32>
    %1392 = arith.mulf %1389, %1391 : vector<8x128xf32>
    %1393 = arith.addf %1381, %1392 : vector<8x128xf32>
    %c116 = arith.constant 116 : index
    %1394 = memref.load %arg2[%c116] : memref<128xf32, #tpu.memory_space<smem>>
    %1395 = vector.broadcast %1394 : f32 to vector<8x128xf32>
    %1396 = arith.mulf %0, %1395 : vector<8x128xf32>
    %c116_350 = arith.constant 116 : index
    %1397 = memref.load %arg3[%c116_350] : memref<128xf32, #tpu.memory_space<smem>>
    %1398 = vector.broadcast %1397 : f32 to vector<8x128xf32>
    %1399 = arith.addf %1396, %1398 : vector<8x128xf32>
    %cst_351 = arith.constant 0.000000e+00 : f32
    %1400 = vector.broadcast %cst_351 : f32 to vector<8x128xf32>
    %1401 = arith.maximumf %1399, %1400 : vector<8x128xf32>
    %c116_352 = arith.constant 116 : index
    %1402 = memref.load %arg4[%c116_352] : memref<128xf32, #tpu.memory_space<smem>>
    %1403 = vector.broadcast %1402 : f32 to vector<8x128xf32>
    %1404 = arith.mulf %1401, %1403 : vector<8x128xf32>
    %1405 = arith.addf %1393, %1404 : vector<8x128xf32>
    %c117 = arith.constant 117 : index
    %1406 = memref.load %arg2[%c117] : memref<128xf32, #tpu.memory_space<smem>>
    %1407 = vector.broadcast %1406 : f32 to vector<8x128xf32>
    %1408 = arith.mulf %0, %1407 : vector<8x128xf32>
    %c117_353 = arith.constant 117 : index
    %1409 = memref.load %arg3[%c117_353] : memref<128xf32, #tpu.memory_space<smem>>
    %1410 = vector.broadcast %1409 : f32 to vector<8x128xf32>
    %1411 = arith.addf %1408, %1410 : vector<8x128xf32>
    %cst_354 = arith.constant 0.000000e+00 : f32
    %1412 = vector.broadcast %cst_354 : f32 to vector<8x128xf32>
    %1413 = arith.maximumf %1411, %1412 : vector<8x128xf32>
    %c117_355 = arith.constant 117 : index
    %1414 = memref.load %arg4[%c117_355] : memref<128xf32, #tpu.memory_space<smem>>
    %1415 = vector.broadcast %1414 : f32 to vector<8x128xf32>
    %1416 = arith.mulf %1413, %1415 : vector<8x128xf32>
    %1417 = arith.addf %1405, %1416 : vector<8x128xf32>
    %c118 = arith.constant 118 : index
    %1418 = memref.load %arg2[%c118] : memref<128xf32, #tpu.memory_space<smem>>
    %1419 = vector.broadcast %1418 : f32 to vector<8x128xf32>
    %1420 = arith.mulf %0, %1419 : vector<8x128xf32>
    %c118_356 = arith.constant 118 : index
    %1421 = memref.load %arg3[%c118_356] : memref<128xf32, #tpu.memory_space<smem>>
    %1422 = vector.broadcast %1421 : f32 to vector<8x128xf32>
    %1423 = arith.addf %1420, %1422 : vector<8x128xf32>
    %cst_357 = arith.constant 0.000000e+00 : f32
    %1424 = vector.broadcast %cst_357 : f32 to vector<8x128xf32>
    %1425 = arith.maximumf %1423, %1424 : vector<8x128xf32>
    %c118_358 = arith.constant 118 : index
    %1426 = memref.load %arg4[%c118_358] : memref<128xf32, #tpu.memory_space<smem>>
    %1427 = vector.broadcast %1426 : f32 to vector<8x128xf32>
    %1428 = arith.mulf %1425, %1427 : vector<8x128xf32>
    %1429 = arith.addf %1417, %1428 : vector<8x128xf32>
    %c119 = arith.constant 119 : index
    %1430 = memref.load %arg2[%c119] : memref<128xf32, #tpu.memory_space<smem>>
    %1431 = vector.broadcast %1430 : f32 to vector<8x128xf32>
    %1432 = arith.mulf %0, %1431 : vector<8x128xf32>
    %c119_359 = arith.constant 119 : index
    %1433 = memref.load %arg3[%c119_359] : memref<128xf32, #tpu.memory_space<smem>>
    %1434 = vector.broadcast %1433 : f32 to vector<8x128xf32>
    %1435 = arith.addf %1432, %1434 : vector<8x128xf32>
    %cst_360 = arith.constant 0.000000e+00 : f32
    %1436 = vector.broadcast %cst_360 : f32 to vector<8x128xf32>
    %1437 = arith.maximumf %1435, %1436 : vector<8x128xf32>
    %c119_361 = arith.constant 119 : index
    %1438 = memref.load %arg4[%c119_361] : memref<128xf32, #tpu.memory_space<smem>>
    %1439 = vector.broadcast %1438 : f32 to vector<8x128xf32>
    %1440 = arith.mulf %1437, %1439 : vector<8x128xf32>
    %1441 = arith.addf %1429, %1440 : vector<8x128xf32>
    %c120 = arith.constant 120 : index
    %1442 = memref.load %arg2[%c120] : memref<128xf32, #tpu.memory_space<smem>>
    %1443 = vector.broadcast %1442 : f32 to vector<8x128xf32>
    %1444 = arith.mulf %0, %1443 : vector<8x128xf32>
    %c120_362 = arith.constant 120 : index
    %1445 = memref.load %arg3[%c120_362] : memref<128xf32, #tpu.memory_space<smem>>
    %1446 = vector.broadcast %1445 : f32 to vector<8x128xf32>
    %1447 = arith.addf %1444, %1446 : vector<8x128xf32>
    %cst_363 = arith.constant 0.000000e+00 : f32
    %1448 = vector.broadcast %cst_363 : f32 to vector<8x128xf32>
    %1449 = arith.maximumf %1447, %1448 : vector<8x128xf32>
    %c120_364 = arith.constant 120 : index
    %1450 = memref.load %arg4[%c120_364] : memref<128xf32, #tpu.memory_space<smem>>
    %1451 = vector.broadcast %1450 : f32 to vector<8x128xf32>
    %1452 = arith.mulf %1449, %1451 : vector<8x128xf32>
    %1453 = arith.addf %1441, %1452 : vector<8x128xf32>
    %c121 = arith.constant 121 : index
    %1454 = memref.load %arg2[%c121] : memref<128xf32, #tpu.memory_space<smem>>
    %1455 = vector.broadcast %1454 : f32 to vector<8x128xf32>
    %1456 = arith.mulf %0, %1455 : vector<8x128xf32>
    %c121_365 = arith.constant 121 : index
    %1457 = memref.load %arg3[%c121_365] : memref<128xf32, #tpu.memory_space<smem>>
    %1458 = vector.broadcast %1457 : f32 to vector<8x128xf32>
    %1459 = arith.addf %1456, %1458 : vector<8x128xf32>
    %cst_366 = arith.constant 0.000000e+00 : f32
    %1460 = vector.broadcast %cst_366 : f32 to vector<8x128xf32>
    %1461 = arith.maximumf %1459, %1460 : vector<8x128xf32>
    %c121_367 = arith.constant 121 : index
    %1462 = memref.load %arg4[%c121_367] : memref<128xf32, #tpu.memory_space<smem>>
    %1463 = vector.broadcast %1462 : f32 to vector<8x128xf32>
    %1464 = arith.mulf %1461, %1463 : vector<8x128xf32>
    %1465 = arith.addf %1453, %1464 : vector<8x128xf32>
    %c122 = arith.constant 122 : index
    %1466 = memref.load %arg2[%c122] : memref<128xf32, #tpu.memory_space<smem>>
    %1467 = vector.broadcast %1466 : f32 to vector<8x128xf32>
    %1468 = arith.mulf %0, %1467 : vector<8x128xf32>
    %c122_368 = arith.constant 122 : index
    %1469 = memref.load %arg3[%c122_368] : memref<128xf32, #tpu.memory_space<smem>>
    %1470 = vector.broadcast %1469 : f32 to vector<8x128xf32>
    %1471 = arith.addf %1468, %1470 : vector<8x128xf32>
    %cst_369 = arith.constant 0.000000e+00 : f32
    %1472 = vector.broadcast %cst_369 : f32 to vector<8x128xf32>
    %1473 = arith.maximumf %1471, %1472 : vector<8x128xf32>
    %c122_370 = arith.constant 122 : index
    %1474 = memref.load %arg4[%c122_370] : memref<128xf32, #tpu.memory_space<smem>>
    %1475 = vector.broadcast %1474 : f32 to vector<8x128xf32>
    %1476 = arith.mulf %1473, %1475 : vector<8x128xf32>
    %1477 = arith.addf %1465, %1476 : vector<8x128xf32>
    %c123 = arith.constant 123 : index
    %1478 = memref.load %arg2[%c123] : memref<128xf32, #tpu.memory_space<smem>>
    %1479 = vector.broadcast %1478 : f32 to vector<8x128xf32>
    %1480 = arith.mulf %0, %1479 : vector<8x128xf32>
    %c123_371 = arith.constant 123 : index
    %1481 = memref.load %arg3[%c123_371] : memref<128xf32, #tpu.memory_space<smem>>
    %1482 = vector.broadcast %1481 : f32 to vector<8x128xf32>
    %1483 = arith.addf %1480, %1482 : vector<8x128xf32>
    %cst_372 = arith.constant 0.000000e+00 : f32
    %1484 = vector.broadcast %cst_372 : f32 to vector<8x128xf32>
    %1485 = arith.maximumf %1483, %1484 : vector<8x128xf32>
    %c123_373 = arith.constant 123 : index
    %1486 = memref.load %arg4[%c123_373] : memref<128xf32, #tpu.memory_space<smem>>
    %1487 = vector.broadcast %1486 : f32 to vector<8x128xf32>
    %1488 = arith.mulf %1485, %1487 : vector<8x128xf32>
    %1489 = arith.addf %1477, %1488 : vector<8x128xf32>
    %c124 = arith.constant 124 : index
    %1490 = memref.load %arg2[%c124] : memref<128xf32, #tpu.memory_space<smem>>
    %1491 = vector.broadcast %1490 : f32 to vector<8x128xf32>
    %1492 = arith.mulf %0, %1491 : vector<8x128xf32>
    %c124_374 = arith.constant 124 : index
    %1493 = memref.load %arg3[%c124_374] : memref<128xf32, #tpu.memory_space<smem>>
    %1494 = vector.broadcast %1493 : f32 to vector<8x128xf32>
    %1495 = arith.addf %1492, %1494 : vector<8x128xf32>
    %cst_375 = arith.constant 0.000000e+00 : f32
    %1496 = vector.broadcast %cst_375 : f32 to vector<8x128xf32>
    %1497 = arith.maximumf %1495, %1496 : vector<8x128xf32>
    %c124_376 = arith.constant 124 : index
    %1498 = memref.load %arg4[%c124_376] : memref<128xf32, #tpu.memory_space<smem>>
    %1499 = vector.broadcast %1498 : f32 to vector<8x128xf32>
    %1500 = arith.mulf %1497, %1499 : vector<8x128xf32>
    %1501 = arith.addf %1489, %1500 : vector<8x128xf32>
    %c125 = arith.constant 125 : index
    %1502 = memref.load %arg2[%c125] : memref<128xf32, #tpu.memory_space<smem>>
    %1503 = vector.broadcast %1502 : f32 to vector<8x128xf32>
    %1504 = arith.mulf %0, %1503 : vector<8x128xf32>
    %c125_377 = arith.constant 125 : index
    %1505 = memref.load %arg3[%c125_377] : memref<128xf32, #tpu.memory_space<smem>>
    %1506 = vector.broadcast %1505 : f32 to vector<8x128xf32>
    %1507 = arith.addf %1504, %1506 : vector<8x128xf32>
    %cst_378 = arith.constant 0.000000e+00 : f32
    %1508 = vector.broadcast %cst_378 : f32 to vector<8x128xf32>
    %1509 = arith.maximumf %1507, %1508 : vector<8x128xf32>
    %c125_379 = arith.constant 125 : index
    %1510 = memref.load %arg4[%c125_379] : memref<128xf32, #tpu.memory_space<smem>>
    %1511 = vector.broadcast %1510 : f32 to vector<8x128xf32>
    %1512 = arith.mulf %1509, %1511 : vector<8x128xf32>
    %1513 = arith.addf %1501, %1512 : vector<8x128xf32>
    %c126 = arith.constant 126 : index
    %1514 = memref.load %arg2[%c126] : memref<128xf32, #tpu.memory_space<smem>>
    %1515 = vector.broadcast %1514 : f32 to vector<8x128xf32>
    %1516 = arith.mulf %0, %1515 : vector<8x128xf32>
    %c126_380 = arith.constant 126 : index
    %1517 = memref.load %arg3[%c126_380] : memref<128xf32, #tpu.memory_space<smem>>
    %1518 = vector.broadcast %1517 : f32 to vector<8x128xf32>
    %1519 = arith.addf %1516, %1518 : vector<8x128xf32>
    %cst_381 = arith.constant 0.000000e+00 : f32
    %1520 = vector.broadcast %cst_381 : f32 to vector<8x128xf32>
    %1521 = arith.maximumf %1519, %1520 : vector<8x128xf32>
    %c126_382 = arith.constant 126 : index
    %1522 = memref.load %arg4[%c126_382] : memref<128xf32, #tpu.memory_space<smem>>
    %1523 = vector.broadcast %1522 : f32 to vector<8x128xf32>
    %1524 = arith.mulf %1521, %1523 : vector<8x128xf32>
    %1525 = arith.addf %1513, %1524 : vector<8x128xf32>
    %c127 = arith.constant 127 : index
    %1526 = memref.load %arg2[%c127] : memref<128xf32, #tpu.memory_space<smem>>
    %1527 = vector.broadcast %1526 : f32 to vector<8x128xf32>
    %1528 = arith.mulf %0, %1527 : vector<8x128xf32>
    %c127_383 = arith.constant 127 : index
    %1529 = memref.load %arg3[%c127_383] : memref<128xf32, #tpu.memory_space<smem>>
    %1530 = vector.broadcast %1529 : f32 to vector<8x128xf32>
    %1531 = arith.addf %1528, %1530 : vector<8x128xf32>
    %cst_384 = arith.constant 0.000000e+00 : f32
    %1532 = vector.broadcast %cst_384 : f32 to vector<8x128xf32>
    %1533 = arith.maximumf %1531, %1532 : vector<8x128xf32>
    %c127_385 = arith.constant 127 : index
    %1534 = memref.load %arg4[%c127_385] : memref<128xf32, #tpu.memory_space<smem>>
    %1535 = vector.broadcast %1534 : f32 to vector<8x128xf32>
    %1536 = arith.mulf %1533, %1535 : vector<8x128xf32>
    %1537 = arith.addf %1525, %1536 : vector<8x128xf32>
    %c0_386 = arith.constant 0 : index
    %1538 = memref.load %arg5[%c0_386] : memref<1xf32, #tpu.memory_space<smem>>
    %1539 = vector.broadcast %1538 : f32 to vector<8x128xf32>
    %1540 = arith.addf %1537, %1539 : vector<8x128xf32>
    %c0_387 = arith.constant 0 : index
    %c0_388 = arith.constant 0 : index
    %1541 = vector.load %arg6[%c0_387, %c0_388] : memref<8x128xf32, #tpu.memory_space<vmem>>, vector<8x128xf32>
    tpu.vector_store %arg6[%c0_387, %c0_388], %1540 {strides = array<i32>} : memref<8x128xf32, #tpu.memory_space<vmem>>, vector<8x128xf32>,
    return
  }
  func.func @transform_0(%arg0: i32) -> (i32, i32) {
    %c0_i32 = arith.constant 0 : i32
    %c0_i32_0 = arith.constant 0 : i32
    return %arg0, %c0_i32 : i32, i32
  }
  func.func @transform_1(%arg0: i32) -> i32 {
    %c0_i32 = arith.constant 0 : i32
    %c0_i32_0 = arith.constant 0 : i32
    return %c0_i32 : i32
  }
  func.func @transform_2(%arg0: i32) -> i32 {
    %c0_i32 = arith.constant 0 : i32
    %c0_i32_0 = arith.constant 0 : i32
    return %c0_i32 : i32
  }
  func.func @transform_3(%arg0: i32) -> i32 {
    %c0_i32 = arith.constant 0 : i32
    %c0_i32_0 = arith.constant 0 : i32
    return %c0_i32 : i32
  }
  func.func @transform_4(%arg0: i32) -> i32 {
    %c0_i32 = arith.constant 0 : i32
    %c0_i32_0 = arith.constant 0 : i32
    return %c0_i32 : i32
  }
  func.func @transform_5(%arg0: i32) -> (i32, i32) {
    %c0_i32 = arith.constant 0 : i32
    %c0_i32_0 = arith.constant 0 : i32
    return %arg0, %c0_i32 : i32, i32
  }
}

</mosaic_0001>

<llo_original>
// kernel: tpu_custom_call.1
$region0: #{tpu_custom_call.1}
  #allocation0 [shape = 'u32[]', space=smem, size = 0x4, offset = 0x4, fixed_abs, tag = 'smem constant byte address 0x4 - core index']
  #allocation1 [shape = 'u32[144,128]{1,0:T(1,128)}', space=vmem, size = 0x12000, scoped, tag = 'internal scratch']
  #allocation2 [shape = 'f32[1]{0:T(128)S(6)}', space=smem, size = 0x200, scoped, tag = 'scoped memory for tpu_custom_call.1']
  %s0 = inlined_call_operand.hbm [shape: f32[8,128], index: 0, kind: input, shape index: {}]
  %s1 = inlined_call_operand.vmem [shape: f32[128], index: 1, kind: input, shape index: {}]
  %s2 = inlined_call_operand.vmem [shape: f32[128], index: 2, kind: input, shape index: {}]
  %s3 = inlined_call_operand.vmem [shape: f32[128], index: 3, kind: input, shape index: {}]
  %s4 = inlined_call_operand.<no memory space> [shape: f32[1], index: 4, kind: input, shape index: {}]
  %s5 = inlined_call_operand.hbm [shape: f32[8,128], index: 5, kind: output, shape index: {}]
  %s6 = sld [smem:[#allocation0]]
  $region46: #{tpu_custom_call.1} parent=0
    _
  %s8 = ssub.s32 1, %s6
  %s9 = scalar_select 0, %s8, %s6
  %10 = sst [smem:[#allocation2]] %s4
  $region1: #{tpu_custom_call.1} parent=0
    #allocation3 [shape = 'u8[4096]{0}', space=vmem, size = 0x1000, scoped, tag = 'input window, operand 0, single buffered']
    #allocation4 [shape = 's32[1]{0}', space=sflag, size = 0x4, scoped, tag = 'scoped memory for tpu_custom_call.1']
    #allocation5 [shape = 's32[1]{0}', space=sflag, size = 0x4, scoped, tag = 'scoped memory for tpu_custom_call.1']
    #allocation6 [shape = 's32[1]{0}', space=sflag, size = 0x4, scoped, tag = 'scoped memory for tpu_custom_call.1']
    #allocation7 [shape = 'u8[512]{0}', space=smem, size = 0x200, scoped, tag = 'input window, operand 1, single buffered']
    #allocation8 [shape = 'u8[512]{0}', space=smem, size = 0x200, scoped, tag = 'input window, operand 2, single buffered']
    #allocation9 [shape = 's32[1]{0}', space=sflag, size = 0x4, scoped, tag = 'scoped memory for tpu_custom_call.1']
    #allocation10 [shape = 'u8[512]{0}', space=smem, size = 0x200, scoped, tag = 'input window, operand 3, single buffered']
    #allocation11 [shape = 'u8[4096]{0}', space=vmem, size = 0x1000, scoped, tag = 'output window, operand 0, single buffered']
    %11 = vsyncpa [#allocation4], 0
    %12 = vsyncpa [#allocation6], 0
    %13 = vsyncpa [#allocation9], 0
    %14 = vsyncpa [#allocation5], 0
    // Predicated region
    $region2: #{tpu_custom_call.1} parent=1 // pred_check
      _
    $region3: #{tpu_custom_call.1} parent=1 // pred_check_branch
      %16 = sbr.rel (0) target = $region5
    $region4: #{tpu_custom_call.1} parent=1 // pred_region
      %s18 = ssub.s32 128, 128
      %19 = vsyncadd [#allocation4], %s18
      %s21 = sshll.u32 [#allocation3], 4
      %s22 = int_to_ptr.vmem [resolvable:$true] %s21
      %24 = dma.hbm_to_vmem [thread:$0]  %s0, 128, %s22, [#allocation4]
    $region5: #{tpu_custom_call.1} parent=1 // pred_fallthru
      _
    // Predicated region
    $region6: #{tpu_custom_call.1} parent=1 // pred_check
      _
    $region7: #{tpu_custom_call.1} parent=1 // pred_check_branch
      %26 = sbr.rel (0) target = $region9
    $region8: #{tpu_custom_call.1} parent=1 // pred_region
      %s28 = ssub.s32 16, 16
      %29 = vsyncadd [#allocation6], %s28
      %s31 = sshll.u32 %s1, 4
      %s32 = int_to_ptr.vmem [resolvable:$true] %s31
      %34 = dma.vmem_to_smem %s32, 16, [#allocation7], [#allocation6]
    $region9: #{tpu_custom_call.1} parent=1 // pred_fallthru
      _
    // Predicated region
    $region10: #{tpu_custom_call.1} parent=1 // pred_check
      _
    $region11: #{tpu_custom_call.1} parent=1 // pred_check_branch
      %36 = sbr.rel (0) target = $region13
    $region12: #{tpu_custom_call.1} parent=1 // pred_region
      %s38 = ssub.s32 16, 16
      %39 = vsyncadd [#allocation9], %s38
      %s41 = sshll.u32 %s2, 4
      %s42 = int_to_ptr.vmem [resolvable:$true] %s41
      %44 = dma.vmem_to_smem %s42, 16, [#allocation8], [#allocation9]
    $region13: #{tpu_custom_call.1} parent=1 // pred_fallthru
      _
    // Predicated region
    $region14: #{tpu_custom_call.1} parent=1 // pred_check
      _
    $region15: #{tpu_custom_call.1} parent=1 // pred_check_branch
      %46 = sbr.rel (0) target = $region17
    $region16: #{tpu_custom_call.1} parent=1 // pred_region
      %s48 = ssub.s32 16, 16
      %49 = vsyncadd [#allocation9], %s48
      %s51 = sshll.u32 %s3, 4
      %s52 = int_to_ptr.vmem [resolvable:$true] %s51
      %54 = dma.vmem_to_smem %s52, 16, [#allocation10], [#allocation9]
    $region17: #{tpu_custom_call.1} parent=1 // pred_fallthru
      _
    // Predicated region
    $region18: #{tpu_custom_call.1} parent=1 // pred_check
      _
    $region19: #{tpu_custom_call.1} parent=1 // pred_check_branch
      %56 = sbr.rel (0) target = $region21
    $region20: #{tpu_custom_call.1} parent=1 // pred_region
      _
    $region21: #{tpu_custom_call.1} parent=1 // pred_fallthru
      _
    // Predicated region
    $region22: #{tpu_custom_call.1} parent=1 // pred_check
      _
    $region23: #{tpu_custom_call.1} parent=1 // pred_check_branch
      %58 = sbr.rel (0) target = $region25
    $region24: #{tpu_custom_call.1} parent=1 // pred_region
      %59 = dma.done [#allocation4], 128
    $region25: #{tpu_custom_call.1} parent=1 // pred_fallthru
      _
    // Predicated region
    $region26: #{tpu_custom_call.1} parent=1 // pred_check
      _
    $region27: #{tpu_custom_call.1} parent=1 // pred_check_branch
      %61 = sbr.rel (0) target = $region29
    $region28: #{tpu_custom_call.1} parent=1 // pred_region
      %62 = dma.done [#allocation6], 16
    $region29: #{tpu_custom_call.1} parent=1 // pred_fallthru
      _
    // Predicated region
    $region30: #{tpu_custom_call.1} parent=1 // pred_check
      _
    $region31: #{tpu_custom_call.1} parent=1 // pred_check_branch
      %64 = sbr.rel (0) target = $region33
    $region32: #{tpu_custom_call.1} parent=1 // pred_region
      %65 = dma.done [#allocation9], 16
    $region33: #{tpu_custom_call.1} parent=1 // pred_fallthru
      _
    // Predicated region
    $region34: #{tpu_custom_call.1} parent=1 // pred_check
      _
    $region35: #{tpu_custom_call.1} parent=1 // pred_check_branch
      %67 = sbr.rel (0) target = $region37
    $region36: #{tpu_custom_call.1} parent=1 // pred_region
      %68 = dma.done [#allocation9], 16
    $region37: #{tpu_custom_call.1} parent=1 // pred_fallthru
      _
    %69 = sfence
    %v70 = vld [vmem:[#allocation3] sm:$0xff]
    %s71 = sld [smem:[#allocation7]]
    %v72 = vstv %s71
    %v73 = vmul.f32 %v70, %v72
    %s74 = sld [smem:[#allocation8]]
    %v75 = vstv %s74
    %v76 = vadd.f32 %v73, %v75
    %v77 = vmax.f32 %v76, 0.0
    %s78 = sld [smem:[#allocation10]]
    %v79 = vstv %s78
    %v80 = vmul.f32 %v77, %v79
    %v81 = vadd.f32 %v80, 0.0
    %s82 = sld [smem:[#allocation7 + $0x1]]
    %v83 = vstv %s82
    %v84 = vmul.f32 %v70, %v83
    %s85 = sld [smem:[#allocation8 + $0x1]]
    %v86 = vstv %s85
    %v87 = vadd.f32 %v84, %v86
    %v88 = vmax.f32 %v87, 0.0
    %s89 = sld [smem:[#allocation10 + $0x1]]
    %v90 = vstv %s89
    %v91 = vmul.f32 %v88, %v90
    %v92 = vadd.f32 %v81, %v91
    %s93 = sld [smem:[#allocation7 + $0x2]]
    %v94 = vstv %s93
    %v95 = vmul.f32 %v70, %v94
    %s96 = sld [smem:[#allocation8 + $0x2]]
    %v97 = vstv %s96
    %v98 = vadd.f32 %v95, %v97
    %v99 = vmax.f32 %v98, 0.0
    %s100 = sld [smem:[#allocation10 + $0x2]]
    %v101 = vstv %s100
    %v102 = vmul.f32 %v99, %v101
    %v103 = vadd.f32 %v92, %v102
    %s104 = sld [smem:[#allocation7 + $0x3]]
    %v105 = vstv %s104
    %v106 = vmul.f32 %v70, %v105
    %s107 = sld [smem:[#allocation8 + $0x3]]
    %v108 = vstv %s107
    %v109 = vadd.f32 %v106, %v108
    %v110 = vmax.f32 %v109, 0.0
    %s111 = sld [smem:[#allocation10 + $0x3]]
    %v112 = vstv %s111
    %v113 = vmul.f32 %v110, %v112
    %v114 = vadd.f32 %v103, %v113
    %s115 = sld [smem:[#allocation7 + $0x4]]
    %v116 = vstv %s115
    %v117 = vmul.f32 %v70, %v116
    %s118 = sld [smem:[#allocation8 + $0x4]]
    %v119 = vstv %s118
    %v120 = vadd.f32 %v117, %v119
    %v121 = vmax.f32 %v120, 0.0
    %s122 = sld [smem:[#allocation10 + $0x4]]
    %v123 = vstv %s122
    %v124 = vmul.f32 %v121, %v123
    %v125 = vadd.f32 %v114, %v124
    %s126 = sld [smem:[#allocation7 + $0x5]]
    %v127 = vstv %s126
    %v128 = vmul.f32 %v70, %v127
    %s129 = sld [smem:[#allocation8 + $0x5]]
    %v130 = vstv %s129
    %v131 = vadd.f32 %v128, %v130
    %v132 = vmax.f32 %v131, 0.0
    %s133 = sld [smem:[#allocation10 + $0x5]]
    %v134 = vstv %s133
    %v135 = vmul.f32 %v132, %v134
    %v136 = vadd.f32 %v125, %v135
    %s137 = sld [smem:[#allocation7 + $0x6]]
    %v138 = vstv %s137
    %v139 = vmul.f32 %v70, %v138
    %s140 = sld [smem:[#allocation8 + $0x6]]
    %v141 = vstv %s140
    %v142 = vadd.f32 %v139, %v141
    %v143 = vmax.f32 %v142, 0.0
    %s144 = sld [smem:[#allocation10 + $0x6]]
    %v145 = vstv %s144
    %v146 = vmul.f32 %v143, %v145
    %v147 = vadd.f32 %v136, %v146
    %s148 = sld [smem:[#allocation7 + $0x7]]
    %v149 = vstv %s148
    %v150 = vmul.f32 %v70, %v149
    %s151 = sld [smem:[#allocation8 + $0x7]]
    %v152 = vstv %s151
    %v153 = vadd.f32 %v150, %v152
    %v154 = vmax.f32 %v153, 0.0
    %s155 = sld [smem:[#allocation10 + $0x7]]
    %v156 = vstv %s155
    %v157 = vmul.f32 %v154, %v156
    %v158 = vadd.f32 %v147, %v157
    %s159 = sld [smem:[#allocation7 + $0x8]]
    %v160 = vstv %s159
    %v161 = vmul.f32 %v70, %v160
    %s162 = sld [smem:[#allocation8 + $0x8]]
    %v163 = vstv %s162
    %v164 = vadd.f32 %v161, %v163
    %v165 = vmax.f32 %v164, 0.0
    %s166 = sld [smem:[#allocation10 + $0x8]]
    %v167 = vstv %s166
    %v168 = vmul.f32 %v165, %v167
    %v169 = vadd.f32 %v158, %v168
    %s170 = sld [smem:[#allocation7 + $0x9]]
    %v171 = vstv %s170
    %v172 = vmul.f32 %v70, %v171
    %s173 = sld [smem:[#allocation8 + $0x9]]
    %v174 = vstv %s173
    %v175 = vadd.f32 %v172, %v174
    %v176 = vmax.f32 %v175, 0.0
    %s177 = sld [smem:[#allocation10 + $0x9]]
    %v178 = vstv %s177
    %v179 = vmul.f32 %v176, %v178
    %v180 = vadd.f32 %v169, %v179
    %s181 = sld [smem:[#allocation7 + $0xa]]
    %v182 = vstv %s181
    %v183 = vmul.f32 %v70, %v182
    %s184 = sld [smem:[#allocation8 + $0xa]]
    %v185 = vstv %s184
    %v186 = vadd.f32 %v183, %v185
    %v187 = vmax.f32 %v186, 0.0
    %s188 = sld [smem:[#allocation10 + $0xa]]
    %v189 = vstv %s188
    %v190 = vmul.f32 %v187, %v189
    %v191 = vadd.f32 %v180, %v190
    %s192 = sld [smem:[#allocation7 + $0xb]]
    %v193 = vstv %s192
    %v194 = vmul.f32 %v70, %v193
    %s195 = sld [smem:[#allocation8 + $0xb]]
    %v196 = vstv %s195
    %v197 = vadd.f32 %v194, %v196
    %v198 = vmax.f32 %v197, 0.0
    %s199 = sld [smem:[#allocation10 + $0xb]]
    %v200 = vstv %s199
    %v201 = vmul.f32 %v198, %v200
    %v202 = vadd.f32 %v191, %v201
    %s203 = sld [smem:[#allocation7 + $0xc]]
    %v204 = vstv %s203
    %v205 = vmul.f32 %v70, %v204
    %s206 = sld [smem:[#allocation8 + $0xc]]
    %v207 = vstv %s206
    %v208 = vadd.f32 %v205, %v207
    %v209 = vmax.f32 %v208, 0.0
    %s210 = sld [smem:[#allocation10 + $0xc]]
    %v211 = vstv %s210
    %v212 = vmul.f32 %v209, %v211
    %v213 = vadd.f32 %v202, %v212
    %s214 = sld [smem:[#allocation7 + $0xd]]
    %v215 = vstv %s214
    %v216 = vmul.f32 %v70, %v215
    %s217 = sld [smem:[#allocation8 + $0xd]]
    %v218 = vstv %s217
    %v219 = vadd.f32 %v216, %v218
    %v220 = vmax.f32 %v219, 0.0
    %s221 = sld [smem:[#allocation10 + $0xd]]
    %v222 = vstv %s221
    %v223 = vmul.f32 %v220, %v222
    %v224 = vadd.f32 %v213, %v223
    %s225 = sld [smem:[#allocation7 + $0xe]]
    %v226 = vstv %s225
    %v227 = vmul.f32 %v70, %v226
    %s228 = sld [smem:[#allocation8 + $0xe]]
    %v229 = vstv %s228
    %v230 = vadd.f32 %v227, %v229
    %v231 = vmax.f32 %v230, 0.0
    %s232 = sld [smem:[#allocation10 + $0xe]]
    %v233 = vstv %s232
    %v234 = vmul.f32 %v231, %v233
    %v235 = vadd.f32 %v224, %v234
    %s236 = sld [smem:[#allocation7 + $0xf]]
    %v237 = vstv %s236
    %v238 = vmul.f32 %v70, %v237
    %s239 = sld [smem:[#allocation8 + $0xf]]
    %v240 = vstv %s239
    %v241 = vadd.f32 %v238, %v240
    %v242 = vmax.f32 %v241, 0.0
    %s243 = sld [smem:[#allocation10 + $0xf]]
    %v244 = vstv %s243
    %v245 = vmul.f32 %v242, %v244
    %v246 = vadd.f32 %v235, %v245
    %s247 = sld [smem:[#allocation7 + $0x10]]
    %v248 = vstv %s247
    %v249 = vmul.f32 %v70, %v248
    %s250 = sld [smem:[#allocation8 + $0x10]]
    %v251 = vstv %s250
    %v252 = vadd.f32 %v249, %v251
    %v253 = vmax.f32 %v252, 0.0
    %s254 = sld [smem:[#allocation10 + $0x10]]
    %v255 = vstv %s254
    %v256 = vmul.f32 %v253, %v255
    %v257 = vadd.f32 %v246, %v256
    %s258 = sld [smem:[#allocation7 + $0x11]]
    %v259 = vstv %s258
    %v260 = vmul.f32 %v70, %v259
    %s261 = sld [smem:[#allocation8 + $0x11]]
    %v262 = vstv %s261
    %v263 = vadd.f32 %v260, %v262
    %v264 = vmax.f32 %v263, 0.0
    %s265 = sld [smem:[#allocation10 + $0x11]]
    %v266 = vstv %s265
    %v267 = vmul.f32 %v264, %v266
    %v268 = vadd.f32 %v257, %v267
    %s269 = sld [smem:[#allocation7 + $0x12]]
    %v270 = vstv %s269
    %v271 = vmul.f32 %v70, %v270
    %s272 = sld [smem:[#allocation8 + $0x12]]
    %v273 = vstv %s272
    %v274 = vadd.f32 %v271, %v273
    %v275 = vmax.f32 %v274, 0.0
    %s276 = sld [smem:[#allocation10 + $0x12]]
    %v277 = vstv %s276
    %v278 = vmul.f32 %v275, %v277
    %v279 = vadd.f32 %v268, %v278
    %s280 = sld [smem:[#allocation7 + $0x13]]
    %v281 = vstv %s280
    %v282 = vmul.f32 %v70, %v281
    %s283 = sld [smem:[#allocation8 + $0x13]]
    %v284 = vstv %s283
    %v285 = vadd.f32 %v282, %v284
    %v286 = vmax.f32 %v285, 0.0
    %s287 = sld [smem:[#allocation10 + $0x13]]
    %v288 = vstv %s287
    %v289 = vmul.f32 %v286, %v288
    %v290 = vadd.f32 %v279, %v289
    %s291 = sld [smem:[#allocation7 + $0x14]]
    %v292 = vstv %s291
    %v293 = vmul.f32 %v70, %v292
    %s294 = sld [smem:[#allocation8 + $0x14]]
    %v295 = vstv %s294
    %v296 = vadd.f32 %v293, %v295
    %v297 = vmax.f32 %v296, 0.0
    %s298 = sld [smem:[#allocation10 + $0x14]]
    %v299 = vstv %s298
    %v300 = vmul.f32 %v297, %v299
    %v301 = vadd.f32 %v290, %v300
    %s302 = sld [smem:[#allocation7 + $0x15]]
    %v303 = vstv %s302
    %v304 = vmul.f32 %v70, %v303
    %s305 = sld [smem:[#allocation8 + $0x15]]
    %v306 = vstv %s305
    %v307 = vadd.f32 %v304, %v306
    %v308 = vmax.f32 %v307, 0.0
    %s309 = sld [smem:[#allocation10 + $0x15]]
    %v310 = vstv %s309
    %v311 = vmul.f32 %v308, %v310
    %v312 = vadd.f32 %v301, %v311
    %s313 = sld [smem:[#allocation7 + $0x16]]
    %v314 = vstv %s313
    %v315 = vmul.f32 %v70, %v314
    %s316 = sld [smem:[#allocation8 + $0x16]]
    %v317 = vstv %s316
    %v318 = vadd.f32 %v315, %v317
    %v319 = vmax.f32 %v318, 0.0
    %s320 = sld [smem:[#allocation10 + $0x16]]
    %v321 = vstv %s320
    %v322 = vmul.f32 %v319, %v321
    %v323 = vadd.f32 %v312, %v322
    %s324 = sld [smem:[#allocation7 + $0x17]]
    %v325 = vstv %s324
    %v326 = vmul.f32 %v70, %v325
    %s327 = sld [smem:[#allocation8 + $0x17]]
    %v328 = vstv %s327
    %v329 = vadd.f32 %v326, %v328
    %v330 = vmax.f32 %v329, 0.0
    %s331 = sld [smem:[#allocation10 + $0x17]]
    %v332 = vstv %s331
    %v333 = vmul.f32 %v330, %v332
    %v334 = vadd.f32 %v323, %v333
    %s335 = sld [smem:[#allocation7 + $0x18]]
    %v336 = vstv %s335
    %v337 = vmul.f32 %v70, %v336
    %s338 = sld [smem:[#allocation8 + $0x18]]
    %v339 = vstv %s338
    %v340 = vadd.f32 %v337, %v339
    %v341 = vmax.f32 %v340, 0.0
    %s342 = sld [smem:[#allocation10 + $0x18]]
    %v343 = vstv %s342
    %v344 = vmul.f32 %v341, %v343
    %v345 = vadd.f32 %v334, %v344
    %s346 = sld [smem:[#allocation7 + $0x19]]
    %v347 = vstv %s346
    %v348 = vmul.f32 %v70, %v347
    %s349 = sld [smem:[#allocation8 + $0x19]]
    %v350 = vstv %s349
    %v351 = vadd.f32 %v348, %v350
    %v352 = vmax.f32 %v351, 0.0
    %s353 = sld [smem:[#allocation10 + $0x19]]
    %v354 = vstv %s353
    %v355 = vmul.f32 %v352, %v354
    %v356 = vadd.f32 %v345, %v355
    %s357 = sld [smem:[#allocation7 + $0x1a]]
    %v358 = vstv %s357
    %v359 = vmul.f32 %v70, %v358
    %s360 = sld [smem:[#allocation8 + $0x1a]]
    %v361 = vstv %s360
    %v362 = vadd.f32 %v359, %v361
    %v363 = vmax.f32 %v362, 0.0
    %s364 = sld [smem:[#allocation10 + $0x1a]]
    %v365 = vstv %s364
    %v366 = vmul.f32 %v363, %v365
    %v367 = vadd.f32 %v356, %v366
    %s368 = sld [smem:[#allocation7 + $0x1b]]
    %v369 = vstv %s368
    %v370 = vmul.f32 %v70, %v369
    %s371 = sld [smem:[#allocation8 + $0x1b]]
    %v372 = vstv %s371
    %v373 = vadd.f32 %v370, %v372
    %v374 = vmax.f32 %v373, 0.0
    %s375 = sld [smem:[#allocation10 + $0x1b]]
    %v376 = vstv %s375
    %v377 = vmul.f32 %v374, %v376
    %v378 = vadd.f32 %v367, %v377
    %s379 = sld [smem:[#allocation7 + $0x1c]]
    %v380 = vstv %s379
    %v381 = vmul.f32 %v70, %v380
    %s382 = sld [smem:[#allocation8 + $0x1c]]
    %v383 = vstv %s382
    %v384 = vadd.f32 %v381, %v383
    %v385 = vmax.f32 %v384, 0.0
    %s386 = sld [smem:[#allocation10 + $0x1c]]
    %v387 = vstv %s386
    %v388 = vmul.f32 %v385, %v387
    %v389 = vadd.f32 %v378, %v388
    %s390 = sld [smem:[#allocation7 + $0x1d]]
    %v391 = vstv %s390
    %v392 = vmul.f32 %v70, %v391
    %s393 = sld [smem:[#allocation8 + $0x1d]]
    %v394 = vstv %s393
    %v395 = vadd.f32 %v392, %v394
    %v396 = vmax.f32 %v395, 0.0
    %s397 = sld [smem:[#allocation10 + $0x1d]]
    %v398 = vstv %s397
    %v399 = vmul.f32 %v396, %v398
    %v400 = vadd.f32 %v389, %v399
    %s401 = sld [smem:[#allocation7 + $0x1e]]
    %v402 = vstv %s401
    %v403 = vmul.f32 %v70, %v402
    %s404 = sld [smem:[#allocation8 + $0x1e]]
    %v405 = vstv %s404
    %v406 = vadd.f32 %v403, %v405
    %v407 = vmax.f32 %v406, 0.0
    %s408 = sld [smem:[#allocation10 + $0x1e]]
    %v409 = vstv %s408
    %v410 = vmul.f32 %v407, %v409
    %v411 = vadd.f32 %v400, %v410
    %s412 = sld [smem:[#allocation7 + $0x1f]]
    %v413 = vstv %s412
    %v414 = vmul.f32 %v70, %v413
    %s415 = sld [smem:[#allocation8 + $0x1f]]
    %v416 = vstv %s415
    %v417 = vadd.f32 %v414, %v416
    %v418 = vmax.f32 %v417, 0.0
    %s419 = sld [smem:[#allocation10 + $0x1f]]
    %v420 = vstv %s419
    %v421 = vmul.f32 %v418, %v420
    %v422 = vadd.f32 %v411, %v421
    %s423 = sld [smem:[#allocation7 + $0x20]]
    %v424 = vstv %s423
    %v425 = vmul.f32 %v70, %v424
    %s426 = sld [smem:[#allocation8 + $0x20]]
    %v427 = vstv %s426
    %v428 = vadd.f32 %v425, %v427
    %v429 = vmax.f32 %v428, 0.0
    %s430 = sld [smem:[#allocation10 + $0x20]]
    %v431 = vstv %s430
    %v432 = vmul.f32 %v429, %v431
    %v433 = vadd.f32 %v422, %v432
    %s434 = sld [smem:[#allocation7 + $0x21]]
    %v435 = vstv %s434
    %v436 = vmul.f32 %v70, %v435
    %s437 = sld [smem:[#allocation8 + $0x21]]
    %v438 = vstv %s437
    %v439 = vadd.f32 %v436, %v438
    %v440 = vmax.f32 %v439, 0.0
    %s441 = sld [smem:[#allocation10 + $0x21]]
    %v442 = vstv %s441
    %v443 = vmul.f32 %v440, %v442
    %v444 = vadd.f32 %v433, %v443
    %s445 = sld [smem:[#allocation7 + $0x22]]
    %v446 = vstv %s445
    %v447 = vmul.f32 %v70, %v446
    %s448 = sld [smem:[#allocation8 + $0x22]]
    %v449 = vstv %s448
    %v450 = vadd.f32 %v447, %v449
    %v451 = vmax.f32 %v450, 0.0
    %s452 = sld [smem:[#allocation10 + $0x22]]
    %v453 = vstv %s452
    %v454 = vmul.f32 %v451, %v453
    %v455 = vadd.f32 %v444, %v454
    %s456 = sld [smem:[#allocation7 + $0x23]]
    %v457 = vstv %s456
    %v458 = vmul.f32 %v70, %v457
    %s459 = sld [smem:[#allocation8 + $0x23]]
    %v460 = vstv %s459
    %v461 = vadd.f32 %v458, %v460
    %v462 = vmax.f32 %v461, 0.0
    %s463 = sld [smem:[#allocation10 + $0x23]]
    %v464 = vstv %s463
    %v465 = vmul.f32 %v462, %v464
    %v466 = vadd.f32 %v455, %v465
    %s467 = sld [smem:[#allocation7 + $0x24]]
    %v468 = vstv %s467
    %v469 = vmul.f32 %v70, %v468
    %s470 = sld [smem:[#allocation8 + $0x24]]
    %v471 = vstv %s470
    %v472 = vadd.f32 %v469, %v471
    %v473 = vmax.f32 %v472, 0.0
    %s474 = sld [smem:[#allocation10 + $0x24]]
    %v475 = vstv %s474
    %v476 = vmul.f32 %v473, %v475
    %v477 = vadd.f32 %v466, %v476
    %s478 = sld [smem:[#allocation7 + $0x25]]
    %v479 = vstv %s478
    %v480 = vmul.f32 %v70, %v479
    %s481 = sld [smem:[#allocation8 + $0x25]]
    %v482 = vstv %s481
    %v483 = vadd.f32 %v480, %v482
    %v484 = vmax.f32 %v483, 0.0
    %s485 = sld [smem:[#allocation10 + $0x25]]
    %v486 = vstv %s485
    %v487 = vmul.f32 %v484, %v486
    %v488 = vadd.f32 %v477, %v487
    %s489 = sld [smem:[#allocation7 + $0x26]]
    %v490 = vstv %s489
    %v491 = vmul.f32 %v70, %v490
    %s492 = sld [smem:[#allocation8 + $0x26]]
    %v493 = vstv %s492
    %v494 = vadd.f32 %v491, %v493
    %v495 = vmax.f32 %v494, 0.0
    %s496 = sld [smem:[#allocation10 + $0x26]]
    %v497 = vstv %s496
    %v498 = vmul.f32 %v495, %v497
    %v499 = vadd.f32 %v488, %v498
    %s500 = sld [smem:[#allocation7 + $0x27]]
    %v501 = vstv %s500
    %v502 = vmul.f32 %v70, %v501
    %s503 = sld [smem:[#allocation8 + $0x27]]
    %v504 = vstv %s503
    %v505 = vadd.f32 %v502, %v504
    %v506 = vmax.f32 %v505, 0.0
    %s507 = sld [smem:[#allocation10 + $0x27]]
    %v508 = vstv %s507
    %v509 = vmul.f32 %v506, %v508
    %v510 = vadd.f32 %v499, %v509
    %s511 = sld [smem:[#allocation7 + $0x28]]
    %v512 = vstv %s511
    %v513 = vmul.f32 %v70, %v512
    %s514 = sld [smem:[#allocation8 + $0x28]]
    %v515 = vstv %s514
    %v516 = vadd.f32 %v513, %v515
    %v517 = vmax.f32 %v516, 0.0
    %s518 = sld [smem:[#allocation10 + $0x28]]
    %v519 = vstv %s518
    %v520 = vmul.f32 %v517, %v519
    %v521 = vadd.f32 %v510, %v520
    %s522 = sld [smem:[#allocation7 + $0x29]]
    %v523 = vstv %s522
    %v524 = vmul.f32 %v70, %v523
    %s525 = sld [smem:[#allocation8 + $0x29]]
    %v526 = vstv %s525
    %v527 = vadd.f32 %v524, %v526
    %v528 = vmax.f32 %v527, 0.0
    %s529 = sld [smem:[#allocation10 + $0x29]]
    %v530 = vstv %s529
    %v531 = vmul.f32 %v528, %v530
    %v532 = vadd.f32 %v521, %v531
    %s533 = sld [smem:[#allocation7 + $0x2a]]
    %v534 = vstv %s533
    %v535 = vmul.f32 %v70, %v534
    %s536 = sld [smem:[#allocation8 + $0x2a]]
    %v537 = vstv %s536
    %v538 = vadd.f32 %v535, %v537
    %v539 = vmax.f32 %v538, 0.0
    %s540 = sld [smem:[#allocation10 + $0x2a]]
    %v541 = vstv %s540
    %v542 = vmul.f32 %v539, %v541
    %v543 = vadd.f32 %v532, %v542
    %s544 = sld [smem:[#allocation7 + $0x2b]]
    %v545 = vstv %s544
    %v546 = vmul.f32 %v70, %v545
    %s547 = sld [smem:[#allocation8 + $0x2b]]
    %v548 = vstv %s547
    %v549 = vadd.f32 %v546, %v548
    %v550 = vmax.f32 %v549, 0.0
    %s551 = sld [smem:[#allocation10 + $0x2b]]
    %v552 = vstv %s551
    %v553 = vmul.f32 %v550, %v552
    %v554 = vadd.f32 %v543, %v553
    %s555 = sld [smem:[#allocation7 + $0x2c]]
    %v556 = vstv %s555
    %v557 = vmul.f32 %v70, %v556
    %s558 = sld [smem:[#allocation8 + $0x2c]]
    %v559 = vstv %s558
    %v560 = vadd.f32 %v557, %v559
    %v561 = vmax.f32 %v560, 0.0
    %s562 = sld [smem:[#allocation10 + $0x2c]]
    %v563 = vstv %s562
    %v564 = vmul.f32 %v561, %v563
    %v565 = vadd.f32 %v554, %v564
    %s566 = sld [smem:[#allocation7 + $0x2d]]
    %v567 = vstv %s566
    %v568 = vmul.f32 %v70, %v567
    %s569 = sld [smem:[#allocation8 + $0x2d]]
    %v570 = vstv %s569
    %v571 = vadd.f32 %v568, %v570
    %v572 = vmax.f32 %v571, 0.0
    %s573 = sld [smem:[#allocation10 + $0x2d]]
    %v574 = vstv %s573
    %v575 = vmul.f32 %v572, %v574
    %v576 = vadd.f32 %v565, %v575
    %s577 = sld [smem:[#allocation7 + $0x2e]]
    %v578 = vstv %s577
    %v579 = vmul.f32 %v70, %v578
    %s580 = sld [smem:[#allocation8 + $0x2e]]
    %v581 = vstv %s580
    %v582 = vadd.f32 %v579, %v581
    %v583 = vmax.f32 %v582, 0.0
    %s584 = sld [smem:[#allocation10 + $0x2e]]
    %v585 = vstv %s584
    %v586 = vmul.f32 %v583, %v585
    %v587 = vadd.f32 %v576, %v586
    %s588 = sld [smem:[#allocation7 + $0x2f]]
    %v589 = vstv %s588
    %v590 = vmul.f32 %v70, %v589
    %s591 = sld [smem:[#allocation8 + $0x2f]]
    %v592 = vstv %s591
    %v593 = vadd.f32 %v590, %v592
    %v594 = vmax.f32 %v593, 0.0
    %s595 = sld [smem:[#allocation10 + $0x2f]]
    %v596 = vstv %s595
    %v597 = vmul.f32 %v594, %v596
    %v598 = vadd.f32 %v587, %v597
    %s599 = sld [smem:[#allocation7 + $0x30]]
    %v600 = vstv %s599
    %v601 = vmul.f32 %v70, %v600
    %s602 = sld [smem:[#allocation8 + $0x30]]
    %v603 = vstv %s602
    %v604 = vadd.f32 %v601, %v603
    %v605 = vmax.f32 %v604, 0.0
    %s606 = sld [smem:[#allocation10 + $0x30]]
    %v607 = vstv %s606
    %v608 = vmul.f32 %v605, %v607
    %v609 = vadd.f32 %v598, %v608
    %s610 = sld [smem:[#allocation7 + $0x31]]
    %v611 = vstv %s610
    %v612 = vmul.f32 %v70, %v611
    %s613 = sld [smem:[#allocation8 + $0x31]]
    %v614 = vstv %s613
    %v615 = vadd.f32 %v612, %v614
    %v616 = vmax.f32 %v615, 0.0
    %s617 = sld [smem:[#allocation10 + $0x31]]
    %v618 = vstv %s617
    %v619 = vmul.f32 %v616, %v618
    %v620 = vadd.f32 %v609, %v619
    %s621 = sld [smem:[#allocation7 + $0x32]]
    %v622 = vstv %s621
    %v623 = vmul.f32 %v70, %v622
    %s624 = sld [smem:[#allocation8 + $0x32]]
    %v625 = vstv %s624
    %v626 = vadd.f32 %v623, %v625
    %v627 = vmax.f32 %v626, 0.0
    %s628 = sld [smem:[#allocation10 + $0x32]]
    %v629 = vstv %s628
    %v630 = vmul.f32 %v627, %v629
    %v631 = vadd.f32 %v620, %v630
    %s632 = sld [smem:[#allocation7 + $0x33]]
    %v633 = vstv %s632
    %v634 = vmul.f32 %v70, %v633
    %s635 = sld [smem:[#allocation8 + $0x33]]
    %v636 = vstv %s635
    %v637 = vadd.f32 %v634, %v636
    %v638 = vmax.f32 %v637, 0.0
    %s639 = sld [smem:[#allocation10 + $0x33]]
    %v640 = vstv %s639
    %v641 = vmul.f32 %v638, %v640
    %v642 = vadd.f32 %v631, %v641
    %s643 = sld [smem:[#allocation7 + $0x34]]
    %v644 = vstv %s643
    %v645 = vmul.f32 %v70, %v644
    %s646 = sld [smem:[#allocation8 + $0x34]]
    %v647 = vstv %s646
    %v648 = vadd.f32 %v645, %v647
    %v649 = vmax.f32 %v648, 0.0
    %s650 = sld [smem:[#allocation10 + $0x34]]
    %v651 = vstv %s650
    %v652 = vmul.f32 %v649, %v651
    %v653 = vadd.f32 %v642, %v652
    %s654 = sld [smem:[#allocation7 + $0x35]]
    %v655 = vstv %s654
    %v656 = vmul.f32 %v70, %v655
    %s657 = sld [smem:[#allocation8 + $0x35]]
    %v658 = vstv %s657
    %v659 = vadd.f32 %v656, %v658
    %v660 = vmax.f32 %v659, 0.0
    %s661 = sld [smem:[#allocation10 + $0x35]]
    %v662 = vstv %s661
    %v663 = vmul.f32 %v660, %v662
    %v664 = vadd.f32 %v653, %v663
    %s665 = sld [smem:[#allocation7 + $0x36]]
    %v666 = vstv %s665
    %v667 = vmul.f32 %v70, %v666
    %s668 = sld [smem:[#allocation8 + $0x36]]
    %v669 = vstv %s668
    %v670 = vadd.f32 %v667, %v669
    %v671 = vmax.f32 %v670, 0.0
    %s672 = sld [smem:[#allocation10 + $0x36]]
    %v673 = vstv %s672
    %v674 = vmul.f32 %v671, %v673
    %v675 = vadd.f32 %v664, %v674
    %s676 = sld [smem:[#allocation7 + $0x37]]
    %v677 = vstv %s676
    %v678 = vmul.f32 %v70, %v677
    %s679 = sld [smem:[#allocation8 + $0x37]]
    %v680 = vstv %s679
    %v681 = vadd.f32 %v678, %v680
    %v682 = vmax.f32 %v681, 0.0
    %s683 = sld [smem:[#allocation10 + $0x37]]
    %v684 = vstv %s683
    %v685 = vmul.f32 %v682, %v684
    %v686 = vadd.f32 %v675, %v685
    %s687 = sld [smem:[#allocation7 + $0x38]]
    %v688 = vstv %s687
    %v689 = vmul.f32 %v70, %v688
    %s690 = sld [smem:[#allocation8 + $0x38]]
    %v691 = vstv %s690
    %v692 = vadd.f32 %v689, %v691
    %v693 = vmax.f32 %v692, 0.0
    %s694 = sld [smem:[#allocation10 + $0x38]]
    %v695 = vstv %s694
    %v696 = vmul.f32 %v693, %v695
    %v697 = vadd.f32 %v686, %v696
    %s698 = sld [smem:[#allocation7 + $0x39]]
    %v699 = vstv %s698
    %v700 = vmul.f32 %v70, %v699
    %s701 = sld [smem:[#allocation8 + $0x39]]
    %v702 = vstv %s701
    %v703 = vadd.f32 %v700, %v702
    %v704 = vmax.f32 %v703, 0.0
    %s705 = sld [smem:[#allocation10 + $0x39]]
    %v706 = vstv %s705
    %v707 = vmul.f32 %v704, %v706
    %v708 = vadd.f32 %v697, %v707
    %s709 = sld [smem:[#allocation7 + $0x3a]]
    %v710 = vstv %s709
    %v711 = vmul.f32 %v70, %v710
    %s712 = sld [smem:[#allocation8 + $0x3a]]
    %v713 = vstv %s712
    %v714 = vadd.f32 %v711, %v713
    %v715 = vmax.f32 %v714, 0.0
    %s716 = sld [smem:[#allocation10 + $0x3a]]
    %v717 = vstv %s716
    %v718 = vmul.f32 %v715, %v717
    %v719 = vadd.f32 %v708, %v718
    %s720 = sld [smem:[#allocation7 + $0x3b]]
    %v721 = vstv %s720
    %v722 = vmul.f32 %v70, %v721
    %s723 = sld [smem:[#allocation8 + $0x3b]]
    %v724 = vstv %s723
    %v725 = vadd.f32 %v722, %v724
    %v726 = vmax.f32 %v725, 0.0
    %s727 = sld [smem:[#allocation10 + $0x3b]]
    %v728 = vstv %s727
    %v729 = vmul.f32 %v726, %v728
    %v730 = vadd.f32 %v719, %v729
    %s731 = sld [smem:[#allocation7 + $0x3c]]
    %v732 = vstv %s731
    %v733 = vmul.f32 %v70, %v732
    %s734 = sld [smem:[#allocation8 + $0x3c]]
    %v735 = vstv %s734
    %v736 = vadd.f32 %v733, %v735
    %v737 = vmax.f32 %v736, 0.0
    %s738 = sld [smem:[#allocation10 + $0x3c]]
    %v739 = vstv %s738
    %v740 = vmul.f32 %v737, %v739
    %v741 = vadd.f32 %v730, %v740
    %s742 = sld [smem:[#allocation7 + $0x3d]]
    %v743 = vstv %s742
    %v744 = vmul.f32 %v70, %v743
    %s745 = sld [smem:[#allocation8 + $0x3d]]
    %v746 = vstv %s745
    %v747 = vadd.f32 %v744, %v746
    %v748 = vmax.f32 %v747, 0.0
    %s749 = sld [smem:[#allocation10 + $0x3d]]
    %v750 = vstv %s749
    %v751 = vmul.f32 %v748, %v750
    %v752 = vadd.f32 %v741, %v751
    %s753 = sld [smem:[#allocation7 + $0x3e]]
    %v754 = vstv %s753
    %v755 = vmul.f32 %v70, %v754
    %s756 = sld [smem:[#allocation8 + $0x3e]]
    %v757 = vstv %s756
    %v758 = vadd.f32 %v755, %v757
    %v759 = vmax.f32 %v758, 0.0
    %s760 = sld [smem:[#allocation10 + $0x3e]]
    %v761 = vstv %s760
    %v762 = vmul.f32 %v759, %v761
    %v763 = vadd.f32 %v752, %v762
    %s764 = sld [smem:[#allocation7 + $0x3f]]
    %v765 = vstv %s764
    %v766 = vmul.f32 %v70, %v765
    %s767 = sld [smem:[#allocation8 + $0x3f]]
    %v768 = vstv %s767
    %v769 = vadd.f32 %v766, %v768
    %v770 = vmax.f32 %v769, 0.0
    %s771 = sld [smem:[#allocation10 + $0x3f]]
    %v772 = vstv %s771
    %v773 = vmul.f32 %v770, %v772
    %v774 = vadd.f32 %v763, %v773
    %s775 = sld [smem:[#allocation7 + $0x40]]
    %v776 = vstv %s775
    %v777 = vmul.f32 %v70, %v776
    %s778 = sld [smem:[#allocation8 + $0x40]]
    %v779 = vstv %s778
    %v780 = vadd.f32 %v777, %v779
    %v781 = vmax.f32 %v780, 0.0
    %s782 = sld [smem:[#allocation10 + $0x40]]
    %v783 = vstv %s782
    %v784 = vmul.f32 %v781, %v783
    %v785 = vadd.f32 %v774, %v784
    %s786 = sld [smem:[#allocation7 + $0x41]]
    %v787 = vstv %s786
    %v788 = vmul.f32 %v70, %v787
    %s789 = sld [smem:[#allocation8 + $0x41]]
    %v790 = vstv %s789
    %v791 = vadd.f32 %v788, %v790
    %v792 = vmax.f32 %v791, 0.0
    %s793 = sld [smem:[#allocation10 + $0x41]]
    %v794 = vstv %s793
    %v795 = vmul.f32 %v792, %v794
    %v796 = vadd.f32 %v785, %v795
    %s797 = sld [smem:[#allocation7 + $0x42]]
    %v798 = vstv %s797
    %v799 = vmul.f32 %v70, %v798
    %s800 = sld [smem:[#allocation8 + $0x42]]
    %v801 = vstv %s800
    %v802 = vadd.f32 %v799, %v801
    %v803 = vmax.f32 %v802, 0.0
    %s804 = sld [smem:[#allocation10 + $0x42]]
    %v805 = vstv %s804
    %v806 = vmul.f32 %v803, %v805
    %v807 = vadd.f32 %v796, %v806
    %s808 = sld [smem:[#allocation7 + $0x43]]
    %v809 = vstv %s808
    %v810 = vmul.f32 %v70, %v809
    %s811 = sld [smem:[#allocation8 + $0x43]]
    %v812 = vstv %s811
    %v813 = vadd.f32 %v810, %v812
    %v814 = vmax.f32 %v813, 0.0
    %s815 = sld [smem:[#allocation10 + $0x43]]
    %v816 = vstv %s815
    %v817 = vmul.f32 %v814, %v816
    %v818 = vadd.f32 %v807, %v817
    %s819 = sld [smem:[#allocation7 + $0x44]]
    %v820 = vstv %s819
    %v821 = vmul.f32 %v70, %v820
    %s822 = sld [smem:[#allocation8 + $0x44]]
    %v823 = vstv %s822
    %v824 = vadd.f32 %v821, %v823
    %v825 = vmax.f32 %v824, 0.0
    %s826 = sld [smem:[#allocation10 + $0x44]]
    %v827 = vstv %s826
    %v828 = vmul.f32 %v825, %v827
    %v829 = vadd.f32 %v818, %v828
    %s830 = sld [smem:[#allocation7 + $0x45]]
    %v831 = vstv %s830
    %v832 = vmul.f32 %v70, %v831
    %s833 = sld [smem:[#allocation8 + $0x45]]
    %v834 = vstv %s833
    %v835 = vadd.f32 %v832, %v834
    %v836 = vmax.f32 %v835, 0.0
    %s837 = sld [smem:[#allocation10 + $0x45]]
    %v838 = vstv %s837
    %v839 = vmul.f32 %v836, %v838
    %v840 = vadd.f32 %v829, %v839
    %s841 = sld [smem:[#allocation7 + $0x46]]
    %v842 = vstv %s841
    %v843 = vmul.f32 %v70, %v842
    %s844 = sld [smem:[#allocation8 + $0x46]]
    %v845 = vstv %s844
    %v846 = vadd.f32 %v843, %v845
    %v847 = vmax.f32 %v846, 0.0
    %s848 = sld [smem:[#allocation10 + $0x46]]
    %v849 = vstv %s848
    %v850 = vmul.f32 %v847, %v849
    %v851 = vadd.f32 %v840, %v850
    %s852 = sld [smem:[#allocation7 + $0x47]]
    %v853 = vstv %s852
    %v854 = vmul.f32 %v70, %v853
    %s855 = sld [smem:[#allocation8 + $0x47]]
    %v856 = vstv %s855
    %v857 = vadd.f32 %v854, %v856
    %v858 = vmax.f32 %v857, 0.0
    %s859 = sld [smem:[#allocation10 + $0x47]]
    %v860 = vstv %s859
    %v861 = vmul.f32 %v858, %v860
    %v862 = vadd.f32 %v851, %v861
    %s863 = sld [smem:[#allocation7 + $0x48]]
    %v864 = vstv %s863
    %v865 = vmul.f32 %v70, %v864
    %s866 = sld [smem:[#allocation8 + $0x48]]
    %v867 = vstv %s866
    %v868 = vadd.f32 %v865, %v867
    %v869 = vmax.f32 %v868, 0.0
    %s870 = sld [smem:[#allocation10 + $0x48]]
    %v871 = vstv %s870
    %v872 = vmul.f32 %v869, %v871
    %v873 = vadd.f32 %v862, %v872
    %s874 = sld [smem:[#allocation7 + $0x49]]
    %v875 = vstv %s874
    %v876 = vmul.f32 %v70, %v875
    %s877 = sld [smem:[#allocation8 + $0x49]]
    %v878 = vstv %s877
    %v879 = vadd.f32 %v876, %v878
    %v880 = vmax.f32 %v879, 0.0
    %s881 = sld [smem:[#allocation10 + $0x49]]
    %v882 = vstv %s881
    %v883 = vmul.f32 %v880, %v882
    %v884 = vadd.f32 %v873, %v883
    %s885 = sld [smem:[#allocation7 + $0x4a]]
    %v886 = vstv %s885
    %v887 = vmul.f32 %v70, %v886
    %s888 = sld [smem:[#allocation8 + $0x4a]]
    %v889 = vstv %s888
    %v890 = vadd.f32 %v887, %v889
    %v891 = vmax.f32 %v890, 0.0
    %s892 = sld [smem:[#allocation10 + $0x4a]]
    %v893 = vstv %s892
    %v894 = vmul.f32 %v891, %v893
    %v895 = vadd.f32 %v884, %v894
    %s896 = sld [smem:[#allocation7 + $0x4b]]
    %v897 = vstv %s896
    %v898 = vmul.f32 %v70, %v897
    %s899 = sld [smem:[#allocation8 + $0x4b]]
    %v900 = vstv %s899
    %v901 = vadd.f32 %v898, %v900
    %v902 = vmax.f32 %v901, 0.0
    %s903 = sld [smem:[#allocation10 + $0x4b]]
    %v904 = vstv %s903
    %v905 = vmul.f32 %v902, %v904
    %v906 = vadd.f32 %v895, %v905
    %s907 = sld [smem:[#allocation7 + $0x4c]]
    %v908 = vstv %s907
    %v909 = vmul.f32 %v70, %v908
    %s910 = sld [smem:[#allocation8 + $0x4c]]
    %v911 = vstv %s910
    %v912 = vadd.f32 %v909, %v911
    %v913 = vmax.f32 %v912, 0.0
    %s914 = sld [smem:[#allocation10 + $0x4c]]
    %v915 = vstv %s914
    %v916 = vmul.f32 %v913, %v915
    %v917 = vadd.f32 %v906, %v916
    %s918 = sld [smem:[#allocation7 + $0x4d]]
    %v919 = vstv %s918
    %v920 = vmul.f32 %v70, %v919
    %s921 = sld [smem:[#allocation8 + $0x4d]]
    %v922 = vstv %s921
    %v923 = vadd.f32 %v920, %v922
    %v924 = vmax.f32 %v923, 0.0
    %s925 = sld [smem:[#allocation10 + $0x4d]]
    %v926 = vstv %s925
    %v927 = vmul.f32 %v924, %v926
    %v928 = vadd.f32 %v917, %v927
    %s929 = sld [smem:[#allocation7 + $0x4e]]
    %v930 = vstv %s929
    %v931 = vmul.f32 %v70, %v930
    %s932 = sld [smem:[#allocation8 + $0x4e]]
    %v933 = vstv %s932
    %v934 = vadd.f32 %v931, %v933
    %v935 = vmax.f32 %v934, 0.0
    %s936 = sld [smem:[#allocation10 + $0x4e]]
    %v937 = vstv %s936
    %v938 = vmul.f32 %v935, %v937
    %v939 = vadd.f32 %v928, %v938
    %s940 = sld [smem:[#allocation7 + $0x4f]]
    %v941 = vstv %s940
    %v942 = vmul.f32 %v70, %v941
    %s943 = sld [smem:[#allocation8 + $0x4f]]
    %v944 = vstv %s943
    %v945 = vadd.f32 %v942, %v944
    %v946 = vmax.f32 %v945, 0.0
    %s947 = sld [smem:[#allocation10 + $0x4f]]
    %v948 = vstv %s947
    %v949 = vmul.f32 %v946, %v948
    %v950 = vadd.f32 %v939, %v949
    %s951 = sld [smem:[#allocation7 + $0x50]]
    %v952 = vstv %s951
    %v953 = vmul.f32 %v70, %v952
    %s954 = sld [smem:[#allocation8 + $0x50]]
    %v955 = vstv %s954
    %v956 = vadd.f32 %v953, %v955
    %v957 = vmax.f32 %v956, 0.0
    %s958 = sld [smem:[#allocation10 + $0x50]]
    %v959 = vstv %s958
    %v960 = vmul.f32 %v957, %v959
    %v961 = vadd.f32 %v950, %v960
    %s962 = sld [smem:[#allocation7 + $0x51]]
    %v963 = vstv %s962
    %v964 = vmul.f32 %v70, %v963
    %s965 = sld [smem:[#allocation8 + $0x51]]
    %v966 = vstv %s965
    %v967 = vadd.f32 %v964, %v966
    %v968 = vmax.f32 %v967, 0.0
    %s969 = sld [smem:[#allocation10 + $0x51]]
    %v970 = vstv %s969
    %v971 = vmul.f32 %v968, %v970
    %v972 = vadd.f32 %v961, %v971
    %s973 = sld [smem:[#allocation7 + $0x52]]
    %v974 = vstv %s973
    %v975 = vmul.f32 %v70, %v974
    %s976 = sld [smem:[#allocation8 + $0x52]]
    %v977 = vstv %s976
    %v978 = vadd.f32 %v975, %v977
    %v979 = vmax.f32 %v978, 0.0
    %s980 = sld [smem:[#allocation10 + $0x52]]
    %v981 = vstv %s980
    %v982 = vmul.f32 %v979, %v981
    %v983 = vadd.f32 %v972, %v982
    %s984 = sld [smem:[#allocation7 + $0x53]]
    %v985 = vstv %s984
    %v986 = vmul.f32 %v70, %v985
    %s987 = sld [smem:[#allocation8 + $0x53]]
    %v988 = vstv %s987
    %v989 = vadd.f32 %v986, %v988
    %v990 = vmax.f32 %v989, 0.0
    %s991 = sld [smem:[#allocation10 + $0x53]]
    %v992 = vstv %s991
    %v993 = vmul.f32 %v990, %v992
    %v994 = vadd.f32 %v983, %v993
    %s995 = sld [smem:[#allocation7 + $0x54]]
    %v996 = vstv %s995
    %v997 = vmul.f32 %v70, %v996
    %s998 = sld [smem:[#allocation8 + $0x54]]
    %v999 = vstv %s998
    %v1000 = vadd.f32 %v997, %v999
    %v1001 = vmax.f32 %v1000, 0.0
    %s1002 = sld [smem:[#allocation10 + $0x54]]
    %v1003 = vstv %s1002
    %v1004 = vmul.f32 %v1001, %v1003
    %v1005 = vadd.f32 %v994, %v1004
    %s1006 = sld [smem:[#allocation7 + $0x55]]
    %v1007 = vstv %s1006
    %v1008 = vmul.f32 %v70, %v1007
    %s1009 = sld [smem:[#allocation8 + $0x55]]
    %v1010 = vstv %s1009
    %v1011 = vadd.f32 %v1008, %v1010
    %v1012 = vmax.f32 %v1011, 0.0
    %s1013 = sld [smem:[#allocation10 + $0x55]]
    %v1014 = vstv %s1013
    %v1015 = vmul.f32 %v1012, %v1014
    %v1016 = vadd.f32 %v1005, %v1015
    %s1017 = sld [smem:[#allocation7 + $0x56]]
    %v1018 = vstv %s1017
    %v1019 = vmul.f32 %v70, %v1018
    %s1020 = sld [smem:[#allocation8 + $0x56]]
    %v1021 = vstv %s1020
    %v1022 = vadd.f32 %v1019, %v1021
    %v1023 = vmax.f32 %v1022, 0.0
    %s1024 = sld [smem:[#allocation10 + $0x56]]
    %v1025 = vstv %s1024
    %v1026 = vmul.f32 %v1023, %v1025
    %v1027 = vadd.f32 %v1016, %v1026
    %s1028 = sld [smem:[#allocation7 + $0x57]]
    %v1029 = vstv %s1028
    %v1030 = vmul.f32 %v70, %v1029
    %s1031 = sld [smem:[#allocation8 + $0x57]]
    %v1032 = vstv %s1031
    %v1033 = vadd.f32 %v1030, %v1032
    %v1034 = vmax.f32 %v1033, 0.0
    %s1035 = sld [smem:[#allocation10 + $0x57]]
    %v1036 = vstv %s1035
    %v1037 = vmul.f32 %v1034, %v1036
    %v1038 = vadd.f32 %v1027, %v1037
    %s1039 = sld [smem:[#allocation7 + $0x58]]
    %v1040 = vstv %s1039
    %v1041 = vmul.f32 %v70, %v1040
    %s1042 = sld [smem:[#allocation8 + $0x58]]
    %v1043 = vstv %s1042
    %v1044 = vadd.f32 %v1041, %v1043
    %v1045 = vmax.f32 %v1044, 0.0
    %s1046 = sld [smem:[#allocation10 + $0x58]]
    %v1047 = vstv %s1046
    %v1048 = vmul.f32 %v1045, %v1047
    %v1049 = vadd.f32 %v1038, %v1048
    %s1050 = sld [smem:[#allocation7 + $0x59]]
    %v1051 = vstv %s1050
    %v1052 = vmul.f32 %v70, %v1051
    %s1053 = sld [smem:[#allocation8 + $0x59]]
    %v1054 = vstv %s1053
    %v1055 = vadd.f32 %v1052, %v1054
    %v1056 = vmax.f32 %v1055, 0.0
    %s1057 = sld [smem:[#allocation10 + $0x59]]
    %v1058 = vstv %s1057
    %v1059 = vmul.f32 %v1056, %v1058
    %v1060 = vadd.f32 %v1049, %v1059
    %s1061 = sld [smem:[#allocation7 + $0x5a]]
    %v1062 = vstv %s1061
    %v1063 = vmul.f32 %v70, %v1062
    %s1064 = sld [smem:[#allocation8 + $0x5a]]
    %v1065 = vstv %s1064
    %v1066 = vadd.f32 %v1063, %v1065
    %v1067 = vmax.f32 %v1066, 0.0
    %s1068 = sld [smem:[#allocation10 + $0x5a]]
    %v1069 = vstv %s1068
    %v1070 = vmul.f32 %v1067, %v1069
    %v1071 = vadd.f32 %v1060, %v1070
    %s1072 = sld [smem:[#allocation7 + $0x5b]]
    %v1073 = vstv %s1072
    %v1074 = vmul.f32 %v70, %v1073
    %s1075 = sld [smem:[#allocation8 + $0x5b]]
    %v1076 = vstv %s1075
    %v1077 = vadd.f32 %v1074, %v1076
    %v1078 = vmax.f32 %v1077, 0.0
    %s1079 = sld [smem:[#allocation10 + $0x5b]]
    %v1080 = vstv %s1079
    %v1081 = vmul.f32 %v1078, %v1080
    %v1082 = vadd.f32 %v1071, %v1081
    %s1083 = sld [smem:[#allocation7 + $0x5c]]
    %v1084 = vstv %s1083
    %v1085 = vmul.f32 %v70, %v1084
    %s1086 = sld [smem:[#allocation8 + $0x5c]]
    %v1087 = vstv %s1086
    %v1088 = vadd.f32 %v1085, %v1087
    %v1089 = vmax.f32 %v1088, 0.0
    %s1090 = sld [smem:[#allocation10 + $0x5c]]
    %v1091 = vstv %s1090
    %v1092 = vmul.f32 %v1089, %v1091
    %v1093 = vadd.f32 %v1082, %v1092
    %s1094 = sld [smem:[#allocation7 + $0x5d]]
    %v1095 = vstv %s1094
    %v1096 = vmul.f32 %v70, %v1095
    %s1097 = sld [smem:[#allocation8 + $0x5d]]
    %v1098 = vstv %s1097
    %v1099 = vadd.f32 %v1096, %v1098
    %v1100 = vmax.f32 %v1099, 0.0
    %s1101 = sld [smem:[#allocation10 + $0x5d]]
    %v1102 = vstv %s1101
    %v1103 = vmul.f32 %v1100, %v1102
    %v1104 = vadd.f32 %v1093, %v1103
    %s1105 = sld [smem:[#allocation7 + $0x5e]]
    %v1106 = vstv %s1105
    %v1107 = vmul.f32 %v70, %v1106
    %s1108 = sld [smem:[#allocation8 + $0x5e]]
    %v1109 = vstv %s1108
    %v1110 = vadd.f32 %v1107, %v1109
    %v1111 = vmax.f32 %v1110, 0.0
    %s1112 = sld [smem:[#allocation10 + $0x5e]]
    %v1113 = vstv %s1112
    %v1114 = vmul.f32 %v1111, %v1113
    %v1115 = vadd.f32 %v1104, %v1114
    %s1116 = sld [smem:[#allocation7 + $0x5f]]
    %v1117 = vstv %s1116
    %v1118 = vmul.f32 %v70, %v1117
    %s1119 = sld [smem:[#allocation8 + $0x5f]]
    %v1120 = vstv %s1119
    %v1121 = vadd.f32 %v1118, %v1120
    %v1122 = vmax.f32 %v1121, 0.0
    %s1123 = sld [smem:[#allocation10 + $0x5f]]
    %v1124 = vstv %s1123
    %v1125 = vmul.f32 %v1122, %v1124
    %v1126 = vadd.f32 %v1115, %v1125
    %s1127 = sld [smem:[#allocation7 + $0x60]]
    %v1128 = vstv %s1127
    %v1129 = vmul.f32 %v70, %v1128
    %s1130 = sld [smem:[#allocation8 + $0x60]]
    %v1131 = vstv %s1130
    %v1132 = vadd.f32 %v1129, %v1131
    %v1133 = vmax.f32 %v1132, 0.0
    %s1134 = sld [smem:[#allocation10 + $0x60]]
    %v1135 = vstv %s1134
    %v1136 = vmul.f32 %v1133, %v1135
    %v1137 = vadd.f32 %v1126, %v1136
    %s1138 = sld [smem:[#allocation7 + $0x61]]
    %v1139 = vstv %s1138
    %v1140 = vmul.f32 %v70, %v1139
    %s1141 = sld [smem:[#allocation8 + $0x61]]
    %v1142 = vstv %s1141
    %v1143 = vadd.f32 %v1140, %v1142
    %v1144 = vmax.f32 %v1143, 0.0
    %s1145 = sld [smem:[#allocation10 + $0x61]]
    %v1146 = vstv %s1145
    %v1147 = vmul.f32 %v1144, %v1146
    %v1148 = vadd.f32 %v1137, %v1147
    %s1149 = sld [smem:[#allocation7 + $0x62]]
    %v1150 = vstv %s1149
    %v1151 = vmul.f32 %v70, %v1150
    %s1152 = sld [smem:[#allocation8 + $0x62]]
    %v1153 = vstv %s1152
    %v1154 = vadd.f32 %v1151, %v1153
    %v1155 = vmax.f32 %v1154, 0.0
    %s1156 = sld [smem:[#allocation10 + $0x62]]
    %v1157 = vstv %s1156
    %v1158 = vmul.f32 %v1155, %v1157
    %v1159 = vadd.f32 %v1148, %v1158
    %s1160 = sld [smem:[#allocation7 + $0x63]]
    %v1161 = vstv %s1160
    %v1162 = vmul.f32 %v70, %v1161
    %s1163 = sld [smem:[#allocation8 + $0x63]]
    %v1164 = vstv %s1163
    %v1165 = vadd.f32 %v1162, %v1164
    %v1166 = vmax.f32 %v1165, 0.0
    %s1167 = sld [smem:[#allocation10 + $0x63]]
    %v1168 = vstv %s1167
    %v1169 = vmul.f32 %v1166, %v1168
    %v1170 = vadd.f32 %v1159, %v1169
    %s1171 = sld [smem:[#allocation7 + $0x64]]
    %v1172 = vstv %s1171
    %v1173 = vmul.f32 %v70, %v1172
    %s1174 = sld [smem:[#allocation8 + $0x64]]
    %v1175 = vstv %s1174
    %v1176 = vadd.f32 %v1173, %v1175
    %v1177 = vmax.f32 %v1176, 0.0
    %s1178 = sld [smem:[#allocation10 + $0x64]]
    %v1179 = vstv %s1178
    %v1180 = vmul.f32 %v1177, %v1179
    %v1181 = vadd.f32 %v1170, %v1180
    %s1182 = sld [smem:[#allocation7 + $0x65]]
    %v1183 = vstv %s1182
    %v1184 = vmul.f32 %v70, %v1183
    %s1185 = sld [smem:[#allocation8 + $0x65]]
    %v1186 = vstv %s1185
    %v1187 = vadd.f32 %v1184, %v1186
    %v1188 = vmax.f32 %v1187, 0.0
    %s1189 = sld [smem:[#allocation10 + $0x65]]
    %v1190 = vstv %s1189
    %v1191 = vmul.f32 %v1188, %v1190
    %v1192 = vadd.f32 %v1181, %v1191
    %s1193 = sld [smem:[#allocation7 + $0x66]]
    %v1194 = vstv %s1193
    %v1195 = vmul.f32 %v70, %v1194
    %s1196 = sld [smem:[#allocation8 + $0x66]]
    %v1197 = vstv %s1196
    %v1198 = vadd.f32 %v1195, %v1197
    %v1199 = vmax.f32 %v1198, 0.0
    %s1200 = sld [smem:[#allocation10 + $0x66]]
    %v1201 = vstv %s1200
    %v1202 = vmul.f32 %v1199, %v1201
    %v1203 = vadd.f32 %v1192, %v1202
    %s1204 = sld [smem:[#allocation7 + $0x67]]
    %v1205 = vstv %s1204
    %v1206 = vmul.f32 %v70, %v1205
    %s1207 = sld [smem:[#allocation8 + $0x67]]
    %v1208 = vstv %s1207
    %v1209 = vadd.f32 %v1206, %v1208
    %v1210 = vmax.f32 %v1209, 0.0
    %s1211 = sld [smem:[#allocation10 + $0x67]]
    %v1212 = vstv %s1211
    %v1213 = vmul.f32 %v1210, %v1212
    %v1214 = vadd.f32 %v1203, %v1213
    %s1215 = sld [smem:[#allocation7 + $0x68]]
    %v1216 = vstv %s1215
    %v1217 = vmul.f32 %v70, %v1216
    %s1218 = sld [smem:[#allocation8 + $0x68]]
    %v1219 = vstv %s1218
    %v1220 = vadd.f32 %v1217, %v1219
    %v1221 = vmax.f32 %v1220, 0.0
    %s1222 = sld [smem:[#allocation10 + $0x68]]
    %v1223 = vstv %s1222
    %v1224 = vmul.f32 %v1221, %v1223
    %v1225 = vadd.f32 %v1214, %v1224
    %s1226 = sld [smem:[#allocation7 + $0x69]]
    %v1227 = vstv %s1226
    %v1228 = vmul.f32 %v70, %v1227
    %s1229 = sld [smem:[#allocation8 + $0x69]]
    %v1230 = vstv %s1229
    %v1231 = vadd.f32 %v1228, %v1230
    %v1232 = vmax.f32 %v1231, 0.0
    %s1233 = sld [smem:[#allocation10 + $0x69]]
    %v1234 = vstv %s1233
    %v1235 = vmul.f32 %v1232, %v1234
    %v1236 = vadd.f32 %v1225, %v1235
    %s1237 = sld [smem:[#allocation7 + $0x6a]]
    %v1238 = vstv %s1237
    %v1239 = vmul.f32 %v70, %v1238
    %s1240 = sld [smem:[#allocation8 + $0x6a]]
    %v1241 = vstv %s1240
    %v1242 = vadd.f32 %v1239, %v1241
    %v1243 = vmax.f32 %v1242, 0.0
    %s1244 = sld [smem:[#allocation10 + $0x6a]]
    %v1245 = vstv %s1244
    %v1246 = vmul.f32 %v1243, %v1245
    %v1247 = vadd.f32 %v1236, %v1246
    %s1248 = sld [smem:[#allocation7 + $0x6b]]
    %v1249 = vstv %s1248
    %v1250 = vmul.f32 %v70, %v1249
    %s1251 = sld [smem:[#allocation8 + $0x6b]]
    %v1252 = vstv %s1251
    %v1253 = vadd.f32 %v1250, %v1252
    %v1254 = vmax.f32 %v1253, 0.0
    %s1255 = sld [smem:[#allocation10 + $0x6b]]
    %v1256 = vstv %s1255
    %v1257 = vmul.f32 %v1254, %v1256
    %v1258 = vadd.f32 %v1247, %v1257
    %s1259 = sld [smem:[#allocation7 + $0x6c]]
    %v1260 = vstv %s1259
    %v1261 = vmul.f32 %v70, %v1260
    %s1262 = sld [smem:[#allocation8 + $0x6c]]
    %v1263 = vstv %s1262
    %v1264 = vadd.f32 %v1261, %v1263
    %v1265 = vmax.f32 %v1264, 0.0
    %s1266 = sld [smem:[#allocation10 + $0x6c]]
    %v1267 = vstv %s1266
    %v1268 = vmul.f32 %v1265, %v1267
    %v1269 = vadd.f32 %v1258, %v1268
    %s1270 = sld [smem:[#allocation7 + $0x6d]]
    %v1271 = vstv %s1270
    %v1272 = vmul.f32 %v70, %v1271
    %s1273 = sld [smem:[#allocation8 + $0x6d]]
    %v1274 = vstv %s1273
    %v1275 = vadd.f32 %v1272, %v1274
    %v1276 = vmax.f32 %v1275, 0.0
    %s1277 = sld [smem:[#allocation10 + $0x6d]]
    %v1278 = vstv %s1277
    %v1279 = vmul.f32 %v1276, %v1278
    %v1280 = vadd.f32 %v1269, %v1279
    %s1281 = sld [smem:[#allocation7 + $0x6e]]
    %v1282 = vstv %s1281
    %v1283 = vmul.f32 %v70, %v1282
    %s1284 = sld [smem:[#allocation8 + $0x6e]]
    %v1285 = vstv %s1284
    %v1286 = vadd.f32 %v1283, %v1285
    %v1287 = vmax.f32 %v1286, 0.0
    %s1288 = sld [smem:[#allocation10 + $0x6e]]
    %v1289 = vstv %s1288
    %v1290 = vmul.f32 %v1287, %v1289
    %v1291 = vadd.f32 %v1280, %v1290
    %s1292 = sld [smem:[#allocation7 + $0x6f]]
    %v1293 = vstv %s1292
    %v1294 = vmul.f32 %v70, %v1293
    %s1295 = sld [smem:[#allocation8 + $0x6f]]
    %v1296 = vstv %s1295
    %v1297 = vadd.f32 %v1294, %v1296
    %v1298 = vmax.f32 %v1297, 0.0
    %s1299 = sld [smem:[#allocation10 + $0x6f]]
    %v1300 = vstv %s1299
    %v1301 = vmul.f32 %v1298, %v1300
    %v1302 = vadd.f32 %v1291, %v1301
    %s1303 = sld [smem:[#allocation7 + $0x70]]
    %v1304 = vstv %s1303
    %v1305 = vmul.f32 %v70, %v1304
    %s1306 = sld [smem:[#allocation8 + $0x70]]
    %v1307 = vstv %s1306
    %v1308 = vadd.f32 %v1305, %v1307
    %v1309 = vmax.f32 %v1308, 0.0
    %s1310 = sld [smem:[#allocation10 + $0x70]]
    %v1311 = vstv %s1310
    %v1312 = vmul.f32 %v1309, %v1311
    %v1313 = vadd.f32 %v1302, %v1312
    %s1314 = sld [smem:[#allocation7 + $0x71]]
    %v1315 = vstv %s1314
    %v1316 = vmul.f32 %v70, %v1315
    %s1317 = sld [smem:[#allocation8 + $0x71]]
    %v1318 = vstv %s1317
    %v1319 = vadd.f32 %v1316, %v1318
    %v1320 = vmax.f32 %v1319, 0.0
    %s1321 = sld [smem:[#allocation10 + $0x71]]
    %v1322 = vstv %s1321
    %v1323 = vmul.f32 %v1320, %v1322
    %v1324 = vadd.f32 %v1313, %v1323
    %s1325 = sld [smem:[#allocation7 + $0x72]]
    %v1326 = vstv %s1325
    %v1327 = vmul.f32 %v70, %v1326
    %s1328 = sld [smem:[#allocation8 + $0x72]]
    %v1329 = vstv %s1328
    %v1330 = vadd.f32 %v1327, %v1329
    %v1331 = vmax.f32 %v1330, 0.0
    %s1332 = sld [smem:[#allocation10 + $0x72]]
    %v1333 = vstv %s1332
    %v1334 = vmul.f32 %v1331, %v1333
    %v1335 = vadd.f32 %v1324, %v1334
    %s1336 = sld [smem:[#allocation7 + $0x73]]
    %v1337 = vstv %s1336
    %v1338 = vmul.f32 %v70, %v1337
    %s1339 = sld [smem:[#allocation8 + $0x73]]
    %v1340 = vstv %s1339
    %v1341 = vadd.f32 %v1338, %v1340
    %v1342 = vmax.f32 %v1341, 0.0
    %s1343 = sld [smem:[#allocation10 + $0x73]]
    %v1344 = vstv %s1343
    %v1345 = vmul.f32 %v1342, %v1344
    %v1346 = vadd.f32 %v1335, %v1345
    %s1347 = sld [smem:[#allocation7 + $0x74]]
    %v1348 = vstv %s1347
    %v1349 = vmul.f32 %v70, %v1348
    %s1350 = sld [smem:[#allocation8 + $0x74]]
    %v1351 = vstv %s1350
    %v1352 = vadd.f32 %v1349, %v1351
    %v1353 = vmax.f32 %v1352, 0.0
    %s1354 = sld [smem:[#allocation10 + $0x74]]
    %v1355 = vstv %s1354
    %v1356 = vmul.f32 %v1353, %v1355
    %v1357 = vadd.f32 %v1346, %v1356
    %s1358 = sld [smem:[#allocation7 + $0x75]]
    %v1359 = vstv %s1358
    %v1360 = vmul.f32 %v70, %v1359
    %s1361 = sld [smem:[#allocation8 + $0x75]]
    %v1362 = vstv %s1361
    %v1363 = vadd.f32 %v1360, %v1362
    %v1364 = vmax.f32 %v1363, 0.0
    %s1365 = sld [smem:[#allocation10 + $0x75]]
    %v1366 = vstv %s1365
    %v1367 = vmul.f32 %v1364, %v1366
    %v1368 = vadd.f32 %v1357, %v1367
    %s1369 = sld [smem:[#allocation7 + $0x76]]
    %v1370 = vstv %s1369
    %v1371 = vmul.f32 %v70, %v1370
    %s1372 = sld [smem:[#allocation8 + $0x76]]
    %v1373 = vstv %s1372
    %v1374 = vadd.f32 %v1371, %v1373
    %v1375 = vmax.f32 %v1374, 0.0
    %s1376 = sld [smem:[#allocation10 + $0x76]]
    %v1377 = vstv %s1376
    %v1378 = vmul.f32 %v1375, %v1377
    %v1379 = vadd.f32 %v1368, %v1378
    %s1380 = sld [smem:[#allocation7 + $0x77]]
    %v1381 = vstv %s1380
    %v1382 = vmul.f32 %v70, %v1381
    %s1383 = sld [smem:[#allocation8 + $0x77]]
    %v1384 = vstv %s1383
    %v1385 = vadd.f32 %v1382, %v1384
    %v1386 = vmax.f32 %v1385, 0.0
    %s1387 = sld [smem:[#allocation10 + $0x77]]
    %v1388 = vstv %s1387
    %v1389 = vmul.f32 %v1386, %v1388
    %v1390 = vadd.f32 %v1379, %v1389
    %s1391 = sld [smem:[#allocation7 + $0x78]]
    %v1392 = vstv %s1391
    %v1393 = vmul.f32 %v70, %v1392
    %s1394 = sld [smem:[#allocation8 + $0x78]]
    %v1395 = vstv %s1394
    %v1396 = vadd.f32 %v1393, %v1395
    %v1397 = vmax.f32 %v1396, 0.0
    %s1398 = sld [smem:[#allocation10 + $0x78]]
    %v1399 = vstv %s1398
    %v1400 = vmul.f32 %v1397, %v1399
    %v1401 = vadd.f32 %v1390, %v1400
    %s1402 = sld [smem:[#allocation7 + $0x79]]
    %v1403 = vstv %s1402
    %v1404 = vmul.f32 %v70, %v1403
    %s1405 = sld [smem:[#allocation8 + $0x79]]
    %v1406 = vstv %s1405
    %v1407 = vadd.f32 %v1404, %v1406
    %v1408 = vmax.f32 %v1407, 0.0
    %s1409 = sld [smem:[#allocation10 + $0x79]]
    %v1410 = vstv %s1409
    %v1411 = vmul.f32 %v1408, %v1410
    %v1412 = vadd.f32 %v1401, %v1411
    %s1413 = sld [smem:[#allocation7 + $0x7a]]
    %v1414 = vstv %s1413
    %v1415 = vmul.f32 %v70, %v1414
    %s1416 = sld [smem:[#allocation8 + $0x7a]]
    %v1417 = vstv %s1416
    %v1418 = vadd.f32 %v1415, %v1417
    %v1419 = vmax.f32 %v1418, 0.0
    %s1420 = sld [smem:[#allocation10 + $0x7a]]
    %v1421 = vstv %s1420
    %v1422 = vmul.f32 %v1419, %v1421
    %v1423 = vadd.f32 %v1412, %v1422
    %s1424 = sld [smem:[#allocation7 + $0x7b]]
    %v1425 = vstv %s1424
    %v1426 = vmul.f32 %v70, %v1425
    %s1427 = sld [smem:[#allocation8 + $0x7b]]
    %v1428 = vstv %s1427
    %v1429 = vadd.f32 %v1426, %v1428
    %v1430 = vmax.f32 %v1429, 0.0
    %s1431 = sld [smem:[#allocation10 + $0x7b]]
    %v1432 = vstv %s1431
    %v1433 = vmul.f32 %v1430, %v1432
    %v1434 = vadd.f32 %v1423, %v1433
    %s1435 = sld [smem:[#allocation7 + $0x7c]]
    %v1436 = vstv %s1435
    %v1437 = vmul.f32 %v70, %v1436
    %s1438 = sld [smem:[#allocation8 + $0x7c]]
    %v1439 = vstv %s1438
    %v1440 = vadd.f32 %v1437, %v1439
    %v1441 = vmax.f32 %v1440, 0.0
    %s1442 = sld [smem:[#allocation10 + $0x7c]]
    %v1443 = vstv %s1442
    %v1444 = vmul.f32 %v1441, %v1443
    %v1445 = vadd.f32 %v1434, %v1444
    %s1446 = sld [smem:[#allocation7 + $0x7d]]
    %v1447 = vstv %s1446
    %v1448 = vmul.f32 %v70, %v1447
    %s1449 = sld [smem:[#allocation8 + $0x7d]]
    %v1450 = vstv %s1449
    %v1451 = vadd.f32 %v1448, %v1450
    %v1452 = vmax.f32 %v1451, 0.0
    %s1453 = sld [smem:[#allocation10 + $0x7d]]
    %v1454 = vstv %s1453
    %v1455 = vmul.f32 %v1452, %v1454
    %v1456 = vadd.f32 %v1445, %v1455
    %s1457 = sld [smem:[#allocation7 + $0x7e]]
    %v1458 = vstv %s1457
    %v1459 = vmul.f32 %v70, %v1458
    %s1460 = sld [smem:[#allocation8 + $0x7e]]
    %v1461 = vstv %s1460
    %v1462 = vadd.f32 %v1459, %v1461
    %v1463 = vmax.f32 %v1462, 0.0
    %s1464 = sld [smem:[#allocation10 + $0x7e]]
    %v1465 = vstv %s1464
    %v1466 = vmul.f32 %v1463, %v1465
    %v1467 = vadd.f32 %v1456, %v1466
    %s1468 = sld [smem:[#allocation7 + $0x7f]]
    %v1469 = vstv %s1468
    %v1470 = vmul.f32 %v70, %v1469
    %s1471 = sld [smem:[#allocation8 + $0x7f]]
    %v1472 = vstv %s1471
    %v1473 = vadd.f32 %v1470, %v1472
    %v1474 = vmax.f32 %v1473, 0.0
    %s1475 = sld [smem:[#allocation10 + $0x7f]]
    %v1476 = vstv %s1475
    %v1477 = vmul.f32 %v1474, %v1476
    %v1478 = vadd.f32 %v1467, %v1477
    %s1479 = sld [smem:[#allocation2]]
    %v1480 = vstv %s1479
    %v1481 = vadd.f32 %v1478, %v1480
    %1482 = vst [vmem:[#allocation11] sm:$0xff] %v1481
    // Predicated region
    $region38: #{tpu_custom_call.1} parent=1 // pred_check
      _
    $region39: #{tpu_custom_call.1} parent=1 // pred_check_branch
      %1484 = sbr.rel (0) target = $region41
    $region40: #{tpu_custom_call.1} parent=1 // pred_region
      %s1486 = ssub.s32 128, 128
      %1487 = vsyncadd [#allocation5], %s1486
      %s1489 = sshll.u32 [#allocation11], 4
      %s1490 = int_to_ptr.vmem [resolvable:$true] %s1489
      %1492 = dma.vmem_to_hbm [thread:$0]  %s1490, 128, %s5, [#allocation5]
    $region41: #{tpu_custom_call.1} parent=1 // pred_fallthru
      _
    // Predicated region
    $region42: #{tpu_custom_call.1} parent=1 // pred_check
      _
    $region43: #{tpu_custom_call.1} parent=1 // pred_check_branch
      %1494 = sbr.rel (0) target = $region45
    $region44: #{tpu_custom_call.1} parent=1 // pred_region
      %1495 = dma.done [#allocation5], 128
    $region45: #{tpu_custom_call.1} parent=1 // pred_fallthru
      _
    %1496 = vsyncpa [#allocation4], 1
    %1497 = vsyncpa [#allocation5], 1
    %1498 = vsyncpa [#allocation6], 1
    %1499 = vsyncpa [#allocation9], 1

</llo_original>
